<compile_context>
chip_gen: v6e
topology: v6e:2x2x1
jax: 0.10.0
libtpu: 0.0.40
codegen_flags: <defaults>
</compile_context>

<pallas_src>
import functools

import jax
import jax.numpy as jnp
from jax.experimental import pallas as pl
from jax.experimental.pallas import tpu as pltpu


def _mlp_softmax_kernel(x_ref, w1_ref, b1_ref, w2_ref, b2_ref, o_ref):
    # x_ref:  (TB, 784) bf16   w1_ref: (784, 512) bf16   b1_ref: (1, 512) f32
    # w2_ref: (512, 128) bf16  b2_ref: (1, 128)   f32    o_ref: (TB, 128) f32
    # layer1: Linear(784, 512) + ReLU  (bf16 MXU operands, f32 accumulate)
    h = jnp.dot(x_ref[...], w1_ref[...], preferred_element_type=jnp.float32)
    h = jnp.maximum(h + b1_ref[...], 0.0)

    # layer2: Linear(512, 10) padded to 128 lanes (padded columns of w2 are 0,
    # padded bias slots are -1e30 -> exp() of those logits is exactly 0).
    logits = jnp.dot(h.astype(jnp.bfloat16), w2_ref[...],
                     preferred_element_type=jnp.float32) + b2_ref[...]

    # softmax over the (padded) class dim, numerically stable, all f32
    m = jnp.max(logits, axis=-1, keepdims=True)
    p = jnp.exp(logits - m)
    denom = jnp.sum(p, axis=-1, keepdims=True)
    o_ref[...] = (p * pl.reciprocal(denom, approx=True)).astype(o_ref.dtype)


@functools.partial(jax.jit, static_argnames=("tb",))
def mlp_softmax(x, w1, b1, w2, b2, *, tb=256):
    """Pallas forward: softmax(relu(x @ w1 + b1) @ w2 + b2, axis=1)."""
    B, D_in = x.shape           # (B, 784)
    H = w1.shape[1]             # 512
    C = w2.shape[1]             # 10
    C_PAD = 128                 # lane-dense class dim

    # pad the batch up to a tile multiple (arbitrary B supported)
    n_steps = (B + tb - 1) // tb
    B_pad = n_steps * tb
    if B_pad != B:
        x = jnp.pad(x, ((0, B_pad - B), (0, 0)))

    # bf16 MXU operands (cast in the wrapper so HBM copies are already bf16)
    xb = x.astype(jnp.bfloat16)
    w1b = w1.astype(jnp.bfloat16)
    b1_2d = b1.reshape(1, H).astype(jnp.float32)

    # class-dim padding: zero weight columns, -1e30 bias in padded slots
    w2p = jnp.zeros((H, C_PAD), jnp.bfloat16).at[:, :C].set(w2.astype(jnp.bfloat16))
    b2p = jnp.full((1, C_PAD), -1e30, jnp.float32).at[:, :C].set(
        b2.reshape(1, C).astype(jnp.float32))

    out = pl.pallas_call(
        _mlp_softmax_kernel,
        out_shape=jax.ShapeDtypeStruct((B_pad, C_PAD), jnp.float32),
        grid_spec=pltpu.PrefetchScalarGridSpec(
            num_scalar_prefetch=0,
            grid=(n_steps,),
            in_specs=[
                pl.BlockSpec((tb, D_in), lambda i: (i, 0)),     # x tile (streamed)
                pl.BlockSpec((D_in, H), lambda i: (0, 0)),      # w1 (resident)
                pl.BlockSpec((1, H), lambda i: (0, 0)),         # b1
                pl.BlockSpec((H, C_PAD), lambda i: (0, 0)),     # w2 (padded)
                pl.BlockSpec((1, C_PAD), lambda i: (0, 0)),     # b2 (padded)
            ],
            out_specs=pl.BlockSpec((tb, C_PAD), lambda i: (i, 0)),
        ),
        compiler_params=pltpu.CompilerParams(
            dimension_semantics=("parallel",),   # megacore-shardable on v7x
        ),
    )(xb, w1b, b1_2d, w2p, b2p)

    # drop batch padding and the padded classes
    return out[:B, :C]


def pytorch_model_forward(x, params, y=None):
    """Matches PytorchModel.forward: returns softmax probs, or
    F.cross_entropy(probs, y) if integer labels y are given."""
    w1, b1, w2, b2 = params
    x = x.reshape(-1, 784)
    y_pred = mlp_softmax(x, w1, b1, w2, b2)
    if y is not None:
        # PyTorch quirk reproduced: cross_entropy applied ON TOP of the
        # softmax output (log_softmax of probabilities), mean reduction.
        logp = jax.nn.log_softmax(y_pred, axis=1)
        return -jnp.mean(jnp.take_along_axis(logp, y[:, None], axis=1))
    return y_pred


def init_params(key):
    """Deterministic init matching nn.Linear shapes (784->512, 512->10)."""
    k1, k2, k3, k4 = jax.random.split(key, 4)
    # stored as (in, out) for the kernel (PyTorch stores (out, in))
    w1 = jax.random.uniform(k1, (784, 512), jnp.float32, -0.03, 0.03)
    b1 = jax.random.uniform(k2, (512,), jnp.float32, -0.03, 0.03)
    w2 = jax.random.uniform(k3, (512, 10), jnp.float32, -0.04, 0.04)
    b2 = jax.random.uniform(k4, (10,), jnp.float32, -0.04, 0.04)
    return w1, b1, w2, b2


if __name__ == "__main__":
    key = jax.random.PRNGKey(0)
    kx, ky, kp = jax.random.split(key, 3)

    # non-multiple of the 256-row tile -> exercises batch padding and a 2-step
    # grid (so both v7x TensorCores and the x-DMA pipeline get work)
    B = 300
    x = jax.random.normal(kx, (B, 1, 28, 28), jnp.float32)
    y = jax.random.randint(ky, (B,), 0, 10)
    params = init_params(kp)

    # inference path (y=None): softmax probabilities
    probs = pytorch_model_forward(x, params)
    probs = jax.block_until_ready(probs)

    # reference check in plain f32 JAX (bf16 matmuls => loosened tolerance)
    xf = x.reshape(-1, 784)
    w1, b1, w2, b2 = params
    h_ref = jnp.maximum(xf @ w1 + b1, 0.0)
    probs_ref = jax.nn.softmax(h_ref @ w2 + b2, axis=1)
    assert probs.shape == (B, 10)
    assert jnp.allclose(probs, probs_ref, atol=1e-2, rtol=1e-2)
    assert jnp.allclose(jnp.sum(probs, axis=1), 1.0, atol=5e-3)
    assert jnp.mean(jnp.argmax(probs, 1) == jnp.argmax(probs_ref, 1)) > 0.99

    # training path (y given): scalar cross-entropy loss
    loss = pytorch_model_forward(x, params, y)
    loss = jax.block_until_ready(loss)
    assert loss.shape == ()

    print("KERNEL_OK")
</pallas_src>

<mosaic_0001>
module attributes {stable_mosaic.version = 11 : i64} {
  func.func @_mlp_softmax_kernel(%arg0: i32, %arg1: memref<256x784xbf16, #tpu.memory_space<vmem>>, %arg2: memref<784x512xbf16, #tpu.memory_space<vmem>>, %arg3: memref<1x512xf32, #tpu.memory_space<vmem>>, %arg4: memref<512x128xbf16, #tpu.memory_space<vmem>>, %arg5: memref<1x128xf32, #tpu.memory_space<vmem>>, %arg6: memref<256x128xf32, #tpu.memory_space<vmem>>) attributes {dimension_semantics = [#tpu.dimension_semantics<parallel>], iteration_bounds = array<i64: 2>, scalar_prefetch = 0 : i64, scratch_operands = 0 : i64, tpu.core_type = #tpu.core_type<tc>, window_params = [{transform_indices = @transform_0, window_bounds = array<i64: 256, 784>}, {pipeline_mode = #tpu.pipeline_mode<synchronous>, transform_indices = @transform_1, window_bounds = array<i64: 784, 512>}, {pipeline_mode = #tpu.pipeline_mode<synchronous>, transform_indices = @transform_2, window_bounds = array<i64: 1, 512>}, {pipeline_mode = #tpu.pipeline_mode<synchronous>, transform_indices = @transform_3, window_bounds = array<i64: 512, 128>}, {pipeline_mode = #tpu.pipeline_mode<synchronous>, transform_indices = @transform_4, window_bounds = array<i64: 1, 128>}, {transform_indices = @transform_5, window_bounds = array<i64: 256, 128>}]} {
    %c0 = arith.constant 0 : index
    %c0_0 = arith.constant 0 : index
    %0 = vector.load %arg1[%c0, %c0_0] : memref<256x784xbf16, #tpu.memory_space<vmem>>, vector<256x784xbf16>
    %c0_1 = arith.constant 0 : index
    %c0_2 = arith.constant 0 : index
    %1 = vector.load %arg2[%c0_1, %c0_2] : memref<784x512xbf16, #tpu.memory_space<vmem>>, vector<784x512xbf16>
    %cst = arith.constant dense<0.000000e+00> : vector<256x512xf32>
    %2 = tpu.matmul %0, %1, %cst {dimension_numbers = #tpu.dot_dimension_numbers<[1], [0], [0], [1], [0, 0, 1, 1], [], []>} : vector<256x784xbf16>, vector<784x512xbf16>, vector<256x512xf32> -> vector<256x512xf32>
    %c0_3 = arith.constant 0 : index
    %c0_4 = arith.constant 0 : index
    %3 = vector.load %arg3[%c0_3, %c0_4] : memref<1x512xf32, #tpu.memory_space<vmem>>, vector<1x512xf32>
    %4 = vector.broadcast %3 : vector<1x512xf32> to vector<256x512xf32>
    %5 = arith.addf %2, %4 : vector<256x512xf32>
    %cst_5 = arith.constant 0.000000e+00 : f32
    %6 = vector.broadcast %cst_5 : f32 to vector<256x512xf32>
    %7 = arith.maximumf %5, %6 : vector<256x512xf32>
    %8 = arith.truncf %7 : vector<256x512xf32> to vector<256x512xbf16>
    %c0_6 = arith.constant 0 : index
    %c0_7 = arith.constant 0 : index
    %9 = vector.load %arg4[%c0_6, %c0_7] : memref<512x128xbf16, #tpu.memory_space<vmem>>, vector<512x128xbf16>
    %cst_8 = arith.constant dense<0.000000e+00> : vector<256x128xf32>
    %10 = tpu.matmul %8, %9, %cst_8 {dimension_numbers = #tpu.dot_dimension_numbers<[1], [0], [0], [1], [0, 0, 1, 1], [], []>} : vector<256x512xbf16>, vector<512x128xbf16>, vector<256x128xf32> -> vector<256x128xf32>
    %c0_9 = arith.constant 0 : index
    %c0_10 = arith.constant 0 : index
    %11 = vector.load %arg5[%c0_9, %c0_10] : memref<1x128xf32, #tpu.memory_space<vmem>>, vector<1x128xf32>
    %12 = vector.broadcast %11 : vector<1x128xf32> to vector<256x128xf32>
    %13 = arith.addf %10, %12 : vector<256x128xf32>
    %cst_11 = arith.constant dense<0xFF800000> : vector<256xf32>
    %14 = vector.multi_reduction <maximumf>, %13, %cst_11 [1] : vector<256x128xf32> to vector<256xf32>
    %15 = vector.shape_cast %14 : vector<256xf32> to vector<256x1xf32>
    %16 = vector.broadcast %15 : vector<256x1xf32> to vector<256x128xf32>
    %17 = arith.subf %13, %16 : vector<256x128xf32>
    %18 = math.exp %17 : vector<256x128xf32>
    %cst_12 = arith.constant dense<0.000000e+00> : vector<256xf32>
    %19 = vector.multi_reduction <add>, %18, %cst_12 [1] : vector<256x128xf32> to vector<256xf32>
    %20 = vector.shape_cast %19 : vector<256xf32> to vector<256x1xf32>
    %21 = tpu.reciprocal %20 {approx = true} : vector<256x1xf32> -> vector<256x1xf32>
    %22 = vector.broadcast %21 : vector<256x1xf32> to vector<256x128xf32>
    %23 = arith.mulf %18, %22 : vector<256x128xf32>
    %c0_13 = arith.constant 0 : index
    %c0_14 = arith.constant 0 : index
    %24 = vector.load %arg6[%c0_13, %c0_14] : memref<256x128xf32, #tpu.memory_space<vmem>>, vector<256x128xf32>
    tpu.vector_store %arg6[%c0_13, %c0_14], %23 {strides = array<i32>} : memref<256x128xf32, #tpu.memory_space<vmem>>, vector<256x128xf32>,
    return
  }
  func.func @transform_0(%arg0: i32) -> (i32, i32) {
    %c0_i32 = arith.constant 0 : i32
    %c0_i32_0 = arith.constant 0 : i32
    return %arg0, %c0_i32 : i32, i32
  }
  func.func @transform_1(%arg0: i32) -> (i32, i32) {
    %c0_i32 = arith.constant 0 : i32
    %c0_i32_0 = arith.constant 0 : i32
    %c0_i32_1 = arith.constant 0 : i32
    return %c0_i32, %c0_i32_0 : i32, i32
  }
  func.func @transform_2(%arg0: i32) -> (i32, i32) {
    %c0_i32 = arith.constant 0 : i32
    %c0_i32_0 = arith.constant 0 : i32
    %c0_i32_1 = arith.constant 0 : i32
    return %c0_i32, %c0_i32_0 : i32, i32
  }
  func.func @transform_3(%arg0: i32) -> (i32, i32) {
    %c0_i32 = arith.constant 0 : i32
    %c0_i32_0 = arith.constant 0 : i32
    %c0_i32_1 = arith.constant 0 : i32
    return %c0_i32, %c0_i32_0 : i32, i32
  }
  func.func @transform_4(%arg0: i32) -> (i32, i32) {
    %c0_i32 = arith.constant 0 : i32
    %c0_i32_0 = arith.constant 0 : i32
    %c0_i32_1 = arith.constant 0 : i32
    return %c0_i32, %c0_i32_0 : i32, i32
  }
  func.func @transform_5(%arg0: i32) -> (i32, i32) {
    %c0_i32 = arith.constant 0 : i32
    %c0_i32_0 = arith.constant 0 : i32
    return %arg0, %c0_i32 : i32, i32
  }
}

</mosaic_0001>

<llo_original>
// kernel: mlp_softmax.1
$region0: #{mlp_softmax.1}
  #allocation0 [shape = 'u32[]', space=smem, size = 0x4, offset = 0x4, fixed_abs, tag = 'smem constant byte address 0x4 - core index']
  #allocation1 [shape = 'u32[144,128]{1,0:T(1,128)}', space=vmem, size = 0x12000, scoped, tag = 'internal scratch']
  %s0 = inlined_call_operand.vmem [shape: bf16[512,784], index: 0, kind: input, shape index: {}]
  %s1 = inlined_call_operand.vmem [shape: bf16[784,512], index: 1, kind: input, shape index: {}]
  %s2 = inlined_call_operand.vmem [shape: f32[1,512], index: 2, kind: input, shape index: {}]
  %s3 = inlined_call_operand.vmem [shape: bf16[512,128], index: 3, kind: input, shape index: {}]
  %s4 = inlined_call_operand.vmem [shape: f32[1,128], index: 4, kind: input, shape index: {}]
  %s5 = inlined_call_operand.vmem [shape: f32[512,128], index: 5, kind: output, shape index: {}]
  %s6 = sld [smem:[#allocation0]]
  $region53: #{mlp_softmax.1} parent=0
    _
  %s8 = ssub.s32 1, %s6
  %s9 = scalar_select 0, %s8, %s6
  loop: start=0, step=1, limit=4
  $region2: #{mlp_softmax.1} parent=0 // loop_pre_header
    _
  $region3: #{mlp_softmax.1} parent=0 // loop_header
    %s11 = sphi 0, %s15
    %p12 = scmp.ge.s32.totalorder %s11, 4
    %s21 = sphi 0, %s23
    %s24 = sphi 0, %s21
    %s25 = sphi 0, %s24
    %s41 = sphi 0, %s25
    %s45 = sphi 0, %s45
    %s47 = sphi 0, %s45
    %s48 = sphi 0, %s47
    %s62 = sphi 0, %s48
    %s66 = sphi 0, %s66
    %s68 = sphi 0, %s66
    %s69 = sphi 0, %s68
    %s83 = sphi 0, %s69
    %s87 = sphi 0, %s87
    %s89 = sphi 0, %s87
    %s90 = sphi 0, %s89
    %s104 = sphi 0, %s90
    %s108 = sphi 0, %s108
    %s110 = sphi 0, %s108
    %s111 = sphi 0, %s110
    %s125 = sphi 0, %s111
    %s131 = sphi 0, %s133
    %s134 = sphi 0, %s131
    %s135 = sphi 0, %s134
    %s151 = sphi 0, %s135
  $region4: #{mlp_softmax.1} parent=0 // loop_header_branch
    %14 = sbr.rel (%p12) target = $region8
  $region5: #{mlp_softmax.1} parent=0 // loop_body
    %s16 = ssub.s32 %s11, 1
    %s17 = ssub.s32 %s11, 2
    %s18 = sadd.s32 %s11, 1
    %s19 = ssub.s32 %s11, %s18
    %p20 = scmp.eq.s32.totalorder %s19, 0
    %s22 = sadd.s32 %s21, 1
    %s23 = scalar_select %p20, %s21, %s22
    %p26 = pneg %p20
    %p27 = scmp.eq.s32.totalorder %s11, 1
    %p28 = por %p26, %p27
    %p29 = scmp.ne.s32.totalorder %s21, %s24
    %p30 = scmp.eq.s32.totalorder %s11, 0
    %p31 = por %p29, %p30
    %p32 = scmp.ne.s32.totalorder %s21, %s24
    %p33 = scmp.eq.s32.totalorder %s16, 1
    %p34 = por %p32, %p33
    %p35 = scmp.ne.s32.totalorder %s24, %s25
    %p36 = scmp.eq.s32.totalorder %s16, 0
    %p37 = por %p35, %p36
    %p38 = scmp.ne.s32.totalorder %s24, %s25
    %p39 = scmp.eq.s32.totalorder %s17, 1
    %p40 = por %p38, %p39
    %p42 = scmp.ne.s32.totalorder %s25, %s41
    %p43 = scmp.eq.s32.totalorder %s17, 0
    %p44 = por %p42, %p43
    %s46 = sadd.s32 %s45, 1
    %p49 = scmp.eq.s32.totalorder %s11, 1
    %p50 = scmp.ne.s32.totalorder %s45, %s47
    %p51 = scmp.eq.s32.totalorder %s11, 0
    %p52 = por %p50, %p51
    %p53 = scmp.ne.s32.totalorder %s45, %s47
    %p54 = scmp.eq.s32.totalorder %s16, 1
    %p55 = por %p53, %p54
    %p56 = scmp.ne.s32.totalorder %s47, %s48
    %p57 = scmp.eq.s32.totalorder %s16, 0
    %p58 = por %p56, %p57
    %p59 = scmp.ne.s32.totalorder %s47, %s48
    %p60 = scmp.eq.s32.totalorder %s17, 1
    %p61 = por %p59, %p60
    %p63 = scmp.ne.s32.totalorder %s48, %s62
    %p64 = scmp.eq.s32.totalorder %s17, 0
    %p65 = por %p63, %p64
    %s67 = sadd.s32 %s66, 1
    %p70 = scmp.eq.s32.totalorder %s11, 1
    %p71 = scmp.ne.s32.totalorder %s66, %s68
    %p72 = scmp.eq.s32.totalorder %s11, 0
    %p73 = por %p71, %p72
    %p74 = scmp.ne.s32.totalorder %s66, %s68
    %p75 = scmp.eq.s32.totalorder %s16, 1
    %p76 = por %p74, %p75
    %p77 = scmp.ne.s32.totalorder %s68, %s69
    %p78 = scmp.eq.s32.totalorder %s16, 0
    %p79 = por %p77, %p78
    %p80 = scmp.ne.s32.totalorder %s68, %s69
    %p81 = scmp.eq.s32.totalorder %s17, 1
    %p82 = por %p80, %p81
    %p84 = scmp.ne.s32.totalorder %s69, %s83
    %p85 = scmp.eq.s32.totalorder %s17, 0
    %p86 = por %p84, %p85
    %s88 = sadd.s32 %s87, 1
    %p91 = scmp.eq.s32.totalorder %s11, 1
    %p92 = scmp.ne.s32.totalorder %s87, %s89
    %p93 = scmp.eq.s32.totalorder %s11, 0
    %p94 = por %p92, %p93
    %p95 = scmp.ne.s32.totalorder %s87, %s89
    %p96 = scmp.eq.s32.totalorder %s16, 1
    %p97 = por %p95, %p96
    %p98 = scmp.ne.s32.totalorder %s89, %s90
    %p99 = scmp.eq.s32.totalorder %s16, 0
    %p100 = por %p98, %p99
    %p101 = scmp.ne.s32.totalorder %s89, %s90
    %p102 = scmp.eq.s32.totalorder %s17, 1
    %p103 = por %p101, %p102
    %p105 = scmp.ne.s32.totalorder %s90, %s104
    %p106 = scmp.eq.s32.totalorder %s17, 0
    %p107 = por %p105, %p106
    %s109 = sadd.s32 %s108, 1
    %p112 = scmp.eq.s32.totalorder %s11, 1
    %p113 = scmp.ne.s32.totalorder %s108, %s110
    %p114 = scmp.eq.s32.totalorder %s11, 0
    %p115 = por %p113, %p114
    %p116 = scmp.ne.s32.totalorder %s108, %s110
    %p117 = scmp.eq.s32.totalorder %s16, 1
    %p118 = por %p116, %p117
    %p119 = scmp.ne.s32.totalorder %s110, %s111
    %p120 = scmp.eq.s32.totalorder %s16, 0
    %p121 = por %p119, %p120
    %p122 = scmp.ne.s32.totalorder %s110, %s111
    %p123 = scmp.eq.s32.totalorder %s17, 1
    %p124 = por %p122, %p123
    %p126 = scmp.ne.s32.totalorder %s111, %s125
    %p127 = scmp.eq.s32.totalorder %s17, 0
    %p128 = por %p126, %p127
    %s129 = ssub.s32 %s11, %s18
    %p130 = scmp.eq.s32.totalorder %s129, 0
    %s132 = sadd.s32 %s131, 1
    %s133 = scalar_select %p130, %s131, %s132
    %p136 = pneg %p130
    %p137 = scmp.eq.s32.totalorder %s11, 1
    %p138 = por %p136, %p137
    %p139 = scmp.ne.s32.totalorder %s131, %s134
    %p140 = scmp.eq.s32.totalorder %s11, 0
    %p141 = por %p139, %p140
    %p142 = scmp.ne.s32.totalorder %s131, %s134
    %p143 = scmp.eq.s32.totalorder %s16, 1
    %p144 = por %p142, %p143
    %p145 = scmp.ne.s32.totalorder %s134, %s135
    %p146 = scmp.eq.s32.totalorder %s16, 0
    %p147 = por %p145, %p146
    %p148 = scmp.ne.s32.totalorder %s134, %s135
    %p149 = scmp.eq.s32.totalorder %s17, 1
    %p150 = por %p148, %p149
    %p152 = scmp.ne.s32.totalorder %s135, %s151
    %p153 = scmp.eq.s32.totalorder %s17, 0
    %p154 = por %p152, %p153
    %p155 = scmp.le.s32.totalorder 1, %s11
    %p156 = scmp.lt.s32.totalorder %s11, 3
    %p157 = pnand %p155, %p156
    %p158 = pneg %p157
    // Predicated region
    $region9: #{mlp_softmax.1} parent=5 // pred_check
      _
    $region10: #{mlp_softmax.1} parent=5 // pred_check_branch
      %160 = sbr.rel (%p157) target = $region12
    $region11: #{mlp_softmax.1} parent=5 // pred_region
      %s161 = ssub.s32 %s11, 1
      // Predicated region
      $region13: #{mlp_softmax.1} parent=11 // pred_check
        %p162 = pneg %p58
      $region14: #{mlp_softmax.1} parent=11 // pred_check_branch
        %164 = sbr.rel (%p162) target = $region16
      $region15: #{mlp_softmax.1} parent=11 // pred_region
        _
      $region16: #{mlp_softmax.1} parent=11 // pred_fallthru
        _
      // Predicated region
      $region17: #{mlp_softmax.1} parent=11 // pred_check
        %p165 = pneg %p79
      $region18: #{mlp_softmax.1} parent=11 // pred_check_branch
        %167 = sbr.rel (%p165) target = $region20
      $region19: #{mlp_softmax.1} parent=11 // pred_region
        _
      $region20: #{mlp_softmax.1} parent=11 // pred_fallthru
        _
      // Predicated region
      $region21: #{mlp_softmax.1} parent=11 // pred_check
        %p168 = pneg %p100
      $region22: #{mlp_softmax.1} parent=11 // pred_check_branch
        %170 = sbr.rel (%p168) target = $region24
      $region23: #{mlp_softmax.1} parent=11 // pred_region
        _
      $region24: #{mlp_softmax.1} parent=11 // pred_fallthru
        _
      // Predicated region
      $region25: #{mlp_softmax.1} parent=11 // pred_check
        %p171 = pneg %p121
      $region26: #{mlp_softmax.1} parent=11 // pred_check_branch
        %173 = sbr.rel (%p171) target = $region28
      $region27: #{mlp_softmax.1} parent=11 // pred_region
        _
      $region28: #{mlp_softmax.1} parent=11 // pred_fallthru
        _
    $region12: #{mlp_softmax.1} parent=5 // pred_fallthru
      _
    %p174 = scmp.lt.s32.totalorder %s11, 2
    // Predicated region
    $region29: #{mlp_softmax.1} parent=5 // pred_check
      %p175 = pneg %p174
    $region30: #{mlp_softmax.1} parent=5 // pred_check_branch
      %177 = sbr.rel (%p175) target = $region32
    $region31: #{mlp_softmax.1} parent=5 // pred_region
      // Predicated region
      $region33: #{mlp_softmax.1} parent=31 // pred_check
        %p178 = pneg %p31
      $region34: #{mlp_softmax.1} parent=31 // pred_check_branch
        %180 = sbr.rel (%p178) target = $region36
      $region35: #{mlp_softmax.1} parent=31 // pred_region
        %s181 = smul.u32 32, %s11
        %p182 = scmp.lt.s32.totalorder %s181, 63
        %s183 = scalar_select %p182, %s181, 63
        %s184 = smul.addr %s183, 7
        %s185 = smul.addr %s184, 4
        %s186 = scalar_lea.vmem %s0, %s185
        %s187 = smul.u32 32, %s11
      $region36: #{mlp_softmax.1} parent=31 // pred_fallthru
        _
    $region32: #{mlp_softmax.1} parent=5 // pred_fallthru
      _
    %p188 = scmp.le.s32.totalorder 1, %s11
    %p189 = scmp.lt.s32.totalorder %s11, 3
    %p190 = pnand %p188, %p189
    %p191 = pneg %p190
    // Predicated region
    $region37: #{mlp_softmax.1} parent=5 // pred_check
      _
    $region38: #{mlp_softmax.1} parent=5 // pred_check_branch
      %193 = sbr.rel (%p190) target = $region40
    $region39: #{mlp_softmax.1} parent=5 // pred_region
      %s194 = ssub.s32 %s11, 1
      %s195 = smul.u32 32, %s16
      %p196 = scmp.lt.s32.totalorder %s195, 63
      %s197 = scalar_select %p196, %s195, 63
      %s198 = smul.addr %s197, 7
      %s199 = smul.addr %s198, 4
      %s200 = scalar_lea.vmem %s0, %s199
      %p201 = pneg %p37
      %p202 = pneg %p34
      %p203 = pneg %p58
      %p204 = pneg %p55
      %p205 = pneg %p79
      %p206 = pneg %p76
      %p207 = pneg %p100
      %p208 = pneg %p97
      %p209 = pneg %p121
      %p210 = pneg %p118
      %p211 = pneg %p147
      %p212 = pneg %p144
      %s213 = smul.u32 32, %s16
      %p214 = scmp.lt.s32.totalorder %s213, 63
      %s215 = scalar_select %p214, %s213, 63
      %s216 = smul.addr %s215, 8
      %s217 = scalar_lea.vmem %s5, %s216
      %s218 = smul.u32 32, %s16
      %p219 = scmp.lt.s32.totalorder %s218, 63
      %s220 = scalar_select %p219, %s218, 63
      %s221 = smul.addr %s220, 7
      %s222 = smul.addr %s221, 4
      %s223 = scalar_lea.vmem %s0, %s222
      %s224 = smul.u32 32, %s16
      %s225 = smul.u32 32, %s16
      %p226 = scmp.lt.s32.totalorder %s225, 63
      %s227 = scalar_select %p226, %s225, 63
      %s228 = smul.addr %s227, 8
      %s229 = scalar_lea.vmem %s5, %s228
      %s230 = smul.u32 32, %s16
      %v232 = vld [vmem:[%s223] sm:$0xff]
      %v233 = vld [vmem:[%s223 + $0x8] sm:$0xff]
      %v234 = vld [vmem:[%s223 + $0x10] sm:$0xff]
      %v235 = vld [vmem:[%s223 + $0x18] sm:$0xf]
      %v236 = vld [vmem:[%s223 + $0x1c] sm:$0xff]
      %v237 = vld [vmem:[%s223 + $0x24] sm:$0xff]
      %v238 = vld [vmem:[%s223 + $0x2c] sm:$0xff]
      %v239 = vld [vmem:[%s223 + $0x34] sm:$0xf]
      %v240 = vld [vmem:[%s223 + $0x38] sm:$0xff]
      %v241 = vld [vmem:[%s223 + $0x40] sm:$0xff]
      %v242 = vld [vmem:[%s223 + $0x48] sm:$0xff]
      %v243 = vld [vmem:[%s223 + $0x50] sm:$0xf]
      %v244 = vld [vmem:[%s223 + $0x54] sm:$0xff]
      %v245 = vld [vmem:[%s223 + $0x5c] sm:$0xff]
      %v246 = vld [vmem:[%s223 + $0x64] sm:$0xff]
      %v247 = vld [vmem:[%s223 + $0x6c] sm:$0xf]
      %v248 = vld [vmem:[%s223 + $0x70] sm:$0xff]
      %v249 = vld [vmem:[%s223 + $0x78] sm:$0xff]
      %v250 = vld [vmem:[%s223 + $0x80] sm:$0xff]
      %v251 = vld [vmem:[%s223 + $0x88] sm:$0xf]
      %v252 = vld [vmem:[%s223 + $0x8c] sm:$0xff]
      %v253 = vld [vmem:[%s223 + $0x94] sm:$0xff]
      %v254 = vld [vmem:[%s223 + $0x9c] sm:$0xff]
      %v255 = vld [vmem:[%s223 + $0xa4] sm:$0xf]
      %v256 = vld [vmem:[%s223 + $0xa8] sm:$0xff]
      %v257 = vld [vmem:[%s223 + $0xb0] sm:$0xff]
      %v258 = vld [vmem:[%s223 + $0xb8] sm:$0xff]
      %v259 = vld [vmem:[%s223 + $0xc0] sm:$0xf]
      %v260 = vld [vmem:[%s223 + $0xc4] sm:$0xff]
      %v261 = vld [vmem:[%s223 + $0xcc] sm:$0xff]
      %v262 = vld [vmem:[%s223 + $0xd4] sm:$0xff]
      %v263 = vld [vmem:[%s223 + $0xdc] sm:$0xf]
      %v264 = vld [vmem:[%s223 + $0xe0] sm:$0xff]
      %v265 = vld [vmem:[%s223 + $0xe8] sm:$0xff]
      %v266 = vld [vmem:[%s223 + $0xf0] sm:$0xff]
      %v267 = vld [vmem:[%s223 + $0xf8] sm:$0xf]
      %v268 = vld [vmem:[%s223 + $0xfc] sm:$0xff]
      %v269 = vld [vmem:[%s223 + $0x104] sm:$0xff]
      %v270 = vld [vmem:[%s223 + $0x10c] sm:$0xff]
      %v271 = vld [vmem:[%s223 + $0x114] sm:$0xf]
      %v272 = vld [vmem:[%s223 + $0x118] sm:$0xff]
      %v273 = vld [vmem:[%s223 + $0x120] sm:$0xff]
      %v274 = vld [vmem:[%s223 + $0x128] sm:$0xff]
      %v275 = vld [vmem:[%s223 + $0x130] sm:$0xf]
      %v276 = vld [vmem:[%s223 + $0x134] sm:$0xff]
      %v277 = vld [vmem:[%s223 + $0x13c] sm:$0xff]
      %v278 = vld [vmem:[%s223 + $0x144] sm:$0xff]
      %v279 = vld [vmem:[%s223 + $0x14c] sm:$0xf]
      %v280 = vld [vmem:[%s223 + $0x150] sm:$0xff]
      %v281 = vld [vmem:[%s223 + $0x158] sm:$0xff]
      %v282 = vld [vmem:[%s223 + $0x160] sm:$0xff]
      %v283 = vld [vmem:[%s223 + $0x168] sm:$0xf]
      %v284 = vld [vmem:[%s223 + $0x16c] sm:$0xff]
      %v285 = vld [vmem:[%s223 + $0x174] sm:$0xff]
      %v286 = vld [vmem:[%s223 + $0x17c] sm:$0xff]
      %v287 = vld [vmem:[%s223 + $0x184] sm:$0xf]
      %v288 = vld [vmem:[%s223 + $0x188] sm:$0xff]
      %v289 = vld [vmem:[%s223 + $0x190] sm:$0xff]
      %v290 = vld [vmem:[%s223 + $0x198] sm:$0xff]
      %v291 = vld [vmem:[%s223 + $0x1a0] sm:$0xf]
      %v292 = vld [vmem:[%s223 + $0x1a4] sm:$0xff]
      %v293 = vld [vmem:[%s223 + $0x1ac] sm:$0xff]
      %v294 = vld [vmem:[%s223 + $0x1b4] sm:$0xff]
      %v295 = vld [vmem:[%s223 + $0x1bc] sm:$0xf]
      %v296 = vld [vmem:[%s223 + $0x1c0] sm:$0xff]
      %v297 = vld [vmem:[%s223 + $0x1c8] sm:$0xff]
      %v298 = vld [vmem:[%s223 + $0x1d0] sm:$0xff]
      %v299 = vld [vmem:[%s223 + $0x1d8] sm:$0xf]
      %v300 = vld [vmem:[%s223 + $0x1dc] sm:$0xff]
      %v301 = vld [vmem:[%s223 + $0x1e4] sm:$0xff]
      %v302 = vld [vmem:[%s223 + $0x1ec] sm:$0xff]
      %v303 = vld [vmem:[%s223 + $0x1f4] sm:$0xf]
      %v304 = vld [vmem:[%s223 + $0x1f8] sm:$0xff]
      %v305 = vld [vmem:[%s223 + $0x200] sm:$0xff]
      %v306 = vld [vmem:[%s223 + $0x208] sm:$0xff]
      %v307 = vld [vmem:[%s223 + $0x210] sm:$0xf]
      %v308 = vld [vmem:[%s223 + $0x214] sm:$0xff]
      %v309 = vld [vmem:[%s223 + $0x21c] sm:$0xff]
      %v310 = vld [vmem:[%s223 + $0x224] sm:$0xff]
      %v311 = vld [vmem:[%s223 + $0x22c] sm:$0xf]
      %v312 = vld [vmem:[%s223 + $0x230] sm:$0xff]
      %v313 = vld [vmem:[%s223 + $0x238] sm:$0xff]
      %v314 = vld [vmem:[%s223 + $0x240] sm:$0xff]
      %v315 = vld [vmem:[%s223 + $0x248] sm:$0xf]
      %v316 = vld [vmem:[%s223 + $0x24c] sm:$0xff]
      %v317 = vld [vmem:[%s223 + $0x254] sm:$0xff]
      %v318 = vld [vmem:[%s223 + $0x25c] sm:$0xff]
      %v319 = vld [vmem:[%s223 + $0x264] sm:$0xf]
      %v320 = vld [vmem:[%s223 + $0x268] sm:$0xff]
      %v321 = vld [vmem:[%s223 + $0x270] sm:$0xff]
      %v322 = vld [vmem:[%s223 + $0x278] sm:$0xff]
      %v323 = vld [vmem:[%s223 + $0x280] sm:$0xf]
      %v324 = vld [vmem:[%s223 + $0x284] sm:$0xff]
      %v325 = vld [vmem:[%s223 + $0x28c] sm:$0xff]
      %v326 = vld [vmem:[%s223 + $0x294] sm:$0xff]
      %v327 = vld [vmem:[%s223 + $0x29c] sm:$0xf]
      %v328 = vld [vmem:[%s223 + $0x2a0] sm:$0xff]
      %v329 = vld [vmem:[%s223 + $0x2a8] sm:$0xff]
      %v330 = vld [vmem:[%s223 + $0x2b0] sm:$0xff]
      %v331 = vld [vmem:[%s223 + $0x2b8] sm:$0xf]
      %v332 = vld [vmem:[%s223 + $0x2bc] sm:$0xff]
      %v333 = vld [vmem:[%s223 + $0x2c4] sm:$0xff]
      %v334 = vld [vmem:[%s223 + $0x2cc] sm:$0xff]
      %v335 = vld [vmem:[%s223 + $0x2d4] sm:$0xf]
      %v336 = vld [vmem:[%s223 + $0x2d8] sm:$0xff]
      %v337 = vld [vmem:[%s223 + $0x2e0] sm:$0xff]
      %v338 = vld [vmem:[%s223 + $0x2e8] sm:$0xff]
      %v339 = vld [vmem:[%s223 + $0x2f0] sm:$0xf]
      %v340 = vld [vmem:[%s223 + $0x2f4] sm:$0xff]
      %v341 = vld [vmem:[%s223 + $0x2fc] sm:$0xff]
      %v342 = vld [vmem:[%s223 + $0x304] sm:$0xff]
      %v343 = vld [vmem:[%s223 + $0x30c] sm:$0xf]
      %v344 = vld [vmem:[%s223 + $0x310] sm:$0xff]
      %v345 = vld [vmem:[%s223 + $0x318] sm:$0xff]
      %v346 = vld [vmem:[%s223 + $0x320] sm:$0xff]
      %v347 = vld [vmem:[%s223 + $0x328] sm:$0xf]
      %v348 = vld [vmem:[%s223 + $0x32c] sm:$0xff]
      %v349 = vld [vmem:[%s223 + $0x334] sm:$0xff]
      %v350 = vld [vmem:[%s223 + $0x33c] sm:$0xff]
      %v351 = vld [vmem:[%s223 + $0x344] sm:$0xf]
      %v352 = vld [vmem:[%s223 + $0x348] sm:$0xff]
      %v353 = vld [vmem:[%s223 + $0x350] sm:$0xff]
      %v354 = vld [vmem:[%s223 + $0x358] sm:$0xff]
      %v355 = vld [vmem:[%s223 + $0x360] sm:$0xf]
      %v356 = vld [vmem:[%s223 + $0x364] sm:$0xff]
      %v357 = vld [vmem:[%s223 + $0x36c] sm:$0xff]
      %v358 = vld [vmem:[%s223 + $0x374] sm:$0xff]
      %v359 = vld [vmem:[%s223 + $0x37c] sm:$0xf]
      %v360 = vld [vmem:[%s1] sm:$0xff]
      %v361 = vld [vmem:[%s1 + $0x8] sm:$0xff]
      %v362 = vld [vmem:[%s1 + $0x10] sm:$0xff]
      %v363 = vld [vmem:[%s1 + $0x18] sm:$0xff]
      %v364 = vld [vmem:[%s1 + $0x20] sm:$0xff]
      %v365 = vld [vmem:[%s1 + $0x28] sm:$0xff]
      %v366 = vld [vmem:[%s1 + $0x30] sm:$0xff]
      %v367 = vld [vmem:[%s1 + $0x38] sm:$0xff]
      %v368 = vld [vmem:[%s1 + $0x40] sm:$0xff]
      %v369 = vld [vmem:[%s1 + $0x48] sm:$0xff]
      %v370 = vld [vmem:[%s1 + $0x50] sm:$0xff]
      %v371 = vld [vmem:[%s1 + $0x58] sm:$0xff]
      %v372 = vld [vmem:[%s1 + $0x60] sm:$0xff]
      %v373 = vld [vmem:[%s1 + $0x68] sm:$0xff]
      %v374 = vld [vmem:[%s1 + $0x70] sm:$0xff]
      %v375 = vld [vmem:[%s1 + $0x78] sm:$0xff]
      %v376 = vld [vmem:[%s1 + $0x80] sm:$0xff]
      %v377 = vld [vmem:[%s1 + $0x88] sm:$0xff]
      %v378 = vld [vmem:[%s1 + $0x90] sm:$0xff]
      %v379 = vld [vmem:[%s1 + $0x98] sm:$0xff]
      %v380 = vld [vmem:[%s1 + $0xa0] sm:$0xff]
      %v381 = vld [vmem:[%s1 + $0xa8] sm:$0xff]
      %v382 = vld [vmem:[%s1 + $0xb0] sm:$0xff]
      %v383 = vld [vmem:[%s1 + $0xb8] sm:$0xff]
      %v384 = vld [vmem:[%s1 + $0xc0] sm:$0xff]
      %v385 = vld [vmem:[%s1 + $0xc8] sm:$0xff]
      %v386 = vld [vmem:[%s1 + $0xd0] sm:$0xff]
      %v387 = vld [vmem:[%s1 + $0xd8] sm:$0xff]
      %v388 = vld [vmem:[%s1 + $0xe0] sm:$0xff]
      %v389 = vld [vmem:[%s1 + $0xe8] sm:$0xff]
      %v390 = vld [vmem:[%s1 + $0xf0] sm:$0xff]
      %v391 = vld [vmem:[%s1 + $0xf8] sm:$0xff]
      %v392 = vld [vmem:[%s1 + $0x100] sm:$0xff]
      %v393 = vld [vmem:[%s1 + $0x108] sm:$0xff]
      %v394 = vld [vmem:[%s1 + $0x110] sm:$0xff]
      %v395 = vld [vmem:[%s1 + $0x118] sm:$0xff]
      %v396 = vld [vmem:[%s1 + $0x120] sm:$0xff]
      %v397 = vld [vmem:[%s1 + $0x128] sm:$0xff]
      %v398 = vld [vmem:[%s1 + $0x130] sm:$0xff]
      %v399 = vld [vmem:[%s1 + $0x138] sm:$0xff]
      %v400 = vld [vmem:[%s1 + $0x140] sm:$0xff]
      %v401 = vld [vmem:[%s1 + $0x148] sm:$0xff]
      %v402 = vld [vmem:[%s1 + $0x150] sm:$0xff]
      %v403 = vld [vmem:[%s1 + $0x158] sm:$0xff]
      %v404 = vld [vmem:[%s1 + $0x160] sm:$0xff]
      %v405 = vld [vmem:[%s1 + $0x168] sm:$0xff]
      %v406 = vld [vmem:[%s1 + $0x170] sm:$0xff]
      %v407 = vld [vmem:[%s1 + $0x178] sm:$0xff]
      %v408 = vld [vmem:[%s1 + $0x180] sm:$0xff]
      %v409 = vld [vmem:[%s1 + $0x188] sm:$0xff]
      %v410 = vld [vmem:[%s1 + $0x190] sm:$0xff]
      %v411 = vld [vmem:[%s1 + $0x198] sm:$0xff]
      %v412 = vld [vmem:[%s1 + $0x1a0] sm:$0xff]
      %v413 = vld [vmem:[%s1 + $0x1a8] sm:$0xff]
      %v414 = vld [vmem:[%s1 + $0x1b0] sm:$0xff]
      %v415 = vld [vmem:[%s1 + $0x1b8] sm:$0xff]
      %v416 = vld [vmem:[%s1 + $0x1c0] sm:$0xff]
      %v417 = vld [vmem:[%s1 + $0x1c8] sm:$0xff]
      %v418 = vld [vmem:[%s1 + $0x1d0] sm:$0xff]
      %v419 = vld [vmem:[%s1 + $0x1d8] sm:$0xff]
      %v420 = vld [vmem:[%s1 + $0x1e0] sm:$0xff]
      %v421 = vld [vmem:[%s1 + $0x1e8] sm:$0xff]
      %v422 = vld [vmem:[%s1 + $0x1f0] sm:$0xff]
      %v423 = vld [vmem:[%s1 + $0x1f8] sm:$0xff]
      %v424 = vld [vmem:[%s1 + $0x200] sm:$0xff]
      %v425 = vld [vmem:[%s1 + $0x208] sm:$0xff]
      %v426 = vld [vmem:[%s1 + $0x210] sm:$0xff]
      %v427 = vld [vmem:[%s1 + $0x218] sm:$0xff]
      %v428 = vld [vmem:[%s1 + $0x220] sm:$0xff]
      %v429 = vld [vmem:[%s1 + $0x228] sm:$0xff]
      %v430 = vld [vmem:[%s1 + $0x230] sm:$0xff]
      %v431 = vld [vmem:[%s1 + $0x238] sm:$0xff]
      %v432 = vld [vmem:[%s1 + $0x240] sm:$0xff]
      %v433 = vld [vmem:[%s1 + $0x248] sm:$0xff]
      %v434 = vld [vmem:[%s1 + $0x250] sm:$0xff]
      %v435 = vld [vmem:[%s1 + $0x258] sm:$0xff]
      %v436 = vld [vmem:[%s1 + $0x260] sm:$0xff]
      %v437 = vld [vmem:[%s1 + $0x268] sm:$0xff]
      %v438 = vld [vmem:[%s1 + $0x270] sm:$0xff]
      %v439 = vld [vmem:[%s1 + $0x278] sm:$0xff]
      %v440 = vld [vmem:[%s1 + $0x280] sm:$0xff]
      %v441 = vld [vmem:[%s1 + $0x288] sm:$0xff]
      %v442 = vld [vmem:[%s1 + $0x290] sm:$0xff]
      %v443 = vld [vmem:[%s1 + $0x298] sm:$0xff]
      %v444 = vld [vmem:[%s1 + $0x2a0] sm:$0xff]
      %v445 = vld [vmem:[%s1 + $0x2a8] sm:$0xff]
      %v446 = vld [vmem:[%s1 + $0x2b0] sm:$0xff]
      %v447 = vld [vmem:[%s1 + $0x2b8] sm:$0xff]
      %v448 = vld [vmem:[%s1 + $0x2c0] sm:$0xff]
      %v449 = vld [vmem:[%s1 + $0x2c8] sm:$0xff]
      %v450 = vld [vmem:[%s1 + $0x2d0] sm:$0xff]
      %v451 = vld [vmem:[%s1 + $0x2d8] sm:$0xff]
      %v452 = vld [vmem:[%s1 + $0x2e0] sm:$0xff]
      %v453 = vld [vmem:[%s1 + $0x2e8] sm:$0xff]
      %v454 = vld [vmem:[%s1 + $0x2f0] sm:$0xff]
      %v455 = vld [vmem:[%s1 + $0x2f8] sm:$0xff]
      %v456 = vld [vmem:[%s1 + $0x300] sm:$0xff]
      %v457 = vld [vmem:[%s1 + $0x308] sm:$0xff]
      %v458 = vld [vmem:[%s1 + $0x310] sm:$0xff]
      %v459 = vld [vmem:[%s1 + $0x318] sm:$0xff]
      %v460 = vld [vmem:[%s1 + $0x320] sm:$0xff]
      %v461 = vld [vmem:[%s1 + $0x328] sm:$0xff]
      %v462 = vld [vmem:[%s1 + $0x330] sm:$0xff]
      %v463 = vld [vmem:[%s1 + $0x338] sm:$0xff]
      %v464 = vld [vmem:[%s1 + $0x340] sm:$0xff]
      %v465 = vld [vmem:[%s1 + $0x348] sm:$0xff]
      %v466 = vld [vmem:[%s1 + $0x350] sm:$0xff]
      %v467 = vld [vmem:[%s1 + $0x358] sm:$0xff]
      %v468 = vld [vmem:[%s1 + $0x360] sm:$0xff]
      %v469 = vld [vmem:[%s1 + $0x368] sm:$0xff]
      %v470 = vld [vmem:[%s1 + $0x370] sm:$0xff]
      %v471 = vld [vmem:[%s1 + $0x378] sm:$0xff]
      %v472 = vld [vmem:[%s1 + $0x380] sm:$0xff]
      %v473 = vld [vmem:[%s1 + $0x388] sm:$0xff]
      %v474 = vld [vmem:[%s1 + $0x390] sm:$0xff]
      %v475 = vld [vmem:[%s1 + $0x398] sm:$0xff]
      %v476 = vld [vmem:[%s1 + $0x3a0] sm:$0xff]
      %v477 = vld [vmem:[%s1 + $0x3a8] sm:$0xff]
      %v478 = vld [vmem:[%s1 + $0x3b0] sm:$0xff]
      %v479 = vld [vmem:[%s1 + $0x3b8] sm:$0xff]
      %v480 = vld [vmem:[%s1 + $0x3c0] sm:$0xff]
      %v481 = vld [vmem:[%s1 + $0x3c8] sm:$0xff]
      %v482 = vld [vmem:[%s1 + $0x3d0] sm:$0xff]
      %v483 = vld [vmem:[%s1 + $0x3d8] sm:$0xff]
      %v484 = vld [vmem:[%s1 + $0x3e0] sm:$0xff]
      %v485 = vld [vmem:[%s1 + $0x3e8] sm:$0xff]
      %v486 = vld [vmem:[%s1 + $0x3f0] sm:$0xff]
      %v487 = vld [vmem:[%s1 + $0x3f8] sm:$0xff]
      %v488 = vld [vmem:[%s1 + $0x400] sm:$0xff]
      %v489 = vld [vmem:[%s1 + $0x408] sm:$0xff]
      %v490 = vld [vmem:[%s1 + $0x410] sm:$0xff]
      %v491 = vld [vmem:[%s1 + $0x418] sm:$0xff]
      %v492 = vld [vmem:[%s1 + $0x420] sm:$0xff]
      %v493 = vld [vmem:[%s1 + $0x428] sm:$0xff]
      %v494 = vld [vmem:[%s1 + $0x430] sm:$0xff]
      %v495 = vld [vmem:[%s1 + $0x438] sm:$0xff]
      %v496 = vld [vmem:[%s1 + $0x440] sm:$0xff]
      %v497 = vld [vmem:[%s1 + $0x448] sm:$0xff]
      %v498 = vld [vmem:[%s1 + $0x450] sm:$0xff]
      %v499 = vld [vmem:[%s1 + $0x458] sm:$0xff]
      %v500 = vld [vmem:[%s1 + $0x460] sm:$0xff]
      %v501 = vld [vmem:[%s1 + $0x468] sm:$0xff]
      %v502 = vld [vmem:[%s1 + $0x470] sm:$0xff]
      %v503 = vld [vmem:[%s1 + $0x478] sm:$0xff]
      %v504 = vld [vmem:[%s1 + $0x480] sm:$0xff]
      %v505 = vld [vmem:[%s1 + $0x488] sm:$0xff]
      %v506 = vld [vmem:[%s1 + $0x490] sm:$0xff]
      %v507 = vld [vmem:[%s1 + $0x498] sm:$0xff]
      %v508 = vld [vmem:[%s1 + $0x4a0] sm:$0xff]
      %v509 = vld [vmem:[%s1 + $0x4a8] sm:$0xff]
      %v510 = vld [vmem:[%s1 + $0x4b0] sm:$0xff]
      %v511 = vld [vmem:[%s1 + $0x4b8] sm:$0xff]
      %v512 = vld [vmem:[%s1 + $0x4c0] sm:$0xff]
      %v513 = vld [vmem:[%s1 + $0x4c8] sm:$0xff]
      %v514 = vld [vmem:[%s1 + $0x4d0] sm:$0xff]
      %v515 = vld [vmem:[%s1 + $0x4d8] sm:$0xff]
      %v516 = vld [vmem:[%s1 + $0x4e0] sm:$0xff]
      %v517 = vld [vmem:[%s1 + $0x4e8] sm:$0xff]
      %v518 = vld [vmem:[%s1 + $0x4f0] sm:$0xff]
      %v519 = vld [vmem:[%s1 + $0x4f8] sm:$0xff]
      %v520 = vld [vmem:[%s1 + $0x500] sm:$0xff]
      %v521 = vld [vmem:[%s1 + $0x508] sm:$0xff]
      %v522 = vld [vmem:[%s1 + $0x510] sm:$0xff]
      %v523 = vld [vmem:[%s1 + $0x518] sm:$0xff]
      %v524 = vld [vmem:[%s1 + $0x520] sm:$0xff]
      %v525 = vld [vmem:[%s1 + $0x528] sm:$0xff]
      %v526 = vld [vmem:[%s1 + $0x530] sm:$0xff]
      %v527 = vld [vmem:[%s1 + $0x538] sm:$0xff]
      %v528 = vld [vmem:[%s1 + $0x540] sm:$0xff]
      %v529 = vld [vmem:[%s1 + $0x548] sm:$0xff]
      %v530 = vld [vmem:[%s1 + $0x550] sm:$0xff]
      %v531 = vld [vmem:[%s1 + $0x558] sm:$0xff]
      %v532 = vld [vmem:[%s1 + $0x560] sm:$0xff]
      %v533 = vld [vmem:[%s1 + $0x568] sm:$0xff]
      %v534 = vld [vmem:[%s1 + $0x570] sm:$0xff]
      %v535 = vld [vmem:[%s1 + $0x578] sm:$0xff]
      %v536 = vld [vmem:[%s1 + $0x580] sm:$0xff]
      %v537 = vld [vmem:[%s1 + $0x588] sm:$0xff]
      %v538 = vld [vmem:[%s1 + $0x590] sm:$0xff]
      %v539 = vld [vmem:[%s1 + $0x598] sm:$0xff]
      %v540 = vld [vmem:[%s1 + $0x5a0] sm:$0xff]
      %v541 = vld [vmem:[%s1 + $0x5a8] sm:$0xff]
      %v542 = vld [vmem:[%s1 + $0x5b0] sm:$0xff]
      %v543 = vld [vmem:[%s1 + $0x5b8] sm:$0xff]
      %v544 = vld [vmem:[%s1 + $0x5c0] sm:$0xff]
      %v545 = vld [vmem:[%s1 + $0x5c8] sm:$0xff]
      %v546 = vld [vmem:[%s1 + $0x5d0] sm:$0xff]
      %v547 = vld [vmem:[%s1 + $0x5d8] sm:$0xff]
      %v548 = vld [vmem:[%s1 + $0x5e0] sm:$0xff]
      %v549 = vld [vmem:[%s1 + $0x5e8] sm:$0xff]
      %v550 = vld [vmem:[%s1 + $0x5f0] sm:$0xff]
      %v551 = vld [vmem:[%s1 + $0x5f8] sm:$0xff]
      %v552 = vld [vmem:[%s1 + $0x600] sm:$0xff]
      %v553 = vld [vmem:[%s1 + $0x608] sm:$0xff]
      %v554 = vld [vmem:[%s1 + $0x610] sm:$0xff]
      %v555 = vld [vmem:[%s1 + $0x618] sm:$0xff]
      %v556 = vld [vmem:[%s2] sm:$0xf]
      %v558 = vlaneseq
      %v559 = vshrl.u32 %v558, 7
      %v560 = vsub.s32 0, %v559
      %v561 = vrot.slane %v556, %v560
      %v562 = vlaneseq
      %v563 = vshrl.u32 %v562, 7
      %v564 = vsub.s32 1, %v563
      %v565 = vrot.slane %v556, %v564
      %v566 = vlaneseq
      %v567 = vshrl.u32 %v566, 7
      %v568 = vsub.s32 2, %v567
      %v569 = vrot.slane %v556, %v568
      %v570 = vlaneseq
      %v571 = vshrl.u32 %v570, 7
      %v572 = vsub.s32 3, %v571
      %v573 = vrot.slane %v556, %v572
      %v706 = vunpack.c.l.b16 %v232
      %v707 = vunpack.c.h.b16 %v232
      %v708 = vunpack.c.l.b16 %v233
      %v709 = vunpack.c.h.b16 %v233
      %v710 = vunpack.c.l.b16 %v234
      %v711 = vunpack.c.h.b16 %v234
      %v712 = vunpack.c.l.b16 %v235
      %v713 = vunpack.c.l.b16 %v236
      %v714 = vunpack.c.h.b16 %v236
      %v715 = vunpack.c.l.b16 %v237
      %v716 = vunpack.c.h.b16 %v237
      %v717 = vunpack.c.l.b16 %v238
      %v718 = vunpack.c.h.b16 %v238
      %v719 = vunpack.c.l.b16 %v239
      %v720 = vunpack.c.l.b16 %v240
      %v721 = vunpack.c.h.b16 %v240
      %v722 = vunpack.c.l.b16 %v241
      %v723 = vunpack.c.h.b16 %v241
      %v724 = vunpack.c.l.b16 %v242
      %v725 = vunpack.c.h.b16 %v242
      %v726 = vunpack.c.l.b16 %v243
      %v727 = vunpack.c.l.b16 %v244
      %v728 = vunpack.c.h.b16 %v244
      %v729 = vunpack.c.l.b16 %v245
      %v730 = vunpack.c.h.b16 %v245
      %v731 = vunpack.c.l.b16 %v246
      %v732 = vunpack.c.h.b16 %v246
      %v733 = vunpack.c.l.b16 %v247
      %v734 = vunpack.c.l.b16 %v248
      %v735 = vunpack.c.h.b16 %v248
      %v736 = vunpack.c.l.b16 %v249
      %v737 = vunpack.c.h.b16 %v249
      %v738 = vunpack.c.l.b16 %v250
      %v739 = vunpack.c.h.b16 %v250
      %v740 = vunpack.c.l.b16 %v251
      %v741 = vunpack.c.l.b16 %v252
      %v742 = vunpack.c.h.b16 %v252
      %v743 = vunpack.c.l.b16 %v253
      %v744 = vunpack.c.h.b16 %v253
      %v745 = vunpack.c.l.b16 %v254
      %v746 = vunpack.c.h.b16 %v254
      %v747 = vunpack.c.l.b16 %v255
      %v748 = vunpack.c.l.b16 %v256
      %v749 = vunpack.c.h.b16 %v256
      %v750 = vunpack.c.l.b16 %v257
      %v751 = vunpack.c.h.b16 %v257
      %v752 = vunpack.c.l.b16 %v258
      %v753 = vunpack.c.h.b16 %v258
      %v754 = vunpack.c.l.b16 %v259
      %v755 = vunpack.c.l.b16 %v260
      %v756 = vunpack.c.h.b16 %v260
      %v757 = vunpack.c.l.b16 %v261
      %v758 = vunpack.c.h.b16 %v261
      %v759 = vunpack.c.l.b16 %v262
      %v760 = vunpack.c.h.b16 %v262
      %v761 = vunpack.c.l.b16 %v263
      %v762 = vunpack.c.l.b16 %v264
      %v763 = vunpack.c.h.b16 %v264
      %v764 = vunpack.c.l.b16 %v265
      %v765 = vunpack.c.h.b16 %v265
      %v766 = vunpack.c.l.b16 %v266
      %v767 = vunpack.c.h.b16 %v266
      %v768 = vunpack.c.l.b16 %v267
      %v769 = vunpack.c.l.b16 %v268
      %v770 = vunpack.c.h.b16 %v268
      %v771 = vunpack.c.l.b16 %v269
      %v772 = vunpack.c.h.b16 %v269
      %v773 = vunpack.c.l.b16 %v270
      %v774 = vunpack.c.h.b16 %v270
      %v775 = vunpack.c.l.b16 %v271
      %v776 = vunpack.c.l.b16 %v272
      %v777 = vunpack.c.h.b16 %v272
      %v778 = vunpack.c.l.b16 %v273
      %v779 = vunpack.c.h.b16 %v273
      %v780 = vunpack.c.l.b16 %v274
      %v781 = vunpack.c.h.b16 %v274
      %v782 = vunpack.c.l.b16 %v275
      %v783 = vunpack.c.l.b16 %v276
      %v784 = vunpack.c.h.b16 %v276
      %v785 = vunpack.c.l.b16 %v277
      %v786 = vunpack.c.h.b16 %v277
      %v787 = vunpack.c.l.b16 %v278
      %v788 = vunpack.c.h.b16 %v278
      %v789 = vunpack.c.l.b16 %v279
      %v790 = vunpack.c.l.b16 %v280
      %v791 = vunpack.c.h.b16 %v280
      %v792 = vunpack.c.l.b16 %v281
      %v793 = vunpack.c.h.b16 %v281
      %v794 = vunpack.c.l.b16 %v282
      %v795 = vunpack.c.h.b16 %v282
      %v796 = vunpack.c.l.b16 %v283
      %v797 = vunpack.c.l.b16 %v284
      %v798 = vunpack.c.h.b16 %v284
      %v799 = vunpack.c.l.b16 %v285
      %v800 = vunpack.c.h.b16 %v285
      %v801 = vunpack.c.l.b16 %v286
      %v802 = vunpack.c.h.b16 %v286
      %v803 = vunpack.c.l.b16 %v287
      %v804 = vunpack.c.l.b16 %v288
      %v805 = vunpack.c.h.b16 %v288
      %v806 = vunpack.c.l.b16 %v289
      %v807 = vunpack.c.h.b16 %v289
      %v808 = vunpack.c.l.b16 %v290
      %v809 = vunpack.c.h.b16 %v290
      %v810 = vunpack.c.l.b16 %v291
      %v811 = vunpack.c.l.b16 %v292
      %v812 = vunpack.c.h.b16 %v292
      %v813 = vunpack.c.l.b16 %v293
      %v814 = vunpack.c.h.b16 %v293
      %v815 = vunpack.c.l.b16 %v294
      %v816 = vunpack.c.h.b16 %v294
      %v817 = vunpack.c.l.b16 %v295
      %v818 = vunpack.c.l.b16 %v296
      %v819 = vunpack.c.h.b16 %v296
      %v820 = vunpack.c.l.b16 %v297
      %v821 = vunpack.c.h.b16 %v297
      %v822 = vunpack.c.l.b16 %v298
      %v823 = vunpack.c.h.b16 %v298
      %v824 = vunpack.c.l.b16 %v299
      %v825 = vunpack.c.l.b16 %v300
      %v826 = vunpack.c.h.b16 %v300
      %v827 = vunpack.c.l.b16 %v301
      %v828 = vunpack.c.h.b16 %v301
      %v829 = vunpack.c.l.b16 %v302
      %v830 = vunpack.c.h.b16 %v302
      %v831 = vunpack.c.l.b16 %v303
      %v832 = vunpack.c.l.b16 %v304
      %v833 = vunpack.c.h.b16 %v304
      %v834 = vunpack.c.l.b16 %v305
      %v835 = vunpack.c.h.b16 %v305
      %v836 = vunpack.c.l.b16 %v306
      %v837 = vunpack.c.h.b16 %v306
      %v838 = vunpack.c.l.b16 %v307
      %v839 = vunpack.c.l.b16 %v308
      %v840 = vunpack.c.h.b16 %v308
      %v841 = vunpack.c.l.b16 %v309
      %v842 = vunpack.c.h.b16 %v309
      %v843 = vunpack.c.l.b16 %v310
      %v844 = vunpack.c.h.b16 %v310
      %v845 = vunpack.c.l.b16 %v311
      %v846 = vunpack.c.l.b16 %v312
      %v847 = vunpack.c.h.b16 %v312
      %v848 = vunpack.c.l.b16 %v313
      %v849 = vunpack.c.h.b16 %v313
      %v850 = vunpack.c.l.b16 %v314
      %v851 = vunpack.c.h.b16 %v314
      %v852 = vunpack.c.l.b16 %v315
      %v853 = vunpack.c.l.b16 %v316
      %v854 = vunpack.c.h.b16 %v316
      %v855 = vunpack.c.l.b16 %v317
      %v856 = vunpack.c.h.b16 %v317
      %v857 = vunpack.c.l.b16 %v318
      %v858 = vunpack.c.h.b16 %v318
      %v859 = vunpack.c.l.b16 %v319
      %v860 = vunpack.c.l.b16 %v320
      %v861 = vunpack.c.h.b16 %v320
      %v862 = vunpack.c.l.b16 %v321
      %v863 = vunpack.c.h.b16 %v321
      %v864 = vunpack.c.l.b16 %v322
      %v865 = vunpack.c.h.b16 %v322
      %v866 = vunpack.c.l.b16 %v323
      %v867 = vunpack.c.l.b16 %v324
      %v868 = vunpack.c.h.b16 %v324
      %v869 = vunpack.c.l.b16 %v325
      %v870 = vunpack.c.h.b16 %v325
      %v871 = vunpack.c.l.b16 %v326
      %v872 = vunpack.c.h.b16 %v326
      %v873 = vunpack.c.l.b16 %v327
      %v874 = vunpack.c.l.b16 %v328
      %v875 = vunpack.c.h.b16 %v328
      %v876 = vunpack.c.l.b16 %v329
      %v877 = vunpack.c.h.b16 %v329
      %v878 = vunpack.c.l.b16 %v330
      %v879 = vunpack.c.h.b16 %v330
      %v880 = vunpack.c.l.b16 %v331
      %v881 = vunpack.c.l.b16 %v332
      %v882 = vunpack.c.h.b16 %v332
      %v883 = vunpack.c.l.b16 %v333
      %v884 = vunpack.c.h.b16 %v333
      %v885 = vunpack.c.l.b16 %v334
      %v886 = vunpack.c.h.b16 %v334
      %v887 = vunpack.c.l.b16 %v335
      %v888 = vunpack.c.l.b16 %v336
      %v889 = vunpack.c.h.b16 %v336
      %v890 = vunpack.c.l.b16 %v337
      %v891 = vunpack.c.h.b16 %v337
      %v892 = vunpack.c.l.b16 %v338
      %v893 = vunpack.c.h.b16 %v338
      %v894 = vunpack.c.l.b16 %v339
      %v895 = vunpack.c.l.b16 %v340
      %v896 = vunpack.c.h.b16 %v340
      %v897 = vunpack.c.l.b16 %v341
      %v898 = vunpack.c.h.b16 %v341
      %v899 = vunpack.c.l.b16 %v342
      %v900 = vunpack.c.h.b16 %v342
      %v901 = vunpack.c.l.b16 %v343
      %v902 = vunpack.c.l.b16 %v344
      %v903 = vunpack.c.h.b16 %v344
      %v904 = vunpack.c.l.b16 %v345
      %v905 = vunpack.c.h.b16 %v345
      %v906 = vunpack.c.l.b16 %v346
      %v907 = vunpack.c.h.b16 %v346
      %v908 = vunpack.c.l.b16 %v347
      %v909 = vunpack.c.l.b16 %v348
      %v910 = vunpack.c.h.b16 %v348
      %v911 = vunpack.c.l.b16 %v349
      %v912 = vunpack.c.h.b16 %v349
      %v913 = vunpack.c.l.b16 %v350
      %v914 = vunpack.c.h.b16 %v350
      %v915 = vunpack.c.l.b16 %v351
      %v916 = vunpack.c.l.b16 %v352
      %v917 = vunpack.c.h.b16 %v352
      %v918 = vunpack.c.l.b16 %v353
      %v919 = vunpack.c.h.b16 %v353
      %v920 = vunpack.c.l.b16 %v354
      %v921 = vunpack.c.h.b16 %v354
      %v922 = vunpack.c.l.b16 %v355
      %v923 = vunpack.c.l.b16 %v356
      %v924 = vunpack.c.h.b16 %v356
      %v925 = vunpack.c.l.b16 %v357
      %v926 = vunpack.c.h.b16 %v357
      %v927 = vunpack.c.l.b16 %v358
      %v928 = vunpack.c.h.b16 %v358
      %v929 = vunpack.c.l.b16 %v359
      %v930 = vpack.c.b16 %v713, %v706
      %v931 = vpack.c.b16 %v714, %v707
      %v932 = vpack.c.b16 %v715, %v708
      %v933 = vpack.c.b16 %v716, %v709
      %v934 = vpack.c.b16 %v717, %v710
      %v935 = vpack.c.b16 %v718, %v711
      %v936 = vpack.c.b16 %v719, %v712
      %v937 = vpack.c.b16 %v727, %v720
      %v938 = vpack.c.b16 %v728, %v721
      %v939 = vpack.c.b16 %v729, %v722
      %v940 = vpack.c.b16 %v730, %v723
      %v941 = vpack.c.b16 %v731, %v724
      %v942 = vpack.c.b16 %v732, %v725
      %v943 = vpack.c.b16 %v733, %v726
      %v944 = vpack.c.b16 %v741, %v734
      %v945 = vpack.c.b16 %v742, %v735
      %v946 = vpack.c.b16 %v743, %v736
      %v947 = vpack.c.b16 %v744, %v737
      %v948 = vpack.c.b16 %v745, %v738
      %v949 = vpack.c.b16 %v746, %v739
      %v950 = vpack.c.b16 %v747, %v740
      %v951 = vpack.c.b16 %v755, %v748
      %v952 = vpack.c.b16 %v756, %v749
      %v953 = vpack.c.b16 %v757, %v750
      %v954 = vpack.c.b16 %v758, %v751
      %v955 = vpack.c.b16 %v759, %v752
      %v956 = vpack.c.b16 %v760, %v753
      %v957 = vpack.c.b16 %v761, %v754
      %v958 = vpack.c.b16 %v769, %v762
      %v959 = vpack.c.b16 %v770, %v763
      %v960 = vpack.c.b16 %v771, %v764
      %v961 = vpack.c.b16 %v772, %v765
      %v962 = vpack.c.b16 %v773, %v766
      %v963 = vpack.c.b16 %v774, %v767
      %v964 = vpack.c.b16 %v775, %v768
      %v965 = vpack.c.b16 %v783, %v776
      %v966 = vpack.c.b16 %v784, %v777
      %v967 = vpack.c.b16 %v785, %v778
      %v968 = vpack.c.b16 %v786, %v779
      %v969 = vpack.c.b16 %v787, %v780
      %v970 = vpack.c.b16 %v788, %v781
      %v971 = vpack.c.b16 %v789, %v782
      %v972 = vpack.c.b16 %v797, %v790
      %v973 = vpack.c.b16 %v798, %v791
      %v974 = vpack.c.b16 %v799, %v792
      %v975 = vpack.c.b16 %v800, %v793
      %v976 = vpack.c.b16 %v801, %v794
      %v977 = vpack.c.b16 %v802, %v795
      %v978 = vpack.c.b16 %v803, %v796
      %v979 = vpack.c.b16 %v811, %v804
      %v980 = vpack.c.b16 %v812, %v805
      %v981 = vpack.c.b16 %v813, %v806
      %v982 = vpack.c.b16 %v814, %v807
      %v983 = vpack.c.b16 %v815, %v808
      %v984 = vpack.c.b16 %v816, %v809
      %v985 = vpack.c.b16 %v817, %v810
      %v986 = vpack.c.b16 %v825, %v818
      %v987 = vpack.c.b16 %v826, %v819
      %v988 = vpack.c.b16 %v827, %v820
      %v989 = vpack.c.b16 %v828, %v821
      %v990 = vpack.c.b16 %v829, %v822
      %v991 = vpack.c.b16 %v830, %v823
      %v992 = vpack.c.b16 %v831, %v824
      %v993 = vpack.c.b16 %v839, %v832
      %v994 = vpack.c.b16 %v840, %v833
      %v995 = vpack.c.b16 %v841, %v834
      %v996 = vpack.c.b16 %v842, %v835
      %v997 = vpack.c.b16 %v843, %v836
      %v998 = vpack.c.b16 %v844, %v837
      %v999 = vpack.c.b16 %v845, %v838
      %v1000 = vpack.c.b16 %v853, %v846
      %v1001 = vpack.c.b16 %v854, %v847
      %v1002 = vpack.c.b16 %v855, %v848
      %v1003 = vpack.c.b16 %v856, %v849
      %v1004 = vpack.c.b16 %v857, %v850
      %v1005 = vpack.c.b16 %v858, %v851
      %v1006 = vpack.c.b16 %v859, %v852
      %v1007 = vpack.c.b16 %v867, %v860
      %v1008 = vpack.c.b16 %v868, %v861
      %v1009 = vpack.c.b16 %v869, %v862
      %v1010 = vpack.c.b16 %v870, %v863
      %v1011 = vpack.c.b16 %v871, %v864
      %v1012 = vpack.c.b16 %v872, %v865
      %v1013 = vpack.c.b16 %v873, %v866
      %v1014 = vpack.c.b16 %v881, %v874
      %v1015 = vpack.c.b16 %v882, %v875
      %v1016 = vpack.c.b16 %v883, %v876
      %v1017 = vpack.c.b16 %v884, %v877
      %v1018 = vpack.c.b16 %v885, %v878
      %v1019 = vpack.c.b16 %v886, %v879
      %v1020 = vpack.c.b16 %v887, %v880
      %v1021 = vpack.c.b16 %v895, %v888
      %v1022 = vpack.c.b16 %v896, %v889
      %v1023 = vpack.c.b16 %v897, %v890
      %v1024 = vpack.c.b16 %v898, %v891
      %v1025 = vpack.c.b16 %v899, %v892
      %v1026 = vpack.c.b16 %v900, %v893
      %v1027 = vpack.c.b16 %v901, %v894
      %v1028 = vpack.c.b16 %v909, %v902
      %v1029 = vpack.c.b16 %v910, %v903
      %v1030 = vpack.c.b16 %v911, %v904
      %v1031 = vpack.c.b16 %v912, %v905
      %v1032 = vpack.c.b16 %v913, %v906
      %v1033 = vpack.c.b16 %v914, %v907
      %v1034 = vpack.c.b16 %v915, %v908
      %v1035 = vpack.c.b16 %v923, %v916
      %v1036 = vpack.c.b16 %v924, %v917
      %v1037 = vpack.c.b16 %v925, %v918
      %v1038 = vpack.c.b16 %v926, %v919
      %v1039 = vpack.c.b16 %v927, %v920
      %v1040 = vpack.c.b16 %v928, %v921
      %v1041 = vpack.c.b16 %v929, %v922
      %v1334 = vunpack.c.l.b16 %v360
      %v1335 = vunpack.c.h.b16 %v360
      %v1336 = vunpack.c.l.b16 %v361
      %v1337 = vunpack.c.h.b16 %v361
      %v1338 = vunpack.c.l.b16 %v362
      %v1339 = vunpack.c.h.b16 %v362
      %v1340 = vunpack.c.l.b16 %v363
      %v1341 = vunpack.c.h.b16 %v363
      %v1342 = vunpack.c.l.b16 %v364
      %v1343 = vunpack.c.h.b16 %v364
      %v1344 = vunpack.c.l.b16 %v365
      %v1345 = vunpack.c.h.b16 %v365
      %v1346 = vunpack.c.l.b16 %v366
      %v1347 = vunpack.c.h.b16 %v366
      %v1348 = vunpack.c.l.b16 %v367
      %v1349 = vunpack.c.h.b16 %v367
      %v1350 = vunpack.c.l.b16 %v368
      %v1351 = vunpack.c.h.b16 %v368
      %v1352 = vunpack.c.l.b16 %v369
      %v1353 = vunpack.c.h.b16 %v369
      %v1354 = vunpack.c.l.b16 %v370
      %v1355 = vunpack.c.h.b16 %v370
      %v1356 = vunpack.c.l.b16 %v371
      %v1357 = vunpack.c.h.b16 %v371
      %v1358 = vunpack.c.l.b16 %v372
      %v1359 = vunpack.c.h.b16 %v372
      %v1360 = vunpack.c.l.b16 %v373
      %v1361 = vunpack.c.h.b16 %v373
      %v1362 = vunpack.c.l.b16 %v374
      %v1363 = vunpack.c.h.b16 %v374
      %v1364 = vunpack.c.l.b16 %v375
      %v1365 = vunpack.c.h.b16 %v375
      %v1366 = vunpack.c.l.b16 %v376
      %v1367 = vunpack.c.h.b16 %v376
      %v1368 = vunpack.c.l.b16 %v377
      %v1369 = vunpack.c.h.b16 %v377
      %v1370 = vunpack.c.l.b16 %v378
      %v1371 = vunpack.c.h.b16 %v378
      %v1372 = vunpack.c.l.b16 %v379
      %v1373 = vunpack.c.h.b16 %v379
      %v1374 = vunpack.c.l.b16 %v380
      %v1375 = vunpack.c.h.b16 %v380
      %v1376 = vunpack.c.l.b16 %v381
      %v1377 = vunpack.c.h.b16 %v381
      %v1378 = vunpack.c.l.b16 %v382
      %v1379 = vunpack.c.h.b16 %v382
      %v1380 = vunpack.c.l.b16 %v383
      %v1381 = vunpack.c.h.b16 %v383
      %v1382 = vunpack.c.l.b16 %v384
      %v1383 = vunpack.c.h.b16 %v384
      %v1384 = vunpack.c.l.b16 %v385
      %v1385 = vunpack.c.h.b16 %v385
      %v1386 = vunpack.c.l.b16 %v386
      %v1387 = vunpack.c.h.b16 %v386
      %v1388 = vunpack.c.l.b16 %v387
      %v1389 = vunpack.c.h.b16 %v387
      %v1390 = vunpack.c.l.b16 %v388
      %v1391 = vunpack.c.h.b16 %v388
      %v1392 = vunpack.c.l.b16 %v389
      %v1393 = vunpack.c.h.b16 %v389
      %v1394 = vunpack.c.l.b16 %v390
      %v1395 = vunpack.c.h.b16 %v390
      %v1396 = vunpack.c.l.b16 %v391
      %v1397 = vunpack.c.h.b16 %v391
      %v1398 = vunpack.c.l.b16 %v392
      %v1399 = vunpack.c.h.b16 %v392
      %v1400 = vunpack.c.l.b16 %v393
      %v1401 = vunpack.c.h.b16 %v393
      %v1402 = vunpack.c.l.b16 %v394
      %v1403 = vunpack.c.h.b16 %v394
      %v1404 = vunpack.c.l.b16 %v395
      %v1405 = vunpack.c.h.b16 %v395
      %v1406 = vunpack.c.l.b16 %v396
      %v1407 = vunpack.c.h.b16 %v396
      %v1408 = vunpack.c.l.b16 %v397
      %v1409 = vunpack.c.h.b16 %v397
      %v1410 = vunpack.c.l.b16 %v398
      %v1411 = vunpack.c.h.b16 %v398
      %v1412 = vunpack.c.l.b16 %v399
      %v1413 = vunpack.c.h.b16 %v399
      %v1414 = vunpack.c.l.b16 %v400
      %v1415 = vunpack.c.h.b16 %v400
      %v1416 = vunpack.c.l.b16 %v401
      %v1417 = vunpack.c.h.b16 %v401
      %v1418 = vunpack.c.l.b16 %v402
      %v1419 = vunpack.c.h.b16 %v402
      %v1420 = vunpack.c.l.b16 %v403
      %v1421 = vunpack.c.h.b16 %v403
      %v1422 = vunpack.c.l.b16 %v404
      %v1423 = vunpack.c.h.b16 %v404
      %v1424 = vunpack.c.l.b16 %v405
      %v1425 = vunpack.c.h.b16 %v405
      %v1426 = vunpack.c.l.b16 %v406
      %v1427 = vunpack.c.h.b16 %v406
      %v1428 = vunpack.c.l.b16 %v407
      %v1429 = vunpack.c.h.b16 %v407
      %v1430 = vunpack.c.l.b16 %v408
      %v1431 = vunpack.c.h.b16 %v408
      %v1432 = vunpack.c.l.b16 %v409
      %v1433 = vunpack.c.h.b16 %v409
      %v1434 = vunpack.c.l.b16 %v410
      %v1435 = vunpack.c.h.b16 %v410
      %v1436 = vunpack.c.l.b16 %v411
      %v1437 = vunpack.c.h.b16 %v411
      %v1438 = vunpack.c.l.b16 %v412
      %v1439 = vunpack.c.h.b16 %v412
      %v1440 = vunpack.c.l.b16 %v413
      %v1441 = vunpack.c.h.b16 %v413
      %v1442 = vunpack.c.l.b16 %v414
      %v1443 = vunpack.c.h.b16 %v414
      %v1444 = vunpack.c.l.b16 %v415
      %v1445 = vunpack.c.h.b16 %v415
      %v1446 = vunpack.c.l.b16 %v416
      %v1447 = vunpack.c.h.b16 %v416
      %v1448 = vunpack.c.l.b16 %v417
      %v1449 = vunpack.c.h.b16 %v417
      %v1450 = vunpack.c.l.b16 %v418
      %v1451 = vunpack.c.h.b16 %v418
      %v1452 = vunpack.c.l.b16 %v419
      %v1453 = vunpack.c.h.b16 %v419
      %v1454 = vunpack.c.l.b16 %v420
      %v1455 = vunpack.c.h.b16 %v420
      %v1456 = vunpack.c.l.b16 %v421
      %v1457 = vunpack.c.h.b16 %v421
      %v1458 = vunpack.c.l.b16 %v422
      %v1459 = vunpack.c.h.b16 %v422
      %v1460 = vunpack.c.l.b16 %v423
      %v1461 = vunpack.c.h.b16 %v423
      %v1462 = vunpack.c.l.b16 %v424
      %v1463 = vunpack.c.h.b16 %v424
      %v1464 = vunpack.c.l.b16 %v425
      %v1465 = vunpack.c.h.b16 %v425
      %v1466 = vunpack.c.l.b16 %v426
      %v1467 = vunpack.c.h.b16 %v426
      %v1468 = vunpack.c.l.b16 %v427
      %v1469 = vunpack.c.h.b16 %v427
      %v1470 = vunpack.c.l.b16 %v428
      %v1471 = vunpack.c.h.b16 %v428
      %v1472 = vunpack.c.l.b16 %v429
      %v1473 = vunpack.c.h.b16 %v429
      %v1474 = vunpack.c.l.b16 %v430
      %v1475 = vunpack.c.h.b16 %v430
      %v1476 = vunpack.c.l.b16 %v431
      %v1477 = vunpack.c.h.b16 %v431
      %v1478 = vunpack.c.l.b16 %v432
      %v1479 = vunpack.c.h.b16 %v432
      %v1480 = vunpack.c.l.b16 %v433
      %v1481 = vunpack.c.h.b16 %v433
      %v1482 = vunpack.c.l.b16 %v434
      %v1483 = vunpack.c.h.b16 %v434
      %v1484 = vunpack.c.l.b16 %v435
      %v1485 = vunpack.c.h.b16 %v435
      %v1486 = vunpack.c.l.b16 %v436
      %v1487 = vunpack.c.h.b16 %v436
      %v1488 = vunpack.c.l.b16 %v437
      %v1489 = vunpack.c.h.b16 %v437
      %v1490 = vunpack.c.l.b16 %v438
      %v1491 = vunpack.c.h.b16 %v438
      %v1492 = vunpack.c.l.b16 %v439
      %v1493 = vunpack.c.h.b16 %v439
      %v1494 = vunpack.c.l.b16 %v440
      %v1495 = vunpack.c.h.b16 %v440
      %v1496 = vunpack.c.l.b16 %v441
      %v1497 = vunpack.c.h.b16 %v441
      %v1498 = vunpack.c.l.b16 %v442
      %v1499 = vunpack.c.h.b16 %v442
      %v1500 = vunpack.c.l.b16 %v443
      %v1501 = vunpack.c.h.b16 %v443
      %v1502 = vunpack.c.l.b16 %v444
      %v1503 = vunpack.c.h.b16 %v444
      %v1504 = vunpack.c.l.b16 %v445
      %v1505 = vunpack.c.h.b16 %v445
      %v1506 = vunpack.c.l.b16 %v446
      %v1507 = vunpack.c.h.b16 %v446
      %v1508 = vunpack.c.l.b16 %v447
      %v1509 = vunpack.c.h.b16 %v447
      %v1510 = vunpack.c.l.b16 %v448
      %v1511 = vunpack.c.h.b16 %v448
      %v1512 = vunpack.c.l.b16 %v449
      %v1513 = vunpack.c.h.b16 %v449
      %v1514 = vunpack.c.l.b16 %v450
      %v1515 = vunpack.c.h.b16 %v450
      %v1516 = vunpack.c.l.b16 %v451
      %v1517 = vunpack.c.h.b16 %v451
      %v1518 = vunpack.c.l.b16 %v452
      %v1519 = vunpack.c.h.b16 %v452
      %v1520 = vunpack.c.l.b16 %v453
      %v1521 = vunpack.c.h.b16 %v453
      %v1522 = vunpack.c.l.b16 %v454
      %v1523 = vunpack.c.h.b16 %v454
      %v1524 = vunpack.c.l.b16 %v455
      %v1525 = vunpack.c.h.b16 %v455
      %v1526 = vunpack.c.l.b16 %v456
      %v1527 = vunpack.c.h.b16 %v456
      %v1528 = vunpack.c.l.b16 %v457
      %v1529 = vunpack.c.h.b16 %v457
      %v1530 = vunpack.c.l.b16 %v458
      %v1531 = vunpack.c.h.b16 %v458
      %v1532 = vunpack.c.l.b16 %v459
      %v1533 = vunpack.c.h.b16 %v459
      %v1534 = vunpack.c.l.b16 %v460
      %v1535 = vunpack.c.h.b16 %v460
      %v1536 = vunpack.c.l.b16 %v461
      %v1537 = vunpack.c.h.b16 %v461
      %v1538 = vunpack.c.l.b16 %v462
      %v1539 = vunpack.c.h.b16 %v462
      %v1540 = vunpack.c.l.b16 %v463
      %v1541 = vunpack.c.h.b16 %v463
      %v1542 = vunpack.c.l.b16 %v464
      %v1543 = vunpack.c.h.b16 %v464
      %v1544 = vunpack.c.l.b16 %v465
      %v1545 = vunpack.c.h.b16 %v465
      %v1546 = vunpack.c.l.b16 %v466
      %v1547 = vunpack.c.h.b16 %v466
      %v1548 = vunpack.c.l.b16 %v467
      %v1549 = vunpack.c.h.b16 %v467
      %v1550 = vunpack.c.l.b16 %v468
      %v1551 = vunpack.c.h.b16 %v468
      %v1552 = vunpack.c.l.b16 %v469
      %v1553 = vunpack.c.h.b16 %v469
      %v1554 = vunpack.c.l.b16 %v470
      %v1555 = vunpack.c.h.b16 %v470
      %v1556 = vunpack.c.l.b16 %v471
      %v1557 = vunpack.c.h.b16 %v471
      %v1558 = vunpack.c.l.b16 %v472
      %v1559 = vunpack.c.h.b16 %v472
      %v1560 = vunpack.c.l.b16 %v473
      %v1561 = vunpack.c.h.b16 %v473
      %v1562 = vunpack.c.l.b16 %v474
      %v1563 = vunpack.c.h.b16 %v474
      %v1564 = vunpack.c.l.b16 %v475
      %v1565 = vunpack.c.h.b16 %v475
      %v1566 = vunpack.c.l.b16 %v476
      %v1567 = vunpack.c.h.b16 %v476
      %v1568 = vunpack.c.l.b16 %v477
      %v1569 = vunpack.c.h.b16 %v477
      %v1570 = vunpack.c.l.b16 %v478
      %v1571 = vunpack.c.h.b16 %v478
      %v1572 = vunpack.c.l.b16 %v479
      %v1573 = vunpack.c.h.b16 %v479
      %v1574 = vunpack.c.l.b16 %v480
      %v1575 = vunpack.c.h.b16 %v480
      %v1576 = vunpack.c.l.b16 %v481
      %v1577 = vunpack.c.h.b16 %v481
      %v1578 = vunpack.c.l.b16 %v482
      %v1579 = vunpack.c.h.b16 %v482
      %v1580 = vunpack.c.l.b16 %v483
      %v1581 = vunpack.c.h.b16 %v483
      %v1582 = vunpack.c.l.b16 %v484
      %v1583 = vunpack.c.h.b16 %v484
      %v1584 = vunpack.c.l.b16 %v485
      %v1585 = vunpack.c.h.b16 %v485
      %v1586 = vunpack.c.l.b16 %v486
      %v1587 = vunpack.c.h.b16 %v486
      %v1588 = vunpack.c.l.b16 %v487
      %v1589 = vunpack.c.h.b16 %v487
      %v1590 = vunpack.c.l.b16 %v488
      %v1591 = vunpack.c.h.b16 %v488
      %v1592 = vunpack.c.l.b16 %v489
      %v1593 = vunpack.c.h.b16 %v489
      %v1594 = vunpack.c.l.b16 %v490
      %v1595 = vunpack.c.h.b16 %v490
      %v1596 = vunpack.c.l.b16 %v491
      %v1597 = vunpack.c.h.b16 %v491
      %v1598 = vunpack.c.l.b16 %v492
      %v1599 = vunpack.c.h.b16 %v492
      %v1600 = vunpack.c.l.b16 %v493
      %v1601 = vunpack.c.h.b16 %v493
      %v1602 = vunpack.c.l.b16 %v494
      %v1603 = vunpack.c.h.b16 %v494
      %v1604 = vunpack.c.l.b16 %v495
      %v1605 = vunpack.c.h.b16 %v495
      %v1606 = vunpack.c.l.b16 %v496
      %v1607 = vunpack.c.h.b16 %v496
      %v1608 = vunpack.c.l.b16 %v497
      %v1609 = vunpack.c.h.b16 %v497
      %v1610 = vunpack.c.l.b16 %v498
      %v1611 = vunpack.c.h.b16 %v498
      %v1612 = vunpack.c.l.b16 %v499
      %v1613 = vunpack.c.h.b16 %v499
      %v1614 = vunpack.c.l.b16 %v500
      %v1615 = vunpack.c.h.b16 %v500
      %v1616 = vunpack.c.l.b16 %v501
      %v1617 = vunpack.c.h.b16 %v501
      %v1618 = vunpack.c.l.b16 %v502
      %v1619 = vunpack.c.h.b16 %v502
      %v1620 = vunpack.c.l.b16 %v503
      %v1621 = vunpack.c.h.b16 %v503
      %v1622 = vunpack.c.l.b16 %v504
      %v1623 = vunpack.c.h.b16 %v504
      %v1624 = vunpack.c.l.b16 %v505
      %v1625 = vunpack.c.h.b16 %v505
      %v1626 = vunpack.c.l.b16 %v506
      %v1627 = vunpack.c.h.b16 %v506
      %v1628 = vunpack.c.l.b16 %v507
      %v1629 = vunpack.c.h.b16 %v507
      %v1630 = vunpack.c.l.b16 %v508
      %v1631 = vunpack.c.h.b16 %v508
      %v1632 = vunpack.c.l.b16 %v509
      %v1633 = vunpack.c.h.b16 %v509
      %v1634 = vunpack.c.l.b16 %v510
      %v1635 = vunpack.c.h.b16 %v510
      %v1636 = vunpack.c.l.b16 %v511
      %v1637 = vunpack.c.h.b16 %v511
      %v1638 = vunpack.c.l.b16 %v512
      %v1639 = vunpack.c.h.b16 %v512
      %v1640 = vunpack.c.l.b16 %v513
      %v1641 = vunpack.c.h.b16 %v513
      %v1642 = vunpack.c.l.b16 %v514
      %v1643 = vunpack.c.h.b16 %v514
      %v1644 = vunpack.c.l.b16 %v515
      %v1645 = vunpack.c.h.b16 %v515
      %v1646 = vunpack.c.l.b16 %v516
      %v1647 = vunpack.c.h.b16 %v516
      %v1648 = vunpack.c.l.b16 %v517
      %v1649 = vunpack.c.h.b16 %v517
      %v1650 = vunpack.c.l.b16 %v518
      %v1651 = vunpack.c.h.b16 %v518
      %v1652 = vunpack.c.l.b16 %v519
      %v1653 = vunpack.c.h.b16 %v519
      %v1654 = vunpack.c.l.b16 %v520
      %v1655 = vunpack.c.h.b16 %v520
      %v1656 = vunpack.c.l.b16 %v521
      %v1657 = vunpack.c.h.b16 %v521
      %v1658 = vunpack.c.l.b16 %v522
      %v1659 = vunpack.c.h.b16 %v522
      %v1660 = vunpack.c.l.b16 %v523
      %v1661 = vunpack.c.h.b16 %v523
      %v1662 = vunpack.c.l.b16 %v524
      %v1663 = vunpack.c.h.b16 %v524
      %v1664 = vunpack.c.l.b16 %v525
      %v1665 = vunpack.c.h.b16 %v525
      %v1666 = vunpack.c.l.b16 %v526
      %v1667 = vunpack.c.h.b16 %v526
      %v1668 = vunpack.c.l.b16 %v527
      %v1669 = vunpack.c.h.b16 %v527
      %v1670 = vunpack.c.l.b16 %v528
      %v1671 = vunpack.c.h.b16 %v528
      %v1672 = vunpack.c.l.b16 %v529
      %v1673 = vunpack.c.h.b16 %v529
      %v1674 = vunpack.c.l.b16 %v530
      %v1675 = vunpack.c.h.b16 %v530
      %v1676 = vunpack.c.l.b16 %v531
      %v1677 = vunpack.c.h.b16 %v531
      %v1678 = vunpack.c.l.b16 %v532
      %v1679 = vunpack.c.h.b16 %v532
      %v1680 = vunpack.c.l.b16 %v533
      %v1681 = vunpack.c.h.b16 %v533
      %v1682 = vunpack.c.l.b16 %v534
      %v1683 = vunpack.c.h.b16 %v534
      %v1684 = vunpack.c.l.b16 %v535
      %v1685 = vunpack.c.h.b16 %v535
      %v1686 = vunpack.c.l.b16 %v536
      %v1687 = vunpack.c.h.b16 %v536
      %v1688 = vunpack.c.l.b16 %v537
      %v1689 = vunpack.c.h.b16 %v537
      %v1690 = vunpack.c.l.b16 %v538
      %v1691 = vunpack.c.h.b16 %v538
      %v1692 = vunpack.c.l.b16 %v539
      %v1693 = vunpack.c.h.b16 %v539
      %v1694 = vunpack.c.l.b16 %v540
      %v1695 = vunpack.c.h.b16 %v540
      %v1696 = vunpack.c.l.b16 %v541
      %v1697 = vunpack.c.h.b16 %v541
      %v1698 = vunpack.c.l.b16 %v542
      %v1699 = vunpack.c.h.b16 %v542
      %v1700 = vunpack.c.l.b16 %v543
      %v1701 = vunpack.c.h.b16 %v543
      %v1702 = vunpack.c.l.b16 %v544
      %v1703 = vunpack.c.h.b16 %v544
      %v1704 = vunpack.c.l.b16 %v545
      %v1705 = vunpack.c.h.b16 %v545
      %v1706 = vunpack.c.l.b16 %v546
      %v1707 = vunpack.c.h.b16 %v546
      %v1708 = vunpack.c.l.b16 %v547
      %v1709 = vunpack.c.h.b16 %v547
      %v1710 = vunpack.c.l.b16 %v548
      %v1711 = vunpack.c.h.b16 %v548
      %v1712 = vunpack.c.l.b16 %v549
      %v1713 = vunpack.c.h.b16 %v549
      %v1714 = vunpack.c.l.b16 %v550
      %v1715 = vunpack.c.h.b16 %v550
      %v1716 = vunpack.c.l.b16 %v551
      %v1717 = vunpack.c.h.b16 %v551
      %v1718 = vunpack.c.l.b16 %v552
      %v1719 = vunpack.c.h.b16 %v552
      %v1720 = vunpack.c.l.b16 %v553
      %v1721 = vunpack.c.h.b16 %v553
      %v1722 = vunpack.c.l.b16 %v554
      %v1723 = vunpack.c.h.b16 %v554
      %v1724 = vunpack.c.l.b16 %v555
      %v1725 = vunpack.c.h.b16 %v555
      %v1726 = vpack.c.b16 %v1338, %v1334
      %v1727 = vpack.c.b16 %v1339, %v1335
      %v1728 = vpack.c.b16 %v1340, %v1336
      %v1729 = vpack.c.b16 %v1341, %v1337
      %v1730 = vpack.c.b16 %v1346, %v1342
      %v1731 = vpack.c.b16 %v1347, %v1343
      %v1732 = vpack.c.b16 %v1348, %v1344
      %v1733 = vpack.c.b16 %v1349, %v1345
      %v1734 = vpack.c.b16 %v1354, %v1350
      %v1735 = vpack.c.b16 %v1355, %v1351
      %v1736 = vpack.c.b16 %v1356, %v1352
      %v1737 = vpack.c.b16 %v1357, %v1353
      %v1738 = vpack.c.b16 %v1362, %v1358
      %v1739 = vpack.c.b16 %v1363, %v1359
      %v1740 = vpack.c.b16 %v1364, %v1360
      %v1741 = vpack.c.b16 %v1365, %v1361
      %v1742 = vpack.c.b16 %v1370, %v1366
      %v1743 = vpack.c.b16 %v1371, %v1367
      %v1744 = vpack.c.b16 %v1372, %v1368
      %v1745 = vpack.c.b16 %v1373, %v1369
      %v1746 = vpack.c.b16 %v1378, %v1374
      %v1747 = vpack.c.b16 %v1379, %v1375
      %v1748 = vpack.c.b16 %v1380, %v1376
      %v1749 = vpack.c.b16 %v1381, %v1377
      %v1750 = vpack.c.b16 %v1386, %v1382
      %v1751 = vpack.c.b16 %v1387, %v1383
      %v1752 = vpack.c.b16 %v1388, %v1384
      %v1753 = vpack.c.b16 %v1389, %v1385
      %v1754 = vpack.c.b16 %v1394, %v1390
      %v1755 = vpack.c.b16 %v1395, %v1391
      %v1756 = vpack.c.b16 %v1396, %v1392
      %v1757 = vpack.c.b16 %v1397, %v1393
      %v1758 = vpack.c.b16 %v1402, %v1398
      %v1759 = vpack.c.b16 %v1403, %v1399
      %v1760 = vpack.c.b16 %v1404, %v1400
      %v1761 = vpack.c.b16 %v1405, %v1401
      %v1762 = vpack.c.b16 %v1410, %v1406
      %v1763 = vpack.c.b16 %v1411, %v1407
      %v1764 = vpack.c.b16 %v1412, %v1408
      %v1765 = vpack.c.b16 %v1413, %v1409
      %v1766 = vpack.c.b16 %v1418, %v1414
      %v1767 = vpack.c.b16 %v1419, %v1415
      %v1768 = vpack.c.b16 %v1420, %v1416
      %v1769 = vpack.c.b16 %v1421, %v1417
      %v1770 = vpack.c.b16 %v1426, %v1422
      %v1771 = vpack.c.b16 %v1427, %v1423
      %v1772 = vpack.c.b16 %v1428, %v1424
      %v1773 = vpack.c.b16 %v1429, %v1425
      %v1774 = vpack.c.b16 %v1434, %v1430
      %v1775 = vpack.c.b16 %v1435, %v1431
      %v1776 = vpack.c.b16 %v1436, %v1432
      %v1777 = vpack.c.b16 %v1437, %v1433
      %v1778 = vpack.c.b16 %v1442, %v1438
      %v1779 = vpack.c.b16 %v1443, %v1439
      %v1780 = vpack.c.b16 %v1444, %v1440
      %v1781 = vpack.c.b16 %v1445, %v1441
      %v1782 = vpack.c.b16 %v1450, %v1446
      %v1783 = vpack.c.b16 %v1451, %v1447
      %v1784 = vpack.c.b16 %v1452, %v1448
      %v1785 = vpack.c.b16 %v1453, %v1449
      %v1786 = vpack.c.b16 %v1458, %v1454
      %v1787 = vpack.c.b16 %v1459, %v1455
      %v1788 = vpack.c.b16 %v1460, %v1456
      %v1789 = vpack.c.b16 %v1461, %v1457
      %v1790 = vpack.c.b16 %v1466, %v1462
      %v1791 = vpack.c.b16 %v1467, %v1463
      %v1792 = vpack.c.b16 %v1468, %v1464
      %v1793 = vpack.c.b16 %v1469, %v1465
      %v1794 = vpack.c.b16 %v1474, %v1470
      %v1795 = vpack.c.b16 %v1475, %v1471
      %v1796 = vpack.c.b16 %v1476, %v1472
      %v1797 = vpack.c.b16 %v1477, %v1473
      %v1798 = vpack.c.b16 %v1482, %v1478
      %v1799 = vpack.c.b16 %v1483, %v1479
      %v1800 = vpack.c.b16 %v1484, %v1480
      %v1801 = vpack.c.b16 %v1485, %v1481
      %v1802 = vpack.c.b16 %v1490, %v1486
      %v1803 = vpack.c.b16 %v1491, %v1487
      %v1804 = vpack.c.b16 %v1492, %v1488
      %v1805 = vpack.c.b16 %v1493, %v1489
      %v1806 = vpack.c.b16 %v1498, %v1494
      %v1807 = vpack.c.b16 %v1499, %v1495
      %v1808 = vpack.c.b16 %v1500, %v1496
      %v1809 = vpack.c.b16 %v1501, %v1497
      %v1810 = vpack.c.b16 %v1506, %v1502
      %v1811 = vpack.c.b16 %v1507, %v1503
      %v1812 = vpack.c.b16 %v1508, %v1504
      %v1813 = vpack.c.b16 %v1509, %v1505
      %v1814 = vpack.c.b16 %v1514, %v1510
      %v1815 = vpack.c.b16 %v1515, %v1511
      %v1816 = vpack.c.b16 %v1516, %v1512
      %v1817 = vpack.c.b16 %v1517, %v1513
      %v1818 = vpack.c.b16 %v1522, %v1518
      %v1819 = vpack.c.b16 %v1523, %v1519
      %v1820 = vpack.c.b16 %v1524, %v1520
      %v1821 = vpack.c.b16 %v1525, %v1521
      %v1822 = vpack.c.b16 %v1530, %v1526
      %v1823 = vpack.c.b16 %v1531, %v1527
      %v1824 = vpack.c.b16 %v1532, %v1528
      %v1825 = vpack.c.b16 %v1533, %v1529
      %v1826 = vpack.c.b16 %v1538, %v1534
      %v1827 = vpack.c.b16 %v1539, %v1535
      %v1828 = vpack.c.b16 %v1540, %v1536
      %v1829 = vpack.c.b16 %v1541, %v1537
      %v1830 = vpack.c.b16 %v1546, %v1542
      %v1831 = vpack.c.b16 %v1547, %v1543
      %v1832 = vpack.c.b16 %v1548, %v1544
      %v1833 = vpack.c.b16 %v1549, %v1545
      %v1834 = vpack.c.b16 %v1554, %v1550
      %v1835 = vpack.c.b16 %v1555, %v1551
      %v1836 = vpack.c.b16 %v1556, %v1552
      %v1837 = vpack.c.b16 %v1557, %v1553
      %v1838 = vpack.c.b16 %v1562, %v1558
      %v1839 = vpack.c.b16 %v1563, %v1559
      %v1840 = vpack.c.b16 %v1564, %v1560
      %v1841 = vpack.c.b16 %v1565, %v1561
      %v1842 = vpack.c.b16 %v1570, %v1566
      %v1843 = vpack.c.b16 %v1571, %v1567
      %v1844 = vpack.c.b16 %v1572, %v1568
      %v1845 = vpack.c.b16 %v1573, %v1569
      %v1846 = vpack.c.b16 %v1578, %v1574
      %v1847 = vpack.c.b16 %v1579, %v1575
      %v1848 = vpack.c.b16 %v1580, %v1576
      %v1849 = vpack.c.b16 %v1581, %v1577
      %v1850 = vpack.c.b16 %v1586, %v1582
      %v1851 = vpack.c.b16 %v1587, %v1583
      %v1852 = vpack.c.b16 %v1588, %v1584
      %v1853 = vpack.c.b16 %v1589, %v1585
      %v1854 = vpack.c.b16 %v1594, %v1590
      %v1855 = vpack.c.b16 %v1595, %v1591
      %v1856 = vpack.c.b16 %v1596, %v1592
      %v1857 = vpack.c.b16 %v1597, %v1593
      %v1858 = vpack.c.b16 %v1602, %v1598
      %v1859 = vpack.c.b16 %v1603, %v1599
      %v1860 = vpack.c.b16 %v1604, %v1600
      %v1861 = vpack.c.b16 %v1605, %v1601
      %v1862 = vpack.c.b16 %v1610, %v1606
      %v1863 = vpack.c.b16 %v1611, %v1607
      %v1864 = vpack.c.b16 %v1612, %v1608
      %v1865 = vpack.c.b16 %v1613, %v1609
      %v1866 = vpack.c.b16 %v1618, %v1614
      %v1867 = vpack.c.b16 %v1619, %v1615
      %v1868 = vpack.c.b16 %v1620, %v1616
      %v1869 = vpack.c.b16 %v1621, %v1617
      %v1870 = vpack.c.b16 %v1626, %v1622
      %v1871 = vpack.c.b16 %v1627, %v1623
      %v1872 = vpack.c.b16 %v1628, %v1624
      %v1873 = vpack.c.b16 %v1629, %v1625
      %v1874 = vpack.c.b16 %v1634, %v1630
      %v1875 = vpack.c.b16 %v1635, %v1631
      %v1876 = vpack.c.b16 %v1636, %v1632
      %v1877 = vpack.c.b16 %v1637, %v1633
      %v1878 = vpack.c.b16 %v1642, %v1638
      %v1879 = vpack.c.b16 %v1643, %v1639
      %v1880 = vpack.c.b16 %v1644, %v1640
      %v1881 = vpack.c.b16 %v1645, %v1641
      %v1882 = vpack.c.b16 %v1650, %v1646
      %v1883 = vpack.c.b16 %v1651, %v1647
      %v1884 = vpack.c.b16 %v1652, %v1648
      %v1885 = vpack.c.b16 %v1653, %v1649
      %v1886 = vpack.c.b16 %v1658, %v1654
      %v1887 = vpack.c.b16 %v1659, %v1655
      %v1888 = vpack.c.b16 %v1660, %v1656
      %v1889 = vpack.c.b16 %v1661, %v1657
      %v1890 = vpack.c.b16 %v1666, %v1662
      %v1891 = vpack.c.b16 %v1667, %v1663
      %v1892 = vpack.c.b16 %v1668, %v1664
      %v1893 = vpack.c.b16 %v1669, %v1665
      %v1894 = vpack.c.b16 %v1674, %v1670
      %v1895 = vpack.c.b16 %v1675, %v1671
      %v1896 = vpack.c.b16 %v1676, %v1672
      %v1897 = vpack.c.b16 %v1677, %v1673
      %v1898 = vpack.c.b16 %v1682, %v1678
      %v1899 = vpack.c.b16 %v1683, %v1679
      %v1900 = vpack.c.b16 %v1684, %v1680
      %v1901 = vpack.c.b16 %v1685, %v1681
      %v1902 = vpack.c.b16 %v1690, %v1686
      %v1903 = vpack.c.b16 %v1691, %v1687
      %v1904 = vpack.c.b16 %v1692, %v1688
      %v1905 = vpack.c.b16 %v1693, %v1689
      %v1906 = vpack.c.b16 %v1698, %v1694
      %v1907 = vpack.c.b16 %v1699, %v1695
      %v1908 = vpack.c.b16 %v1700, %v1696
      %v1909 = vpack.c.b16 %v1701, %v1697
      %v1910 = vpack.c.b16 %v1706, %v1702
      %v1911 = vpack.c.b16 %v1707, %v1703
      %v1912 = vpack.c.b16 %v1708, %v1704
      %v1913 = vpack.c.b16 %v1709, %v1705
      %v1914 = vpack.c.b16 %v1714, %v1710
      %v1915 = vpack.c.b16 %v1715, %v1711
      %v1916 = vpack.c.b16 %v1716, %v1712
      %v1917 = vpack.c.b16 %v1717, %v1713
      %v1918 = vpack.c.b16 %v1722, %v1718
      %v1919 = vpack.c.b16 %v1723, %v1719
      %v1920 = vpack.c.b16 %v1724, %v1720
      %v1921 = vpack.c.b16 %v1725, %v1721
      %vm2118 = vcmask 130048
      %v2120 = vsel %vm2118, %v936, 0
      %v2123 = vsel %vm2118, %v943, 0
      %v2126 = vsel %vm2118, %v950, 0
      %v2129 = vsel %vm2118, %v957, 0
      %v2132 = vsel %vm2118, %v964, 0
      %v2135 = vsel %vm2118, %v971, 0
      %v2138 = vsel %vm2118, %v978, 0
      %v2141 = vsel %vm2118, %v985, 0
      %v2144 = vsel %vm2118, %v992, 0
      %v2147 = vsel %vm2118, %v999, 0
      %v2150 = vsel %vm2118, %v1006, 0
      %v2153 = vsel %vm2118, %v1013, 0
      %v2156 = vsel %vm2118, %v1020, 0
      %v2159 = vsel %vm2118, %v1027, 0
      %v2162 = vsel %vm2118, %v1034, 0
      %v2165 = vsel %vm2118, %v1041, 0
      %2167 = vmatprep.subr.bf16.mxu0 %v1755
      %2168 = vmatpush1.bf16.msra.mxu0 %v1754
      %2169 = vmatprep.subr.bf16.mxu0 %v1751
      %2170 = vmatpush1.bf16.msra.mxu0 %v1750
      %2171 = vmatprep.subr.bf16.mxu0 %v1747
      %2172 = vmatpush1.bf16.msra.mxu0 %v1746
      %2173 = vmatprep.subr.bf16.mxu0 %v1743
      %2174 = vmatpush1.bf16.msra.mxu0 %v1742
      %2175 = vmatprep.subr.bf16.mxu0 %v1739
      %2176 = vmatpush1.bf16.msra.mxu0 %v1738
      %2177 = vmatprep.subr.bf16.mxu0 %v1735
      %2178 = vmatpush1.bf16.msra.mxu0 %v1734
      %2179 = vmatprep.subr.bf16.mxu0 %v1731
      %2180 = vmatpush1.bf16.msra.mxu0 %v1730
      %2181 = vmatprep.subr.bf16.mxu0 %v1727
      %2182 = vmatpush1.bf16.msra.mxu0 %v1726
      %2183 = vmatprep.subr.bf16.mxu0 %v1787
      %2184 = vmatpush2.bf16.msra.mxu0 %v1786
      %2185 = vmatprep.subr.bf16.mxu0 %v1783
      %2186 = vmatpush2.bf16.msra.mxu0 %v1782
      %2187 = vmatprep.subr.bf16.mxu0 %v1779
      %2188 = vmatpush2.bf16.msra.mxu0 %v1778
      %2189 = vmatprep.subr.bf16.mxu0 %v1775
      %2190 = vmatpush2.bf16.msra.mxu0 %v1774
      %2191 = vmatprep.subr.bf16.mxu0 %v1771
      %2192 = vmatpush2.bf16.msra.mxu0 %v1770
      %2193 = vmatprep.subr.bf16.mxu0 %v1767
      %2194 = vmatpush2.bf16.msra.mxu0 %v1766
      %2195 = vmatprep.subr.bf16.mxu0 %v1763
      %2196 = vmatpush2.bf16.msra.mxu0 %v1762
      %2197 = vmatprep.subr.bf16.mxu0 %v1759
      %2198 = vmatpush2.bf16.msra.mxu0 %v1758
      %2199 = vmatprep.mubr.bf16.mxu0 %v931
      %2200 = vmatmul.mubr.bf16.gmra.mxu0 %v930
      %v2201 = vpop.f32.mrf.mxu0
      %v2202 = vadd.f32 %v561, %v2201
      %v2203 = vpop.f32.mrf.mxu0
      %v2204 = vadd.f32 %v565, %v2203
      %v2205 = vpop.f32.mrf.mxu0
      %v2206 = vadd.f32 %v561, %v2205
      %v2207 = vpop.f32.mrf.mxu0
      %v2208 = vadd.f32 %v565, %v2207
      %2209 = vmatprep.mubr.bf16.mxu0 %v938
      %2210 = vmatmul.mubr.bf16.gmra.mxu0 %v937
      %v2211 = vpop.f32.mrf.mxu0
      %v2212 = vadd.f32 %v561, %v2211
      %v2213 = vpop.f32.mrf.mxu0
      %v2214 = vadd.f32 %v565, %v2213
      %v2215 = vpop.f32.mrf.mxu0
      %v2216 = vadd.f32 %v561, %v2215
      %v2217 = vpop.f32.mrf.mxu0
      %v2218 = vadd.f32 %v565, %v2217
      %2219 = vmatprep.mubr.bf16.mxu0 %v945
      %2220 = vmatmul.mubr.bf16.gmra.mxu0 %v944
      %v2221 = vpop.f32.mrf.mxu0
      %v2222 = vadd.f32 %v561, %v2221
      %v2223 = vpop.f32.mrf.mxu0
      %v2224 = vadd.f32 %v565, %v2223
      %v2225 = vpop.f32.mrf.mxu0
      %v2226 = vadd.f32 %v561, %v2225
      %v2227 = vpop.f32.mrf.mxu0
      %v2228 = vadd.f32 %v565, %v2227
      %2229 = vmatprep.mubr.bf16.mxu0 %v952
      %2230 = vmatmul.mubr.bf16.gmra.mxu0 %v951
      %v2231 = vpop.f32.mrf.mxu0
      %v2232 = vadd.f32 %v561, %v2231
      %v2233 = vpop.f32.mrf.mxu0
      %v2234 = vadd.f32 %v565, %v2233
      %v2235 = vpop.f32.mrf.mxu0
      %v2236 = vadd.f32 %v561, %v2235
      %v2237 = vpop.f32.mrf.mxu0
      %v2238 = vadd.f32 %v565, %v2237
      %2239 = vmatprep.mubr.bf16.mxu0 %v959
      %2240 = vmatmul.mubr.bf16.gmra.mxu0 %v958
      %v2241 = vpop.f32.mrf.mxu0
      %v2242 = vadd.f32 %v561, %v2241
      %v2243 = vpop.f32.mrf.mxu0
      %v2244 = vadd.f32 %v565, %v2243
      %v2245 = vpop.f32.mrf.mxu0
      %v2246 = vadd.f32 %v561, %v2245
      %v2247 = vpop.f32.mrf.mxu0
      %v2248 = vadd.f32 %v565, %v2247
      %2249 = vmatprep.mubr.bf16.mxu0 %v966
      %2250 = vmatmul.mubr.bf16.gmra.mxu0 %v965
      %v2251 = vpop.f32.mrf.mxu0
      %v2252 = vadd.f32 %v561, %v2251
      %v2253 = vpop.f32.mrf.mxu0
      %v2254 = vadd.f32 %v565, %v2253
      %v2255 = vpop.f32.mrf.mxu0
      %v2256 = vadd.f32 %v561, %v2255
      %v2257 = vpop.f32.mrf.mxu0
      %v2258 = vadd.f32 %v565, %v2257
      %2259 = vmatprep.mubr.bf16.mxu0 %v973
      %2260 = vmatmul.mubr.bf16.gmra.mxu0 %v972
      %v2261 = vpop.f32.mrf.mxu0
      %v2262 = vadd.f32 %v561, %v2261
      %v2263 = vpop.f32.mrf.mxu0
      %v2264 = vadd.f32 %v565, %v2263
      %v2265 = vpop.f32.mrf.mxu0
      %v2266 = vadd.f32 %v561, %v2265
      %v2267 = vpop.f32.mrf.mxu0
      %v2268 = vadd.f32 %v565, %v2267
      %2269 = vmatprep.mubr.bf16.mxu0 %v980
      %2270 = vmatmul.mubr.bf16.gmra.mxu0 %v979
      %v2271 = vpop.f32.mrf.mxu0
      %v2272 = vadd.f32 %v561, %v2271
      %v2273 = vpop.f32.mrf.mxu0
      %v2274 = vadd.f32 %v565, %v2273
      %v2275 = vpop.f32.mrf.mxu0
      %v2276 = vadd.f32 %v561, %v2275
      %v2277 = vpop.f32.mrf.mxu0
      %v2278 = vadd.f32 %v565, %v2277
      %2279 = vmatprep.mubr.bf16.mxu0 %v987
      %2280 = vmatmul.mubr.bf16.gmra.mxu0 %v986
      %v2281 = vpop.f32.mrf.mxu0
      %v2282 = vadd.f32 %v561, %v2281
      %v2283 = vpop.f32.mrf.mxu0
      %v2284 = vadd.f32 %v565, %v2283
      %v2285 = vpop.f32.mrf.mxu0
      %v2286 = vadd.f32 %v561, %v2285
      %v2287 = vpop.f32.mrf.mxu0
      %v2288 = vadd.f32 %v565, %v2287
      %2289 = vmatprep.mubr.bf16.mxu0 %v994
      %2290 = vmatmul.mubr.bf16.gmra.mxu0 %v993
      %v2291 = vpop.f32.mrf.mxu0
      %v2292 = vadd.f32 %v561, %v2291
      %v2293 = vpop.f32.mrf.mxu0
      %v2294 = vadd.f32 %v565, %v2293
      %v2295 = vpop.f32.mrf.mxu0
      %v2296 = vadd.f32 %v561, %v2295
      %v2297 = vpop.f32.mrf.mxu0
      %v2298 = vadd.f32 %v565, %v2297
      %2299 = vmatprep.mubr.bf16.mxu0 %v1001
      %2300 = vmatmul.mubr.bf16.gmra.mxu0 %v1000
      %v2301 = vpop.f32.mrf.mxu0
      %v2302 = vadd.f32 %v561, %v2301
      %v2303 = vpop.f32.mrf.mxu0
      %v2304 = vadd.f32 %v565, %v2303
      %v2305 = vpop.f32.mrf.mxu0
      %v2306 = vadd.f32 %v561, %v2305
      %v2307 = vpop.f32.mrf.mxu0
      %v2308 = vadd.f32 %v565, %v2307
      %2309 = vmatprep.mubr.bf16.mxu0 %v1008
      %2310 = vmatmul.mubr.bf16.gmra.mxu0 %v1007
      %v2311 = vpop.f32.mrf.mxu0
      %v2312 = vadd.f32 %v561, %v2311
      %v2313 = vpop.f32.mrf.mxu0
      %v2314 = vadd.f32 %v565, %v2313
      %v2315 = vpop.f32.mrf.mxu0
      %v2316 = vadd.f32 %v561, %v2315
      %v2317 = vpop.f32.mrf.mxu0
      %v2318 = vadd.f32 %v565, %v2317
      %2319 = vmatprep.mubr.bf16.mxu0 %v1015
      %2320 = vmatmul.mubr.bf16.gmra.mxu0 %v1014
      %v2321 = vpop.f32.mrf.mxu0
      %v2322 = vadd.f32 %v561, %v2321
      %v2323 = vpop.f32.mrf.mxu0
      %v2324 = vadd.f32 %v565, %v2323
      %v2325 = vpop.f32.mrf.mxu0
      %v2326 = vadd.f32 %v561, %v2325
      %v2327 = vpop.f32.mrf.mxu0
      %v2328 = vadd.f32 %v565, %v2327
      %2329 = vmatprep.mubr.bf16.mxu0 %v1022
      %2330 = vmatmul.mubr.bf16.gmra.mxu0 %v1021
      %v2331 = vpop.f32.mrf.mxu0
      %v2332 = vadd.f32 %v561, %v2331
      %v2333 = vpop.f32.mrf.mxu0
      %v2334 = vadd.f32 %v565, %v2333
      %v2335 = vpop.f32.mrf.mxu0
      %v2336 = vadd.f32 %v561, %v2335
      %v2337 = vpop.f32.mrf.mxu0
      %v2338 = vadd.f32 %v565, %v2337
      %2339 = vmatprep.mubr.bf16.mxu0 %v1029
      %2340 = vmatmul.mubr.bf16.gmra.mxu0 %v1028
      %v2341 = vpop.f32.mrf.mxu0
      %v2342 = vadd.f32 %v561, %v2341
      %v2343 = vpop.f32.mrf.mxu0
      %v2344 = vadd.f32 %v565, %v2343
      %v2345 = vpop.f32.mrf.mxu0
      %v2346 = vadd.f32 %v561, %v2345
      %v2347 = vpop.f32.mrf.mxu0
      %v2348 = vadd.f32 %v565, %v2347
      %2349 = vmatprep.mubr.bf16.mxu0 %v1036
      %2350 = vmatmul.mubr.bf16.gmra.mxu0 %v1035
      %v2351 = vpop.f32.mrf.mxu0
      %v2352 = vadd.f32 %v561, %v2351
      %v2353 = vpop.f32.mrf.mxu0
      %v2354 = vadd.f32 %v565, %v2353
      %v2355 = vpop.f32.mrf.mxu0
      %v2356 = vadd.f32 %v561, %v2355
      %v2357 = vpop.f32.mrf.mxu0
      %v2358 = vadd.f32 %v565, %v2357
      %2359 = vdwg.mxu0
      %2360 = vmatprep.subr.bf16.mxu0 %v1819
      %2361 = vmatpush1.bf16.msra.mxu0 %v1818
      %2362 = vmatprep.subr.bf16.mxu0 %v1815
      %2363 = vmatpush1.bf16.msra.mxu0 %v1814
      %2364 = vmatprep.subr.bf16.mxu0 %v1811
      %2365 = vmatpush1.bf16.msra.mxu0 %v1810
      %2366 = vmatprep.subr.bf16.mxu0 %v1807
      %2367 = vmatpush1.bf16.msra.mxu0 %v1806
      %2368 = vmatprep.subr.bf16.mxu0 %v1803
      %2369 = vmatpush1.bf16.msra.mxu0 %v1802
      %2370 = vmatprep.subr.bf16.mxu0 %v1799
      %2371 = vmatpush1.bf16.msra.mxu0 %v1798
      %2372 = vmatprep.subr.bf16.mxu0 %v1795
      %2373 = vmatpush1.bf16.msra.mxu0 %v1794
      %2374 = vmatprep.subr.bf16.mxu0 %v1791
      %2375 = vmatpush1.bf16.msra.mxu0 %v1790
      %2376 = vmatprep.subr.bf16.mxu0 %v1851
      %2377 = vmatpush2.bf16.msra.mxu0 %v1850
      %2378 = vmatprep.subr.bf16.mxu0 %v1847
      %2379 = vmatpush2.bf16.msra.mxu0 %v1846
      %2380 = vmatprep.subr.bf16.mxu0 %v1843
      %2381 = vmatpush2.bf16.msra.mxu0 %v1842
      %2382 = vmatprep.subr.bf16.mxu0 %v1839
      %2383 = vmatpush2.bf16.msra.mxu0 %v1838
      %2384 = vmatprep.subr.bf16.mxu0 %v1835
      %2385 = vmatpush2.bf16.msra.mxu0 %v1834
      %2386 = vmatprep.subr.bf16.mxu0 %v1831
      %2387 = vmatpush2.bf16.msra.mxu0 %v1830
      %2388 = vmatprep.subr.bf16.mxu0 %v1827
      %2389 = vmatpush2.bf16.msra.mxu0 %v1826
      %2390 = vmatprep.subr.bf16.mxu0 %v1823
      %2391 = vmatpush2.bf16.msra.mxu0 %v1822
      %2392 = vmatprep.mubr.bf16.mxu0 %v933
      %2393 = vmatmul.mubr.bf16.gmra.mxu0 %v932
      %v2394 = vpop.f32.mrf.mxu0
      %v2395 = vadd.f32 %v2202, %v2394
      %v2396 = vpop.f32.mrf.mxu0
      %v2397 = vadd.f32 %v2204, %v2396
      %v2398 = vpop.f32.mrf.mxu0
      %v2399 = vadd.f32 %v2206, %v2398
      %v2400 = vpop.f32.mrf.mxu0
      %v2401 = vadd.f32 %v2208, %v2400
      %2402 = vmatprep.mubr.bf16.mxu0 %v940
      %2403 = vmatmul.mubr.bf16.gmra.mxu0 %v939
      %v2404 = vpop.f32.mrf.mxu0
      %v2405 = vadd.f32 %v2212, %v2404
      %v2406 = vpop.f32.mrf.mxu0
      %v2407 = vadd.f32 %v2214, %v2406
      %v2408 = vpop.f32.mrf.mxu0
      %v2409 = vadd.f32 %v2216, %v2408
      %v2410 = vpop.f32.mrf.mxu0
      %v2411 = vadd.f32 %v2218, %v2410
      %2412 = vmatprep.mubr.bf16.mxu0 %v947
      %2413 = vmatmul.mubr.bf16.gmra.mxu0 %v946
      %v2414 = vpop.f32.mrf.mxu0
      %v2415 = vadd.f32 %v2222, %v2414
      %v2416 = vpop.f32.mrf.mxu0
      %v2417 = vadd.f32 %v2224, %v2416
      %v2418 = vpop.f32.mrf.mxu0
      %v2419 = vadd.f32 %v2226, %v2418
      %v2420 = vpop.f32.mrf.mxu0
      %v2421 = vadd.f32 %v2228, %v2420
      %2422 = vmatprep.mubr.bf16.mxu0 %v954
      %2423 = vmatmul.mubr.bf16.gmra.mxu0 %v953
      %v2424 = vpop.f32.mrf.mxu0
      %v2425 = vadd.f32 %v2232, %v2424
      %v2426 = vpop.f32.mrf.mxu0
      %v2427 = vadd.f32 %v2234, %v2426
      %v2428 = vpop.f32.mrf.mxu0
      %v2429 = vadd.f32 %v2236, %v2428
      %v2430 = vpop.f32.mrf.mxu0
      %v2431 = vadd.f32 %v2238, %v2430
      %2432 = vmatprep.mubr.bf16.mxu0 %v961
      %2433 = vmatmul.mubr.bf16.gmra.mxu0 %v960
      %v2434 = vpop.f32.mrf.mxu0
      %v2435 = vadd.f32 %v2242, %v2434
      %v2436 = vpop.f32.mrf.mxu0
      %v2437 = vadd.f32 %v2244, %v2436
      %v2438 = vpop.f32.mrf.mxu0
      %v2439 = vadd.f32 %v2246, %v2438
      %v2440 = vpop.f32.mrf.mxu0
      %v2441 = vadd.f32 %v2248, %v2440
      %2442 = vmatprep.mubr.bf16.mxu0 %v968
      %2443 = vmatmul.mubr.bf16.gmra.mxu0 %v967
      %v2444 = vpop.f32.mrf.mxu0
      %v2445 = vadd.f32 %v2252, %v2444
      %v2446 = vpop.f32.mrf.mxu0
      %v2447 = vadd.f32 %v2254, %v2446
      %v2448 = vpop.f32.mrf.mxu0
      %v2449 = vadd.f32 %v2256, %v2448
      %v2450 = vpop.f32.mrf.mxu0
      %v2451 = vadd.f32 %v2258, %v2450
      %2452 = vmatprep.mubr.bf16.mxu0 %v975
      %2453 = vmatmul.mubr.bf16.gmra.mxu0 %v974
      %v2454 = vpop.f32.mrf.mxu0
      %v2455 = vadd.f32 %v2262, %v2454
      %v2456 = vpop.f32.mrf.mxu0
      %v2457 = vadd.f32 %v2264, %v2456
      %v2458 = vpop.f32.mrf.mxu0
      %v2459 = vadd.f32 %v2266, %v2458
      %v2460 = vpop.f32.mrf.mxu0
      %v2461 = vadd.f32 %v2268, %v2460
      %2462 = vmatprep.mubr.bf16.mxu0 %v982
      %2463 = vmatmul.mubr.bf16.gmra.mxu0 %v981
      %v2464 = vpop.f32.mrf.mxu0
      %v2465 = vadd.f32 %v2272, %v2464
      %v2466 = vpop.f32.mrf.mxu0
      %v2467 = vadd.f32 %v2274, %v2466
      %v2468 = vpop.f32.mrf.mxu0
      %v2469 = vadd.f32 %v2276, %v2468
      %v2470 = vpop.f32.mrf.mxu0
      %v2471 = vadd.f32 %v2278, %v2470
      %2472 = vmatprep.mubr.bf16.mxu0 %v989
      %2473 = vmatmul.mubr.bf16.gmra.mxu0 %v988
      %v2474 = vpop.f32.mrf.mxu0
      %v2475 = vadd.f32 %v2282, %v2474
      %v2476 = vpop.f32.mrf.mxu0
      %v2477 = vadd.f32 %v2284, %v2476
      %v2478 = vpop.f32.mrf.mxu0
      %v2479 = vadd.f32 %v2286, %v2478
      %v2480 = vpop.f32.mrf.mxu0
      %v2481 = vadd.f32 %v2288, %v2480
      %2482 = vmatprep.mubr.bf16.mxu0 %v996
      %2483 = vmatmul.mubr.bf16.gmra.mxu0 %v995
      %v2484 = vpop.f32.mrf.mxu0
      %v2485 = vadd.f32 %v2292, %v2484
      %v2486 = vpop.f32.mrf.mxu0
      %v2487 = vadd.f32 %v2294, %v2486
      %v2488 = vpop.f32.mrf.mxu0
      %v2489 = vadd.f32 %v2296, %v2488
      %v2490 = vpop.f32.mrf.mxu0
      %v2491 = vadd.f32 %v2298, %v2490
      %2492 = vmatprep.mubr.bf16.mxu0 %v1003
      %2493 = vmatmul.mubr.bf16.gmra.mxu0 %v1002
      %v2494 = vpop.f32.mrf.mxu0
      %v2495 = vadd.f32 %v2302, %v2494
      %v2496 = vpop.f32.mrf.mxu0
      %v2497 = vadd.f32 %v2304, %v2496
      %v2498 = vpop.f32.mrf.mxu0
      %v2499 = vadd.f32 %v2306, %v2498
      %v2500 = vpop.f32.mrf.mxu0
      %v2501 = vadd.f32 %v2308, %v2500
      %2502 = vmatprep.mubr.bf16.mxu0 %v1010
      %2503 = vmatmul.mubr.bf16.gmra.mxu0 %v1009
      %v2504 = vpop.f32.mrf.mxu0
      %v2505 = vadd.f32 %v2312, %v2504
      %v2506 = vpop.f32.mrf.mxu0
      %v2507 = vadd.f32 %v2314, %v2506
      %v2508 = vpop.f32.mrf.mxu0
      %v2509 = vadd.f32 %v2316, %v2508
      %v2510 = vpop.f32.mrf.mxu0
      %v2511 = vadd.f32 %v2318, %v2510
      %2512 = vmatprep.mubr.bf16.mxu0 %v1017
      %2513 = vmatmul.mubr.bf16.gmra.mxu0 %v1016
      %v2514 = vpop.f32.mrf.mxu0
      %v2515 = vadd.f32 %v2322, %v2514
      %v2516 = vpop.f32.mrf.mxu0
      %v2517 = vadd.f32 %v2324, %v2516
      %v2518 = vpop.f32.mrf.mxu0
      %v2519 = vadd.f32 %v2326, %v2518
      %v2520 = vpop.f32.mrf.mxu0
      %v2521 = vadd.f32 %v2328, %v2520
      %2522 = vmatprep.mubr.bf16.mxu0 %v1024
      %2523 = vmatmul.mubr.bf16.gmra.mxu0 %v1023
      %v2524 = vpop.f32.mrf.mxu0
      %v2525 = vadd.f32 %v2332, %v2524
      %v2526 = vpop.f32.mrf.mxu0
      %v2527 = vadd.f32 %v2334, %v2526
      %v2528 = vpop.f32.mrf.mxu0
      %v2529 = vadd.f32 %v2336, %v2528
      %v2530 = vpop.f32.mrf.mxu0
      %v2531 = vadd.f32 %v2338, %v2530
      %2532 = vmatprep.mubr.bf16.mxu0 %v1031
      %2533 = vmatmul.mubr.bf16.gmra.mxu0 %v1030
      %v2534 = vpop.f32.mrf.mxu0
      %v2535 = vadd.f32 %v2342, %v2534
      %v2536 = vpop.f32.mrf.mxu0
      %v2537 = vadd.f32 %v2344, %v2536
      %v2538 = vpop.f32.mrf.mxu0
      %v2539 = vadd.f32 %v2346, %v2538
      %v2540 = vpop.f32.mrf.mxu0
      %v2541 = vadd.f32 %v2348, %v2540
      %2542 = vmatprep.mubr.bf16.mxu0 %v1038
      %2543 = vmatmul.mubr.bf16.gmra.mxu0 %v1037
      %v2544 = vpop.f32.mrf.mxu0
      %v2545 = vadd.f32 %v2352, %v2544
      %v2546 = vpop.f32.mrf.mxu0
      %v2547 = vadd.f32 %v2354, %v2546
      %v2548 = vpop.f32.mrf.mxu0
      %v2549 = vadd.f32 %v2356, %v2548
      %v2550 = vpop.f32.mrf.mxu0
      %v2551 = vadd.f32 %v2358, %v2550
      %2552 = vdwg.mxu0
      %2553 = vmatprep.subr.bf16.mxu0 %v1883
      %2554 = vmatpush1.bf16.msra.mxu0 %v1882
      %2555 = vmatprep.subr.bf16.mxu0 %v1879
      %2556 = vmatpush1.bf16.msra.mxu0 %v1878
      %2557 = vmatprep.subr.bf16.mxu0 %v1875
      %2558 = vmatpush1.bf16.msra.mxu0 %v1874
      %2559 = vmatprep.subr.bf16.mxu0 %v1871
      %2560 = vmatpush1.bf16.msra.mxu0 %v1870
      %2561 = vmatprep.subr.bf16.mxu0 %v1867
      %2562 = vmatpush1.bf16.msra.mxu0 %v1866
      %2563 = vmatprep.subr.bf16.mxu0 %v1863
      %2564 = vmatpush1.bf16.msra.mxu0 %v1862
      %2565 = vmatprep.subr.bf16.mxu0 %v1859
      %2566 = vmatpush1.bf16.msra.mxu0 %v1858
      %2567 = vmatprep.subr.bf16.mxu0 %v1855
      %2568 = vmatpush1.bf16.msra.mxu0 %v1854
      %2569 = vmatprep.subr.bf16.mxu0 %v1915
      %2570 = vmatpush2.bf16.msra.mxu0 %v1914
      %2571 = vmatprep.subr.bf16.mxu0 %v1911
      %2572 = vmatpush2.bf16.msra.mxu0 %v1910
      %2573 = vmatprep.subr.bf16.mxu0 %v1907
      %2574 = vmatpush2.bf16.msra.mxu0 %v1906
      %2575 = vmatprep.subr.bf16.mxu0 %v1903
      %2576 = vmatpush2.bf16.msra.mxu0 %v1902
      %2577 = vmatprep.subr.bf16.mxu0 %v1899
      %2578 = vmatpush2.bf16.msra.mxu0 %v1898
      %2579 = vmatprep.subr.bf16.mxu0 %v1895
      %2580 = vmatpush2.bf16.msra.mxu0 %v1894
      %2581 = vmatprep.subr.bf16.mxu0 %v1891
      %2582 = vmatpush2.bf16.msra.mxu0 %v1890
      %2583 = vmatprep.subr.bf16.mxu0 %v1887
      %2584 = vmatpush2.bf16.msra.mxu0 %v1886
      %2585 = vmatprep.mubr.bf16.mxu0 %v935
      %2586 = vmatmul.mubr.bf16.gmra.mxu0 %v934
      %v2587 = vpop.f32.mrf.mxu0
      %v2588 = vadd.f32 %v2395, %v2587
      %v2589 = vpop.f32.mrf.mxu0
      %v2590 = vadd.f32 %v2397, %v2589
      %v2591 = vpop.f32.mrf.mxu0
      %v2592 = vadd.f32 %v2399, %v2591
      %v2593 = vpop.f32.mrf.mxu0
      %v2594 = vadd.f32 %v2401, %v2593
      %2595 = vmatprep.mubr.bf16.mxu0 %v942
      %2596 = vmatmul.mubr.bf16.gmra.mxu0 %v941
      %v2597 = vpop.f32.mrf.mxu0
      %v2598 = vadd.f32 %v2405, %v2597
      %v2599 = vpop.f32.mrf.mxu0
      %v2600 = vadd.f32 %v2407, %v2599
      %v2601 = vpop.f32.mrf.mxu0
      %v2602 = vadd.f32 %v2409, %v2601
      %v2603 = vpop.f32.mrf.mxu0
      %v2604 = vadd.f32 %v2411, %v2603
      %2605 = vmatprep.mubr.bf16.mxu0 %v949
      %2606 = vmatmul.mubr.bf16.gmra.mxu0 %v948
      %v2607 = vpop.f32.mrf.mxu0
      %v2608 = vadd.f32 %v2415, %v2607
      %v2609 = vpop.f32.mrf.mxu0
      %v2610 = vadd.f32 %v2417, %v2609
      %v2611 = vpop.f32.mrf.mxu0
      %v2612 = vadd.f32 %v2419, %v2611
      %v2613 = vpop.f32.mrf.mxu0
      %v2614 = vadd.f32 %v2421, %v2613
      %2615 = vmatprep.mubr.bf16.mxu0 %v956
      %2616 = vmatmul.mubr.bf16.gmra.mxu0 %v955
      %v2617 = vpop.f32.mrf.mxu0
      %v2618 = vadd.f32 %v2425, %v2617
      %v2619 = vpop.f32.mrf.mxu0
      %v2620 = vadd.f32 %v2427, %v2619
      %v2621 = vpop.f32.mrf.mxu0
      %v2622 = vadd.f32 %v2429, %v2621
      %v2623 = vpop.f32.mrf.mxu0
      %v2624 = vadd.f32 %v2431, %v2623
      %2625 = vmatprep.mubr.bf16.mxu0 %v963
      %2626 = vmatmul.mubr.bf16.gmra.mxu0 %v962
      %v2627 = vpop.f32.mrf.mxu0
      %v2628 = vadd.f32 %v2435, %v2627
      %v2629 = vpop.f32.mrf.mxu0
      %v2630 = vadd.f32 %v2437, %v2629
      %v2631 = vpop.f32.mrf.mxu0
      %v2632 = vadd.f32 %v2439, %v2631
      %v2633 = vpop.f32.mrf.mxu0
      %v2634 = vadd.f32 %v2441, %v2633
      %2635 = vmatprep.mubr.bf16.mxu0 %v970
      %2636 = vmatmul.mubr.bf16.gmra.mxu0 %v969
      %v2637 = vpop.f32.mrf.mxu0
      %v2638 = vadd.f32 %v2445, %v2637
      %v2639 = vpop.f32.mrf.mxu0
      %v2640 = vadd.f32 %v2447, %v2639
      %v2641 = vpop.f32.mrf.mxu0
      %v2642 = vadd.f32 %v2449, %v2641
      %v2643 = vpop.f32.mrf.mxu0
      %v2644 = vadd.f32 %v2451, %v2643
      %2645 = vmatprep.mubr.bf16.mxu0 %v977
      %2646 = vmatmul.mubr.bf16.gmra.mxu0 %v976
      %v2647 = vpop.f32.mrf.mxu0
      %v2648 = vadd.f32 %v2455, %v2647
      %v2649 = vpop.f32.mrf.mxu0
      %v2650 = vadd.f32 %v2457, %v2649
      %v2651 = vpop.f32.mrf.mxu0
      %v2652 = vadd.f32 %v2459, %v2651
      %v2653 = vpop.f32.mrf.mxu0
      %v2654 = vadd.f32 %v2461, %v2653
      %2655 = vmatprep.mubr.bf16.mxu0 %v984
      %2656 = vmatmul.mubr.bf16.gmra.mxu0 %v983
      %v2657 = vpop.f32.mrf.mxu0
      %v2658 = vadd.f32 %v2465, %v2657
      %v2659 = vpop.f32.mrf.mxu0
      %v2660 = vadd.f32 %v2467, %v2659
      %v2661 = vpop.f32.mrf.mxu0
      %v2662 = vadd.f32 %v2469, %v2661
      %v2663 = vpop.f32.mrf.mxu0
      %v2664 = vadd.f32 %v2471, %v2663
      %2665 = vmatprep.mubr.bf16.mxu0 %v991
      %2666 = vmatmul.mubr.bf16.gmra.mxu0 %v990
      %v2667 = vpop.f32.mrf.mxu0
      %v2668 = vadd.f32 %v2475, %v2667
      %v2669 = vpop.f32.mrf.mxu0
      %v2670 = vadd.f32 %v2477, %v2669
      %v2671 = vpop.f32.mrf.mxu0
      %v2672 = vadd.f32 %v2479, %v2671
      %v2673 = vpop.f32.mrf.mxu0
      %v2674 = vadd.f32 %v2481, %v2673
      %2675 = vmatprep.mubr.bf16.mxu0 %v998
      %2676 = vmatmul.mubr.bf16.gmra.mxu0 %v997
      %v2677 = vpop.f32.mrf.mxu0
      %v2678 = vadd.f32 %v2485, %v2677
      %v2679 = vpop.f32.mrf.mxu0
      %v2680 = vadd.f32 %v2487, %v2679
      %v2681 = vpop.f32.mrf.mxu0
      %v2682 = vadd.f32 %v2489, %v2681
      %v2683 = vpop.f32.mrf.mxu0
      %v2684 = vadd.f32 %v2491, %v2683
      %2685 = vmatprep.mubr.bf16.mxu0 %v1005
      %2686 = vmatmul.mubr.bf16.gmra.mxu0 %v1004
      %v2687 = vpop.f32.mrf.mxu0
      %v2688 = vadd.f32 %v2495, %v2687
      %v2689 = vpop.f32.mrf.mxu0
      %v2690 = vadd.f32 %v2497, %v2689
      %v2691 = vpop.f32.mrf.mxu0
      %v2692 = vadd.f32 %v2499, %v2691
      %v2693 = vpop.f32.mrf.mxu0
      %v2694 = vadd.f32 %v2501, %v2693
      %2695 = vmatprep.mubr.bf16.mxu0 %v1012
      %2696 = vmatmul.mubr.bf16.gmra.mxu0 %v1011
      %v2697 = vpop.f32.mrf.mxu0
      %v2698 = vadd.f32 %v2505, %v2697
      %v2699 = vpop.f32.mrf.mxu0
      %v2700 = vadd.f32 %v2507, %v2699
      %v2701 = vpop.f32.mrf.mxu0
      %v2702 = vadd.f32 %v2509, %v2701
      %v2703 = vpop.f32.mrf.mxu0
      %v2704 = vadd.f32 %v2511, %v2703
      %2705 = vmatprep.mubr.bf16.mxu0 %v1019
      %2706 = vmatmul.mubr.bf16.gmra.mxu0 %v1018
      %v2707 = vpop.f32.mrf.mxu0
      %v2708 = vadd.f32 %v2515, %v2707
      %v2709 = vpop.f32.mrf.mxu0
      %v2710 = vadd.f32 %v2517, %v2709
      %v2711 = vpop.f32.mrf.mxu0
      %v2712 = vadd.f32 %v2519, %v2711
      %v2713 = vpop.f32.mrf.mxu0
      %v2714 = vadd.f32 %v2521, %v2713
      %2715 = vmatprep.mubr.bf16.mxu0 %v1026
      %2716 = vmatmul.mubr.bf16.gmra.mxu0 %v1025
      %v2717 = vpop.f32.mrf.mxu0
      %v2718 = vadd.f32 %v2525, %v2717
      %v2719 = vpop.f32.mrf.mxu0
      %v2720 = vadd.f32 %v2527, %v2719
      %v2721 = vpop.f32.mrf.mxu0
      %v2722 = vadd.f32 %v2529, %v2721
      %v2723 = vpop.f32.mrf.mxu0
      %v2724 = vadd.f32 %v2531, %v2723
      %2725 = vmatprep.mubr.bf16.mxu0 %v1033
      %2726 = vmatmul.mubr.bf16.gmra.mxu0 %v1032
      %v2727 = vpop.f32.mrf.mxu0
      %v2728 = vadd.f32 %v2535, %v2727
      %v2729 = vpop.f32.mrf.mxu0
      %v2730 = vadd.f32 %v2537, %v2729
      %v2731 = vpop.f32.mrf.mxu0
      %v2732 = vadd.f32 %v2539, %v2731
      %v2733 = vpop.f32.mrf.mxu0
      %v2734 = vadd.f32 %v2541, %v2733
      %2735 = vmatprep.mubr.bf16.mxu0 %v1040
      %2736 = vmatmul.mubr.bf16.gmra.mxu0 %v1039
      %v2737 = vpop.f32.mrf.mxu0
      %v2738 = vadd.f32 %v2545, %v2737
      %v2739 = vpop.f32.mrf.mxu0
      %v2740 = vadd.f32 %v2547, %v2739
      %v2741 = vpop.f32.mrf.mxu0
      %v2742 = vadd.f32 %v2549, %v2741
      %v2743 = vpop.f32.mrf.mxu0
      %v2744 = vadd.f32 %v2551, %v2743
      %2745 = vdwg.mxu0
      %2746 = vmatprep.subr.bf16.mxu0 0
      %2747 = vmatpush1.bf16.msra.mxu0 0
      %2748 = vmatprep.subr.bf16.mxu0 0
      %2749 = vmatpush1.bf16.msra.mxu0 0
      %2750 = vmatprep.subr.bf16.mxu0 0
      %2751 = vmatpush1.bf16.msra.mxu0 0
      %2752 = vmatprep.subr.bf16.mxu0 0
      %2753 = vmatpush1.bf16.msra.mxu0 0
      %2754 = vmatprep.subr.bf16.mxu0 0
      %2755 = vmatpush1.bf16.msra.mxu0 0
      %2756 = vmatprep.subr.bf16.mxu0 0
      %2757 = vmatpush1.bf16.msra.mxu0 0
      %2758 = vmatprep.subr.bf16.mxu0 0
      %2759 = vmatpush1.bf16.msra.mxu0 0
      %2760 = vmatprep.subr.bf16.mxu0 %v1919
      %2761 = vmatpush1.bf16.msra.mxu0 %v1918
      %2762 = vmatprep.subr.bf16.mxu0 0
      %2763 = vmatpush2.bf16.msra.mxu0 0
      %2764 = vmatprep.subr.bf16.mxu0 0
      %2765 = vmatpush2.bf16.msra.mxu0 0
      %2766 = vmatprep.subr.bf16.mxu0 0
      %2767 = vmatpush2.bf16.msra.mxu0 0
      %2768 = vmatprep.subr.bf16.mxu0 0
      %2769 = vmatpush2.bf16.msra.mxu0 0
      %2770 = vmatprep.subr.bf16.mxu0 0
      %2771 = vmatpush2.bf16.msra.mxu0 0
      %2772 = vmatprep.subr.bf16.mxu0 0
      %2773 = vmatpush2.bf16.msra.mxu0 0
      %2774 = vmatprep.subr.bf16.mxu0 0
      %2775 = vmatpush2.bf16.msra.mxu0 0
      %2776 = vmatprep.subr.bf16.mxu0 0
      %2777 = vmatpush2.bf16.msra.mxu0 0
      %2778 = vmatprep.mubr.bf16.mxu0 0
      %2779 = vmatmul.mubr.bf16.gmra.mxu0 %v2120
      %v2780 = vpop.f32.mrf.mxu0
      %v2781 = vadd.f32 %v2588, %v2780
      %v2782 = vpop.f32.mrf.mxu0
      %v2783 = vadd.f32 %v2590, %v2782
      %v2784 = vpop.f32.mrf.mxu0
      %v2785 = vadd.f32 %v2592, %v2784
      %v2786 = vpop.f32.mrf.mxu0
      %v2787 = vadd.f32 %v2594, %v2786
      %2788 = vmatprep.mubr.bf16.mxu0 0
      %2789 = vmatmul.mubr.bf16.gmra.mxu0 %v2123
      %v2790 = vpop.f32.mrf.mxu0
      %v2791 = vadd.f32 %v2598, %v2790
      %v2792 = vpop.f32.mrf.mxu0
      %v2793 = vadd.f32 %v2600, %v2792
      %v2794 = vpop.f32.mrf.mxu0
      %v2795 = vadd.f32 %v2602, %v2794
      %v2796 = vpop.f32.mrf.mxu0
      %v2797 = vadd.f32 %v2604, %v2796
      %2798 = vmatprep.mubr.bf16.mxu0 0
      %2799 = vmatmul.mubr.bf16.gmra.mxu0 %v2126
      %v2800 = vpop.f32.mrf.mxu0
      %v2801 = vadd.f32 %v2608, %v2800
      %v2802 = vpop.f32.mrf.mxu0
      %v2803 = vadd.f32 %v2610, %v2802
      %v2804 = vpop.f32.mrf.mxu0
      %v2805 = vadd.f32 %v2612, %v2804
      %v2806 = vpop.f32.mrf.mxu0
      %v2807 = vadd.f32 %v2614, %v2806
      %2808 = vmatprep.mubr.bf16.mxu0 0
      %2809 = vmatmul.mubr.bf16.gmra.mxu0 %v2129
      %v2810 = vpop.f32.mrf.mxu0
      %v2811 = vadd.f32 %v2618, %v2810
      %v2812 = vpop.f32.mrf.mxu0
      %v2813 = vadd.f32 %v2620, %v2812
      %v2814 = vpop.f32.mrf.mxu0
      %v2815 = vadd.f32 %v2622, %v2814
      %v2816 = vpop.f32.mrf.mxu0
      %v2817 = vadd.f32 %v2624, %v2816
      %2818 = vmatprep.mubr.bf16.mxu0 0
      %2819 = vmatmul.mubr.bf16.gmra.mxu0 %v2132
      %v2820 = vpop.f32.mrf.mxu0
      %v2821 = vadd.f32 %v2628, %v2820
      %v2822 = vpop.f32.mrf.mxu0
      %v2823 = vadd.f32 %v2630, %v2822
      %v2824 = vpop.f32.mrf.mxu0
      %v2825 = vadd.f32 %v2632, %v2824
      %v2826 = vpop.f32.mrf.mxu0
      %v2827 = vadd.f32 %v2634, %v2826
      %2828 = vmatprep.mubr.bf16.mxu0 0
      %2829 = vmatmul.mubr.bf16.gmra.mxu0 %v2135
      %v2830 = vpop.f32.mrf.mxu0
      %v2831 = vadd.f32 %v2638, %v2830
      %v2832 = vpop.f32.mrf.mxu0
      %v2833 = vadd.f32 %v2640, %v2832
      %v2834 = vpop.f32.mrf.mxu0
      %v2835 = vadd.f32 %v2642, %v2834
      %v2836 = vpop.f32.mrf.mxu0
      %v2837 = vadd.f32 %v2644, %v2836
      %2838 = vmatprep.mubr.bf16.mxu0 0
      %2839 = vmatmul.mubr.bf16.gmra.mxu0 %v2138
      %v2840 = vpop.f32.mrf.mxu0
      %v2841 = vadd.f32 %v2648, %v2840
      %v2842 = vpop.f32.mrf.mxu0
      %v2843 = vadd.f32 %v2650, %v2842
      %v2844 = vpop.f32.mrf.mxu0
      %v2845 = vadd.f32 %v2652, %v2844
      %v2846 = vpop.f32.mrf.mxu0
      %v2847 = vadd.f32 %v2654, %v2846
      %2848 = vmatprep.mubr.bf16.mxu0 0
      %2849 = vmatmul.mubr.bf16.gmra.mxu0 %v2141
      %v2850 = vpop.f32.mrf.mxu0
      %v2851 = vadd.f32 %v2658, %v2850
      %v2852 = vpop.f32.mrf.mxu0
      %v2853 = vadd.f32 %v2660, %v2852
      %v2854 = vpop.f32.mrf.mxu0
      %v2855 = vadd.f32 %v2662, %v2854
      %v2856 = vpop.f32.mrf.mxu0
      %v2857 = vadd.f32 %v2664, %v2856
      %2858 = vmatprep.mubr.bf16.mxu0 0
      %2859 = vmatmul.mubr.bf16.gmra.mxu0 %v2144
      %v2860 = vpop.f32.mrf.mxu0
      %v2861 = vadd.f32 %v2668, %v2860
      %v2862 = vpop.f32.mrf.mxu0
      %v2863 = vadd.f32 %v2670, %v2862
      %v2864 = vpop.f32.mrf.mxu0
      %v2865 = vadd.f32 %v2672, %v2864
      %v2866 = vpop.f32.mrf.mxu0
      %v2867 = vadd.f32 %v2674, %v2866
      %2868 = vmatprep.mubr.bf16.mxu0 0
      %2869 = vmatmul.mubr.bf16.gmra.mxu0 %v2147
      %v2870 = vpop.f32.mrf.mxu0
      %v2871 = vadd.f32 %v2678, %v2870
      %v2872 = vpop.f32.mrf.mxu0
      %v2873 = vadd.f32 %v2680, %v2872
      %v2874 = vpop.f32.mrf.mxu0
      %v2875 = vadd.f32 %v2682, %v2874
      %v2876 = vpop.f32.mrf.mxu0
      %v2877 = vadd.f32 %v2684, %v2876
      %2878 = vmatprep.mubr.bf16.mxu0 0
      %2879 = vmatmul.mubr.bf16.gmra.mxu0 %v2150
      %v2880 = vpop.f32.mrf.mxu0
      %v2881 = vadd.f32 %v2688, %v2880
      %v2882 = vpop.f32.mrf.mxu0
      %v2883 = vadd.f32 %v2690, %v2882
      %v2884 = vpop.f32.mrf.mxu0
      %v2885 = vadd.f32 %v2692, %v2884
      %v2886 = vpop.f32.mrf.mxu0
      %v2887 = vadd.f32 %v2694, %v2886
      %2888 = vmatprep.mubr.bf16.mxu0 0
      %2889 = vmatmul.mubr.bf16.gmra.mxu0 %v2153
      %v2890 = vpop.f32.mrf.mxu0
      %v2891 = vadd.f32 %v2698, %v2890
      %v2892 = vpop.f32.mrf.mxu0
      %v2893 = vadd.f32 %v2700, %v2892
      %v2894 = vpop.f32.mrf.mxu0
      %v2895 = vadd.f32 %v2702, %v2894
      %v2896 = vpop.f32.mrf.mxu0
      %v2897 = vadd.f32 %v2704, %v2896
      %2898 = vmatprep.mubr.bf16.mxu0 0
      %2899 = vmatmul.mubr.bf16.gmra.mxu0 %v2156
      %v2900 = vpop.f32.mrf.mxu0
      %v2901 = vadd.f32 %v2708, %v2900
      %v2902 = vpop.f32.mrf.mxu0
      %v2903 = vadd.f32 %v2710, %v2902
      %v2904 = vpop.f32.mrf.mxu0
      %v2905 = vadd.f32 %v2712, %v2904
      %v2906 = vpop.f32.mrf.mxu0
      %v2907 = vadd.f32 %v2714, %v2906
      %2908 = vmatprep.mubr.bf16.mxu0 0
      %2909 = vmatmul.mubr.bf16.gmra.mxu0 %v2159
      %v2910 = vpop.f32.mrf.mxu0
      %v2911 = vadd.f32 %v2718, %v2910
      %v2912 = vpop.f32.mrf.mxu0
      %v2913 = vadd.f32 %v2720, %v2912
      %v2914 = vpop.f32.mrf.mxu0
      %v2915 = vadd.f32 %v2722, %v2914
      %v2916 = vpop.f32.mrf.mxu0
      %v2917 = vadd.f32 %v2724, %v2916
      %2918 = vmatprep.mubr.bf16.mxu0 0
      %2919 = vmatmul.mubr.bf16.gmra.mxu0 %v2162
      %v2920 = vpop.f32.mrf.mxu0
      %v2921 = vadd.f32 %v2728, %v2920
      %v2922 = vpop.f32.mrf.mxu0
      %v2923 = vadd.f32 %v2730, %v2922
      %v2924 = vpop.f32.mrf.mxu0
      %v2925 = vadd.f32 %v2732, %v2924
      %v2926 = vpop.f32.mrf.mxu0
      %v2927 = vadd.f32 %v2734, %v2926
      %2928 = vmatprep.mubr.bf16.mxu0 0
      %2929 = vmatmul.mubr.bf16.gmra.mxu0 %v2165
      %v2930 = vpop.f32.mrf.mxu0
      %v2931 = vadd.f32 %v2738, %v2930
      %v2932 = vpop.f32.mrf.mxu0
      %v2933 = vadd.f32 %v2740, %v2932
      %v2934 = vpop.f32.mrf.mxu0
      %v2935 = vadd.f32 %v2742, %v2934
      %v2936 = vpop.f32.mrf.mxu0
      %v2937 = vadd.f32 %v2744, %v2936
      %2938 = vdwg.mxu0
      %2939 = vmatprep.subr.bf16.mxu0 %v1757
      %2940 = vmatpush1.bf16.msra.mxu0 %v1756
      %2941 = vmatprep.subr.bf16.mxu0 %v1753
      %2942 = vmatpush1.bf16.msra.mxu0 %v1752
      %2943 = vmatprep.subr.bf16.mxu0 %v1749
      %2944 = vmatpush1.bf16.msra.mxu0 %v1748
      %2945 = vmatprep.subr.bf16.mxu0 %v1745
      %2946 = vmatpush1.bf16.msra.mxu0 %v1744
      %2947 = vmatprep.subr.bf16.mxu0 %v1741
      %2948 = vmatpush1.bf16.msra.mxu0 %v1740
      %2949 = vmatprep.subr.bf16.mxu0 %v1737
      %2950 = vmatpush1.bf16.msra.mxu0 %v1736
      %2951 = vmatprep.subr.bf16.mxu0 %v1733
      %2952 = vmatpush1.bf16.msra.mxu0 %v1732
      %2953 = vmatprep.subr.bf16.mxu0 %v1729
      %2954 = vmatpush1.bf16.msra.mxu0 %v1728
      %2955 = vmatprep.subr.bf16.mxu0 %v1789
      %2956 = vmatpush2.bf16.msra.mxu0 %v1788
      %2957 = vmatprep.subr.bf16.mxu0 %v1785
      %2958 = vmatpush2.bf16.msra.mxu0 %v1784
      %2959 = vmatprep.subr.bf16.mxu0 %v1781
      %2960 = vmatpush2.bf16.msra.mxu0 %v1780
      %2961 = vmatprep.subr.bf16.mxu0 %v1777
      %2962 = vmatpush2.bf16.msra.mxu0 %v1776
      %2963 = vmatprep.subr.bf16.mxu0 %v1773
      %2964 = vmatpush2.bf16.msra.mxu0 %v1772
      %2965 = vmatprep.subr.bf16.mxu0 %v1769
      %2966 = vmatpush2.bf16.msra.mxu0 %v1768
      %2967 = vmatprep.subr.bf16.mxu0 %v1765
      %2968 = vmatpush2.bf16.msra.mxu0 %v1764
      %2969 = vmatprep.subr.bf16.mxu0 %v1761
      %2970 = vmatpush2.bf16.msra.mxu0 %v1760
      %2971 = vmatprep.mubr.bf16.mxu0 %v931
      %2972 = vmatmul.mubr.bf16.gmra.mxu0 %v930
      %v2973 = vpop.f32.mrf.mxu0
      %v2974 = vadd.f32 %v569, %v2973
      %v2975 = vpop.f32.mrf.mxu0
      %v2976 = vadd.f32 %v573, %v2975
      %v2977 = vpop.f32.mrf.mxu0
      %v2978 = vadd.f32 %v569, %v2977
      %v2979 = vpop.f32.mrf.mxu0
      %v2980 = vadd.f32 %v573, %v2979
      %2981 = vmatprep.mubr.bf16.mxu0 %v938
      %2982 = vmatmul.mubr.bf16.gmra.mxu0 %v937
      %v2983 = vpop.f32.mrf.mxu0
      %v2984 = vadd.f32 %v569, %v2983
      %v2985 = vpop.f32.mrf.mxu0
      %v2986 = vadd.f32 %v573, %v2985
      %v2987 = vpop.f32.mrf.mxu0
      %v2988 = vadd.f32 %v569, %v2987
      %v2989 = vpop.f32.mrf.mxu0
      %v2990 = vadd.f32 %v573, %v2989
      %2991 = vmatprep.mubr.bf16.mxu0 %v945
      %2992 = vmatmul.mubr.bf16.gmra.mxu0 %v944
      %v2993 = vpop.f32.mrf.mxu0
      %v2994 = vadd.f32 %v569, %v2993
      %v2995 = vpop.f32.mrf.mxu0
      %v2996 = vadd.f32 %v573, %v2995
      %v2997 = vpop.f32.mrf.mxu0
      %v2998 = vadd.f32 %v569, %v2997
      %v2999 = vpop.f32.mrf.mxu0
      %v3000 = vadd.f32 %v573, %v2999
      %3001 = vmatprep.mubr.bf16.mxu0 %v952
      %3002 = vmatmul.mubr.bf16.gmra.mxu0 %v951
      %v3003 = vpop.f32.mrf.mxu0
      %v3004 = vadd.f32 %v569, %v3003
      %v3005 = vpop.f32.mrf.mxu0
      %v3006 = vadd.f32 %v573, %v3005
      %v3007 = vpop.f32.mrf.mxu0
      %v3008 = vadd.f32 %v569, %v3007
      %v3009 = vpop.f32.mrf.mxu0
      %v3010 = vadd.f32 %v573, %v3009
      %3011 = vmatprep.mubr.bf16.mxu0 %v959
      %3012 = vmatmul.mubr.bf16.gmra.mxu0 %v958
      %v3013 = vpop.f32.mrf.mxu0
      %v3014 = vadd.f32 %v569, %v3013
      %v3015 = vpop.f32.mrf.mxu0
      %v3016 = vadd.f32 %v573, %v3015
      %v3017 = vpop.f32.mrf.mxu0
      %v3018 = vadd.f32 %v569, %v3017
      %v3019 = vpop.f32.mrf.mxu0
      %v3020 = vadd.f32 %v573, %v3019
      %3021 = vmatprep.mubr.bf16.mxu0 %v966
      %3022 = vmatmul.mubr.bf16.gmra.mxu0 %v965
      %v3023 = vpop.f32.mrf.mxu0
      %v3024 = vadd.f32 %v569, %v3023
      %v3025 = vpop.f32.mrf.mxu0
      %v3026 = vadd.f32 %v573, %v3025
      %v3027 = vpop.f32.mrf.mxu0
      %v3028 = vadd.f32 %v569, %v3027
      %v3029 = vpop.f32.mrf.mxu0
      %v3030 = vadd.f32 %v573, %v3029
      %3031 = vmatprep.mubr.bf16.mxu0 %v973
      %3032 = vmatmul.mubr.bf16.gmra.mxu0 %v972
      %v3033 = vpop.f32.mrf.mxu0
      %v3034 = vadd.f32 %v569, %v3033
      %v3035 = vpop.f32.mrf.mxu0
      %v3036 = vadd.f32 %v573, %v3035
      %v3037 = vpop.f32.mrf.mxu0
      %v3038 = vadd.f32 %v569, %v3037
      %v3039 = vpop.f32.mrf.mxu0
      %v3040 = vadd.f32 %v573, %v3039
      %3041 = vmatprep.mubr.bf16.mxu0 %v980
      %3042 = vmatmul.mubr.bf16.gmra.mxu0 %v979
      %v3043 = vpop.f32.mrf.mxu0
      %v3044 = vadd.f32 %v569, %v3043
      %v3045 = vpop.f32.mrf.mxu0
      %v3046 = vadd.f32 %v573, %v3045
      %v3047 = vpop.f32.mrf.mxu0
      %v3048 = vadd.f32 %v569, %v3047
      %v3049 = vpop.f32.mrf.mxu0
      %v3050 = vadd.f32 %v573, %v3049
      %3051 = vmatprep.mubr.bf16.mxu0 %v987
      %3052 = vmatmul.mubr.bf16.gmra.mxu0 %v986
      %v3053 = vpop.f32.mrf.mxu0
      %v3054 = vadd.f32 %v569, %v3053
      %v3055 = vpop.f32.mrf.mxu0
      %v3056 = vadd.f32 %v573, %v3055
      %v3057 = vpop.f32.mrf.mxu0
      %v3058 = vadd.f32 %v569, %v3057
      %v3059 = vpop.f32.mrf.mxu0
      %v3060 = vadd.f32 %v573, %v3059
      %3061 = vmatprep.mubr.bf16.mxu0 %v994
      %3062 = vmatmul.mubr.bf16.gmra.mxu0 %v993
      %v3063 = vpop.f32.mrf.mxu0
      %v3064 = vadd.f32 %v569, %v3063
      %v3065 = vpop.f32.mrf.mxu0
      %v3066 = vadd.f32 %v573, %v3065
      %v3067 = vpop.f32.mrf.mxu0
      %v3068 = vadd.f32 %v569, %v3067
      %v3069 = vpop.f32.mrf.mxu0
      %v3070 = vadd.f32 %v573, %v3069
      %3071 = vmatprep.mubr.bf16.mxu0 %v1001
      %3072 = vmatmul.mubr.bf16.gmra.mxu0 %v1000
      %v3073 = vpop.f32.mrf.mxu0
      %v3074 = vadd.f32 %v569, %v3073
      %v3075 = vpop.f32.mrf.mxu0
      %v3076 = vadd.f32 %v573, %v3075
      %v3077 = vpop.f32.mrf.mxu0
      %v3078 = vadd.f32 %v569, %v3077
      %v3079 = vpop.f32.mrf.mxu0
      %v3080 = vadd.f32 %v573, %v3079
      %3081 = vmatprep.mubr.bf16.mxu0 %v1008
      %3082 = vmatmul.mubr.bf16.gmra.mxu0 %v1007
      %v3083 = vpop.f32.mrf.mxu0
      %v3084 = vadd.f32 %v569, %v3083
      %v3085 = vpop.f32.mrf.mxu0
      %v3086 = vadd.f32 %v573, %v3085
      %v3087 = vpop.f32.mrf.mxu0
      %v3088 = vadd.f32 %v569, %v3087
      %v3089 = vpop.f32.mrf.mxu0
      %v3090 = vadd.f32 %v573, %v3089
      %3091 = vmatprep.mubr.bf16.mxu0 %v1015
      %3092 = vmatmul.mubr.bf16.gmra.mxu0 %v1014
      %v3093 = vpop.f32.mrf.mxu0
      %v3094 = vadd.f32 %v569, %v3093
      %v3095 = vpop.f32.mrf.mxu0
      %v3096 = vadd.f32 %v573, %v3095
      %v3097 = vpop.f32.mrf.mxu0
      %v3098 = vadd.f32 %v569, %v3097
      %v3099 = vpop.f32.mrf.mxu0
      %v3100 = vadd.f32 %v573, %v3099
      %3101 = vmatprep.mubr.bf16.mxu0 %v1022
      %3102 = vmatmul.mubr.bf16.gmra.mxu0 %v1021
      %v3103 = vpop.f32.mrf.mxu0
      %v3104 = vadd.f32 %v569, %v3103
      %v3105 = vpop.f32.mrf.mxu0
      %v3106 = vadd.f32 %v573, %v3105
      %v3107 = vpop.f32.mrf.mxu0
      %v3108 = vadd.f32 %v569, %v3107
      %v3109 = vpop.f32.mrf.mxu0
      %v3110 = vadd.f32 %v573, %v3109
      %3111 = vmatprep.mubr.bf16.mxu0 %v1029
      %3112 = vmatmul.mubr.bf16.gmra.mxu0 %v1028
      %v3113 = vpop.f32.mrf.mxu0
      %v3114 = vadd.f32 %v569, %v3113
      %v3115 = vpop.f32.mrf.mxu0
      %v3116 = vadd.f32 %v573, %v3115
      %v3117 = vpop.f32.mrf.mxu0
      %v3118 = vadd.f32 %v569, %v3117
      %v3119 = vpop.f32.mrf.mxu0
      %v3120 = vadd.f32 %v573, %v3119
      %3121 = vmatprep.mubr.bf16.mxu0 %v1036
      %3122 = vmatmul.mubr.bf16.gmra.mxu0 %v1035
      %v3123 = vpop.f32.mrf.mxu0
      %v3124 = vadd.f32 %v569, %v3123
      %v3125 = vpop.f32.mrf.mxu0
      %v3126 = vadd.f32 %v573, %v3125
      %v3127 = vpop.f32.mrf.mxu0
      %v3128 = vadd.f32 %v569, %v3127
      %v3129 = vpop.f32.mrf.mxu0
      %v3130 = vadd.f32 %v573, %v3129
      %3131 = vdwg.mxu0
      %3132 = vmatprep.subr.bf16.mxu0 %v1821
      %3133 = vmatpush1.bf16.msra.mxu0 %v1820
      %3134 = vmatprep.subr.bf16.mxu0 %v1817
      %3135 = vmatpush1.bf16.msra.mxu0 %v1816
      %3136 = vmatprep.subr.bf16.mxu0 %v1813
      %3137 = vmatpush1.bf16.msra.mxu0 %v1812
      %3138 = vmatprep.subr.bf16.mxu0 %v1809
      %3139 = vmatpush1.bf16.msra.mxu0 %v1808
      %3140 = vmatprep.subr.bf16.mxu0 %v1805
      %3141 = vmatpush1.bf16.msra.mxu0 %v1804
      %3142 = vmatprep.subr.bf16.mxu0 %v1801
      %3143 = vmatpush1.bf16.msra.mxu0 %v1800
      %3144 = vmatprep.subr.bf16.mxu0 %v1797
      %3145 = vmatpush1.bf16.msra.mxu0 %v1796
      %3146 = vmatprep.subr.bf16.mxu0 %v1793
      %3147 = vmatpush1.bf16.msra.mxu0 %v1792
      %3148 = vmatprep.subr.bf16.mxu0 %v1853
      %3149 = vmatpush2.bf16.msra.mxu0 %v1852
      %3150 = vmatprep.subr.bf16.mxu0 %v1849
      %3151 = vmatpush2.bf16.msra.mxu0 %v1848
      %3152 = vmatprep.subr.bf16.mxu0 %v1845
      %3153 = vmatpush2.bf16.msra.mxu0 %v1844
      %3154 = vmatprep.subr.bf16.mxu0 %v1841
      %3155 = vmatpush2.bf16.msra.mxu0 %v1840
      %3156 = vmatprep.subr.bf16.mxu0 %v1837
      %3157 = vmatpush2.bf16.msra.mxu0 %v1836
      %3158 = vmatprep.subr.bf16.mxu0 %v1833
      %3159 = vmatpush2.bf16.msra.mxu0 %v1832
      %3160 = vmatprep.subr.bf16.mxu0 %v1829
      %3161 = vmatpush2.bf16.msra.mxu0 %v1828
      %3162 = vmatprep.subr.bf16.mxu0 %v1825
      %3163 = vmatpush2.bf16.msra.mxu0 %v1824
      %3164 = vmatprep.mubr.bf16.mxu0 %v933
      %3165 = vmatmul.mubr.bf16.gmra.mxu0 %v932
      %v3166 = vpop.f32.mrf.mxu0
      %v3167 = vadd.f32 %v2974, %v3166
      %v3168 = vpop.f32.mrf.mxu0
      %v3169 = vadd.f32 %v2976, %v3168
      %v3170 = vpop.f32.mrf.mxu0
      %v3171 = vadd.f32 %v2978, %v3170
      %v3172 = vpop.f32.mrf.mxu0
      %v3173 = vadd.f32 %v2980, %v3172
      %3174 = vmatprep.mubr.bf16.mxu0 %v940
      %3175 = vmatmul.mubr.bf16.gmra.mxu0 %v939
      %v3176 = vpop.f32.mrf.mxu0
      %v3177 = vadd.f32 %v2984, %v3176
      %v3178 = vpop.f32.mrf.mxu0
      %v3179 = vadd.f32 %v2986, %v3178
      %v3180 = vpop.f32.mrf.mxu0
      %v3181 = vadd.f32 %v2988, %v3180
      %v3182 = vpop.f32.mrf.mxu0
      %v3183 = vadd.f32 %v2990, %v3182
      %3184 = vmatprep.mubr.bf16.mxu0 %v947
      %3185 = vmatmul.mubr.bf16.gmra.mxu0 %v946
      %v3186 = vpop.f32.mrf.mxu0
      %v3187 = vadd.f32 %v2994, %v3186
      %v3188 = vpop.f32.mrf.mxu0
      %v3189 = vadd.f32 %v2996, %v3188
      %v3190 = vpop.f32.mrf.mxu0
      %v3191 = vadd.f32 %v2998, %v3190
      %v3192 = vpop.f32.mrf.mxu0
      %v3193 = vadd.f32 %v3000, %v3192
      %3194 = vmatprep.mubr.bf16.mxu0 %v954
      %3195 = vmatmul.mubr.bf16.gmra.mxu0 %v953
      %v3196 = vpop.f32.mrf.mxu0
      %v3197 = vadd.f32 %v3004, %v3196
      %v3198 = vpop.f32.mrf.mxu0
      %v3199 = vadd.f32 %v3006, %v3198
      %v3200 = vpop.f32.mrf.mxu0
      %v3201 = vadd.f32 %v3008, %v3200
      %v3202 = vpop.f32.mrf.mxu0
      %v3203 = vadd.f32 %v3010, %v3202
      %3204 = vmatprep.mubr.bf16.mxu0 %v961
      %3205 = vmatmul.mubr.bf16.gmra.mxu0 %v960
      %v3206 = vpop.f32.mrf.mxu0
      %v3207 = vadd.f32 %v3014, %v3206
      %v3208 = vpop.f32.mrf.mxu0
      %v3209 = vadd.f32 %v3016, %v3208
      %v3210 = vpop.f32.mrf.mxu0
      %v3211 = vadd.f32 %v3018, %v3210
      %v3212 = vpop.f32.mrf.mxu0
      %v3213 = vadd.f32 %v3020, %v3212
      %3214 = vmatprep.mubr.bf16.mxu0 %v968
      %3215 = vmatmul.mubr.bf16.gmra.mxu0 %v967
      %v3216 = vpop.f32.mrf.mxu0
      %v3217 = vadd.f32 %v3024, %v3216
      %v3218 = vpop.f32.mrf.mxu0
      %v3219 = vadd.f32 %v3026, %v3218
      %v3220 = vpop.f32.mrf.mxu0
      %v3221 = vadd.f32 %v3028, %v3220
      %v3222 = vpop.f32.mrf.mxu0
      %v3223 = vadd.f32 %v3030, %v3222
      %3224 = vmatprep.mubr.bf16.mxu0 %v975
      %3225 = vmatmul.mubr.bf16.gmra.mxu0 %v974
      %v3226 = vpop.f32.mrf.mxu0
      %v3227 = vadd.f32 %v3034, %v3226
      %v3228 = vpop.f32.mrf.mxu0
      %v3229 = vadd.f32 %v3036, %v3228
      %v3230 = vpop.f32.mrf.mxu0
      %v3231 = vadd.f32 %v3038, %v3230
      %v3232 = vpop.f32.mrf.mxu0
      %v3233 = vadd.f32 %v3040, %v3232
      %3234 = vmatprep.mubr.bf16.mxu0 %v982
      %3235 = vmatmul.mubr.bf16.gmra.mxu0 %v981
      %v3236 = vpop.f32.mrf.mxu0
      %v3237 = vadd.f32 %v3044, %v3236
      %v3238 = vpop.f32.mrf.mxu0
      %v3239 = vadd.f32 %v3046, %v3238
      %v3240 = vpop.f32.mrf.mxu0
      %v3241 = vadd.f32 %v3048, %v3240
      %v3242 = vpop.f32.mrf.mxu0
      %v3243 = vadd.f32 %v3050, %v3242
      %3244 = vmatprep.mubr.bf16.mxu0 %v989
      %3245 = vmatmul.mubr.bf16.gmra.mxu0 %v988
      %v3246 = vpop.f32.mrf.mxu0
      %v3247 = vadd.f32 %v3054, %v3246
      %v3248 = vpop.f32.mrf.mxu0
      %v3249 = vadd.f32 %v3056, %v3248
      %v3250 = vpop.f32.mrf.mxu0
      %v3251 = vadd.f32 %v3058, %v3250
      %v3252 = vpop.f32.mrf.mxu0
      %v3253 = vadd.f32 %v3060, %v3252
      %3254 = vmatprep.mubr.bf16.mxu0 %v996
      %3255 = vmatmul.mubr.bf16.gmra.mxu0 %v995
      %v3256 = vpop.f32.mrf.mxu0
      %v3257 = vadd.f32 %v3064, %v3256
      %v3258 = vpop.f32.mrf.mxu0
      %v3259 = vadd.f32 %v3066, %v3258
      %v3260 = vpop.f32.mrf.mxu0
      %v3261 = vadd.f32 %v3068, %v3260
      %v3262 = vpop.f32.mrf.mxu0
      %v3263 = vadd.f32 %v3070, %v3262
      %3264 = vmatprep.mubr.bf16.mxu0 %v1003
      %3265 = vmatmul.mubr.bf16.gmra.mxu0 %v1002
      %v3266 = vpop.f32.mrf.mxu0
      %v3267 = vadd.f32 %v3074, %v3266
      %v3268 = vpop.f32.mrf.mxu0
      %v3269 = vadd.f32 %v3076, %v3268
      %v3270 = vpop.f32.mrf.mxu0
      %v3271 = vadd.f32 %v3078, %v3270
      %v3272 = vpop.f32.mrf.mxu0
      %v3273 = vadd.f32 %v3080, %v3272
      %3274 = vmatprep.mubr.bf16.mxu0 %v1010
      %3275 = vmatmul.mubr.bf16.gmra.mxu0 %v1009
      %v3276 = vpop.f32.mrf.mxu0
      %v3277 = vadd.f32 %v3084, %v3276
      %v3278 = vpop.f32.mrf.mxu0
      %v3279 = vadd.f32 %v3086, %v3278
      %v3280 = vpop.f32.mrf.mxu0
      %v3281 = vadd.f32 %v3088, %v3280
      %v3282 = vpop.f32.mrf.mxu0
      %v3283 = vadd.f32 %v3090, %v3282
      %3284 = vmatprep.mubr.bf16.mxu0 %v1017
      %3285 = vmatmul.mubr.bf16.gmra.mxu0 %v1016
      %v3286 = vpop.f32.mrf.mxu0
      %v3287 = vadd.f32 %v3094, %v3286
      %v3288 = vpop.f32.mrf.mxu0
      %v3289 = vadd.f32 %v3096, %v3288
      %v3290 = vpop.f32.mrf.mxu0
      %v3291 = vadd.f32 %v3098, %v3290
      %v3292 = vpop.f32.mrf.mxu0
      %v3293 = vadd.f32 %v3100, %v3292
      %3294 = vmatprep.mubr.bf16.mxu0 %v1024
      %3295 = vmatmul.mubr.bf16.gmra.mxu0 %v1023
      %v3296 = vpop.f32.mrf.mxu0
      %v3297 = vadd.f32 %v3104, %v3296
      %v3298 = vpop.f32.mrf.mxu0
      %v3299 = vadd.f32 %v3106, %v3298
      %v3300 = vpop.f32.mrf.mxu0
      %v3301 = vadd.f32 %v3108, %v3300
      %v3302 = vpop.f32.mrf.mxu0
      %v3303 = vadd.f32 %v3110, %v3302
      %3304 = vmatprep.mubr.bf16.mxu0 %v1031
      %3305 = vmatmul.mubr.bf16.gmra.mxu0 %v1030
      %v3306 = vpop.f32.mrf.mxu0
      %v3307 = vadd.f32 %v3114, %v3306
      %v3308 = vpop.f32.mrf.mxu0
      %v3309 = vadd.f32 %v3116, %v3308
      %v3310 = vpop.f32.mrf.mxu0
      %v3311 = vadd.f32 %v3118, %v3310
      %v3312 = vpop.f32.mrf.mxu0
      %v3313 = vadd.f32 %v3120, %v3312
      %3314 = vmatprep.mubr.bf16.mxu0 %v1038
      %3315 = vmatmul.mubr.bf16.gmra.mxu0 %v1037
      %v3316 = vpop.f32.mrf.mxu0
      %v3317 = vadd.f32 %v3124, %v3316
      %v3318 = vpop.f32.mrf.mxu0
      %v3319 = vadd.f32 %v3126, %v3318
      %v3320 = vpop.f32.mrf.mxu0
      %v3321 = vadd.f32 %v3128, %v3320
      %v3322 = vpop.f32.mrf.mxu0
      %v3323 = vadd.f32 %v3130, %v3322
      %3324 = vdwg.mxu0
      %3325 = vmatprep.subr.bf16.mxu0 %v1885
      %3326 = vmatpush1.bf16.msra.mxu0 %v1884
      %3327 = vmatprep.subr.bf16.mxu0 %v1881
      %3328 = vmatpush1.bf16.msra.mxu0 %v1880
      %3329 = vmatprep.subr.bf16.mxu0 %v1877
      %3330 = vmatpush1.bf16.msra.mxu0 %v1876
      %3331 = vmatprep.subr.bf16.mxu0 %v1873
      %3332 = vmatpush1.bf16.msra.mxu0 %v1872
      %3333 = vmatprep.subr.bf16.mxu0 %v1869
      %3334 = vmatpush1.bf16.msra.mxu0 %v1868
      %3335 = vmatprep.subr.bf16.mxu0 %v1865
      %3336 = vmatpush1.bf16.msra.mxu0 %v1864
      %3337 = vmatprep.subr.bf16.mxu0 %v1861
      %3338 = vmatpush1.bf16.msra.mxu0 %v1860
      %3339 = vmatprep.subr.bf16.mxu0 %v1857
      %3340 = vmatpush1.bf16.msra.mxu0 %v1856
      %3341 = vmatprep.subr.bf16.mxu0 %v1917
      %3342 = vmatpush2.bf16.msra.mxu0 %v1916
      %3343 = vmatprep.subr.bf16.mxu0 %v1913
      %3344 = vmatpush2.bf16.msra.mxu0 %v1912
      %3345 = vmatprep.subr.bf16.mxu0 %v1909
      %3346 = vmatpush2.bf16.msra.mxu0 %v1908
      %3347 = vmatprep.subr.bf16.mxu0 %v1905
      %3348 = vmatpush2.bf16.msra.mxu0 %v1904
      %3349 = vmatprep.subr.bf16.mxu0 %v1901
      %3350 = vmatpush2.bf16.msra.mxu0 %v1900
      %3351 = vmatprep.subr.bf16.mxu0 %v1897
      %3352 = vmatpush2.bf16.msra.mxu0 %v1896
      %3353 = vmatprep.subr.bf16.mxu0 %v1893
      %3354 = vmatpush2.bf16.msra.mxu0 %v1892
      %3355 = vmatprep.subr.bf16.mxu0 %v1889
      %3356 = vmatpush2.bf16.msra.mxu0 %v1888
      %3357 = vmatprep.mubr.bf16.mxu0 %v935
      %3358 = vmatmul.mubr.bf16.gmra.mxu0 %v934
      %v3359 = vpop.f32.mrf.mxu0
      %v3360 = vadd.f32 %v3167, %v3359
      %v3361 = vpop.f32.mrf.mxu0
      %v3362 = vadd.f32 %v3169, %v3361
      %v3363 = vpop.f32.mrf.mxu0
      %v3364 = vadd.f32 %v3171, %v3363
      %v3365 = vpop.f32.mrf.mxu0
      %v3366 = vadd.f32 %v3173, %v3365
      %3367 = vmatprep.mubr.bf16.mxu0 %v942
      %3368 = vmatmul.mubr.bf16.gmra.mxu0 %v941
      %v3369 = vpop.f32.mrf.mxu0
      %v3370 = vadd.f32 %v3177, %v3369
      %v3371 = vpop.f32.mrf.mxu0
      %v3372 = vadd.f32 %v3179, %v3371
      %v3373 = vpop.f32.mrf.mxu0
      %v3374 = vadd.f32 %v3181, %v3373
      %v3375 = vpop.f32.mrf.mxu0
      %v3376 = vadd.f32 %v3183, %v3375
      %3377 = vmatprep.mubr.bf16.mxu0 %v949
      %3378 = vmatmul.mubr.bf16.gmra.mxu0 %v948
      %v3379 = vpop.f32.mrf.mxu0
      %v3380 = vadd.f32 %v3187, %v3379
      %v3381 = vpop.f32.mrf.mxu0
      %v3382 = vadd.f32 %v3189, %v3381
      %v3383 = vpop.f32.mrf.mxu0
      %v3384 = vadd.f32 %v3191, %v3383
      %v3385 = vpop.f32.mrf.mxu0
      %v3386 = vadd.f32 %v3193, %v3385
      %3387 = vmatprep.mubr.bf16.mxu0 %v956
      %3388 = vmatmul.mubr.bf16.gmra.mxu0 %v955
      %v3389 = vpop.f32.mrf.mxu0
      %v3390 = vadd.f32 %v3197, %v3389
      %v3391 = vpop.f32.mrf.mxu0
      %v3392 = vadd.f32 %v3199, %v3391
      %v3393 = vpop.f32.mrf.mxu0
      %v3394 = vadd.f32 %v3201, %v3393
      %v3395 = vpop.f32.mrf.mxu0
      %v3396 = vadd.f32 %v3203, %v3395
      %3397 = vmatprep.mubr.bf16.mxu0 %v963
      %3398 = vmatmul.mubr.bf16.gmra.mxu0 %v962
      %v3399 = vpop.f32.mrf.mxu0
      %v3400 = vadd.f32 %v3207, %v3399
      %v3401 = vpop.f32.mrf.mxu0
      %v3402 = vadd.f32 %v3209, %v3401
      %v3403 = vpop.f32.mrf.mxu0
      %v3404 = vadd.f32 %v3211, %v3403
      %v3405 = vpop.f32.mrf.mxu0
      %v3406 = vadd.f32 %v3213, %v3405
      %3407 = vmatprep.mubr.bf16.mxu0 %v970
      %3408 = vmatmul.mubr.bf16.gmra.mxu0 %v969
      %v3409 = vpop.f32.mrf.mxu0
      %v3410 = vadd.f32 %v3217, %v3409
      %v3411 = vpop.f32.mrf.mxu0
      %v3412 = vadd.f32 %v3219, %v3411
      %v3413 = vpop.f32.mrf.mxu0
      %v3414 = vadd.f32 %v3221, %v3413
      %v3415 = vpop.f32.mrf.mxu0
      %v3416 = vadd.f32 %v3223, %v3415
      %3417 = vmatprep.mubr.bf16.mxu0 %v977
      %3418 = vmatmul.mubr.bf16.gmra.mxu0 %v976
      %v3419 = vpop.f32.mrf.mxu0
      %v3420 = vadd.f32 %v3227, %v3419
      %v3421 = vpop.f32.mrf.mxu0
      %v3422 = vadd.f32 %v3229, %v3421
      %v3423 = vpop.f32.mrf.mxu0
      %v3424 = vadd.f32 %v3231, %v3423
      %v3425 = vpop.f32.mrf.mxu0
      %v3426 = vadd.f32 %v3233, %v3425
      %3427 = vmatprep.mubr.bf16.mxu0 %v984
      %3428 = vmatmul.mubr.bf16.gmra.mxu0 %v983
      %v3429 = vpop.f32.mrf.mxu0
      %v3430 = vadd.f32 %v3237, %v3429
      %v3431 = vpop.f32.mrf.mxu0
      %v3432 = vadd.f32 %v3239, %v3431
      %v3433 = vpop.f32.mrf.mxu0
      %v3434 = vadd.f32 %v3241, %v3433
      %v3435 = vpop.f32.mrf.mxu0
      %v3436 = vadd.f32 %v3243, %v3435
      %3437 = vmatprep.mubr.bf16.mxu0 %v991
      %3438 = vmatmul.mubr.bf16.gmra.mxu0 %v990
      %v3439 = vpop.f32.mrf.mxu0
      %v3440 = vadd.f32 %v3247, %v3439
      %v3441 = vpop.f32.mrf.mxu0
      %v3442 = vadd.f32 %v3249, %v3441
      %v3443 = vpop.f32.mrf.mxu0
      %v3444 = vadd.f32 %v3251, %v3443
      %v3445 = vpop.f32.mrf.mxu0
      %v3446 = vadd.f32 %v3253, %v3445
      %3447 = vmatprep.mubr.bf16.mxu0 %v998
      %3448 = vmatmul.mubr.bf16.gmra.mxu0 %v997
      %v3449 = vpop.f32.mrf.mxu0
      %v3450 = vadd.f32 %v3257, %v3449
      %v3451 = vpop.f32.mrf.mxu0
      %v3452 = vadd.f32 %v3259, %v3451
      %v3453 = vpop.f32.mrf.mxu0
      %v3454 = vadd.f32 %v3261, %v3453
      %v3455 = vpop.f32.mrf.mxu0
      %v3456 = vadd.f32 %v3263, %v3455
      %3457 = vmatprep.mubr.bf16.mxu0 %v1005
      %3458 = vmatmul.mubr.bf16.gmra.mxu0 %v1004
      %v3459 = vpop.f32.mrf.mxu0
      %v3460 = vadd.f32 %v3267, %v3459
      %v3461 = vpop.f32.mrf.mxu0
      %v3462 = vadd.f32 %v3269, %v3461
      %v3463 = vpop.f32.mrf.mxu0
      %v3464 = vadd.f32 %v3271, %v3463
      %v3465 = vpop.f32.mrf.mxu0
      %v3466 = vadd.f32 %v3273, %v3465
      %3467 = vmatprep.mubr.bf16.mxu0 %v1012
      %3468 = vmatmul.mubr.bf16.gmra.mxu0 %v1011
      %v3469 = vpop.f32.mrf.mxu0
      %v3470 = vadd.f32 %v3277, %v3469
      %v3471 = vpop.f32.mrf.mxu0
      %v3472 = vadd.f32 %v3279, %v3471
      %v3473 = vpop.f32.mrf.mxu0
      %v3474 = vadd.f32 %v3281, %v3473
      %v3475 = vpop.f32.mrf.mxu0
      %v3476 = vadd.f32 %v3283, %v3475
      %3477 = vmatprep.mubr.bf16.mxu0 %v1019
      %3478 = vmatmul.mubr.bf16.gmra.mxu0 %v1018
      %v3479 = vpop.f32.mrf.mxu0
      %v3480 = vadd.f32 %v3287, %v3479
      %v3481 = vpop.f32.mrf.mxu0
      %v3482 = vadd.f32 %v3289, %v3481
      %v3483 = vpop.f32.mrf.mxu0
      %v3484 = vadd.f32 %v3291, %v3483
      %v3485 = vpop.f32.mrf.mxu0
      %v3486 = vadd.f32 %v3293, %v3485
      %3487 = vmatprep.mubr.bf16.mxu0 %v1026
      %3488 = vmatmul.mubr.bf16.gmra.mxu0 %v1025
      %v3489 = vpop.f32.mrf.mxu0
      %v3490 = vadd.f32 %v3297, %v3489
      %v3491 = vpop.f32.mrf.mxu0
      %v3492 = vadd.f32 %v3299, %v3491
      %v3493 = vpop.f32.mrf.mxu0
      %v3494 = vadd.f32 %v3301, %v3493
      %v3495 = vpop.f32.mrf.mxu0
      %v3496 = vadd.f32 %v3303, %v3495
      %3497 = vmatprep.mubr.bf16.mxu0 %v1033
      %3498 = vmatmul.mubr.bf16.gmra.mxu0 %v1032
      %v3499 = vpop.f32.mrf.mxu0
      %v3500 = vadd.f32 %v3307, %v3499
      %v3501 = vpop.f32.mrf.mxu0
      %v3502 = vadd.f32 %v3309, %v3501
      %v3503 = vpop.f32.mrf.mxu0
      %v3504 = vadd.f32 %v3311, %v3503
      %v3505 = vpop.f32.mrf.mxu0
      %v3506 = vadd.f32 %v3313, %v3505
      %3507 = vmatprep.mubr.bf16.mxu0 %v1040
      %3508 = vmatmul.mubr.bf16.gmra.mxu0 %v1039
      %v3509 = vpop.f32.mrf.mxu0
      %v3510 = vadd.f32 %v3317, %v3509
      %v3511 = vpop.f32.mrf.mxu0
      %v3512 = vadd.f32 %v3319, %v3511
      %v3513 = vpop.f32.mrf.mxu0
      %v3514 = vadd.f32 %v3321, %v3513
      %v3515 = vpop.f32.mrf.mxu0
      %v3516 = vadd.f32 %v3323, %v3515
      %3517 = vdwg.mxu0
      %3518 = vmatprep.subr.bf16.mxu0 0
      %3519 = vmatpush1.bf16.msra.mxu0 0
      %3520 = vmatprep.subr.bf16.mxu0 0
      %3521 = vmatpush1.bf16.msra.mxu0 0
      %3522 = vmatprep.subr.bf16.mxu0 0
      %3523 = vmatpush1.bf16.msra.mxu0 0
      %3524 = vmatprep.subr.bf16.mxu0 0
      %3525 = vmatpush1.bf16.msra.mxu0 0
      %3526 = vmatprep.subr.bf16.mxu0 0
      %3527 = vmatpush1.bf16.msra.mxu0 0
      %3528 = vmatprep.subr.bf16.mxu0 0
      %3529 = vmatpush1.bf16.msra.mxu0 0
      %3530 = vmatprep.subr.bf16.mxu0 0
      %3531 = vmatpush1.bf16.msra.mxu0 0
      %3532 = vmatprep.subr.bf16.mxu0 %v1921
      %3533 = vmatpush1.bf16.msra.mxu0 %v1920
      %3534 = vmatprep.subr.bf16.mxu0 0
      %3535 = vmatpush2.bf16.msra.mxu0 0
      %3536 = vmatprep.subr.bf16.mxu0 0
      %3537 = vmatpush2.bf16.msra.mxu0 0
      %3538 = vmatprep.subr.bf16.mxu0 0
      %3539 = vmatpush2.bf16.msra.mxu0 0
      %3540 = vmatprep.subr.bf16.mxu0 0
      %3541 = vmatpush2.bf16.msra.mxu0 0
      %3542 = vmatprep.subr.bf16.mxu0 0
      %3543 = vmatpush2.bf16.msra.mxu0 0
      %3544 = vmatprep.subr.bf16.mxu0 0
      %3545 = vmatpush2.bf16.msra.mxu0 0
      %3546 = vmatprep.subr.bf16.mxu0 0
      %3547 = vmatpush2.bf16.msra.mxu0 0
      %3548 = vmatprep.subr.bf16.mxu0 0
      %3549 = vmatpush2.bf16.msra.mxu0 0
      %3550 = vmatprep.mubr.bf16.mxu0 0
      %3551 = vmatmul.mubr.bf16.gmra.mxu0 %v2120
      %v3552 = vpop.f32.mrf.mxu0
      %v3553 = vadd.f32 %v3360, %v3552
      %v3554 = vpop.f32.mrf.mxu0
      %v3555 = vadd.f32 %v3362, %v3554
      %v3556 = vpop.f32.mrf.mxu0
      %v3557 = vadd.f32 %v3364, %v3556
      %v3558 = vpop.f32.mrf.mxu0
      %v3559 = vadd.f32 %v3366, %v3558
      %3560 = vmatprep.mubr.bf16.mxu0 0
      %3561 = vmatmul.mubr.bf16.gmra.mxu0 %v2123
      %v3562 = vpop.f32.mrf.mxu0
      %v3563 = vadd.f32 %v3370, %v3562
      %v3564 = vpop.f32.mrf.mxu0
      %v3565 = vadd.f32 %v3372, %v3564
      %v3566 = vpop.f32.mrf.mxu0
      %v3567 = vadd.f32 %v3374, %v3566
      %v3568 = vpop.f32.mrf.mxu0
      %v3569 = vadd.f32 %v3376, %v3568
      %3570 = vmatprep.mubr.bf16.mxu0 0
      %3571 = vmatmul.mubr.bf16.gmra.mxu0 %v2126
      %v3572 = vpop.f32.mrf.mxu0
      %v3573 = vadd.f32 %v3380, %v3572
      %v3574 = vpop.f32.mrf.mxu0
      %v3575 = vadd.f32 %v3382, %v3574
      %v3576 = vpop.f32.mrf.mxu0
      %v3577 = vadd.f32 %v3384, %v3576
      %v3578 = vpop.f32.mrf.mxu0
      %v3579 = vadd.f32 %v3386, %v3578
      %3580 = vmatprep.mubr.bf16.mxu0 0
      %3581 = vmatmul.mubr.bf16.gmra.mxu0 %v2129
      %v3582 = vpop.f32.mrf.mxu0
      %v3583 = vadd.f32 %v3390, %v3582
      %v3584 = vpop.f32.mrf.mxu0
      %v3585 = vadd.f32 %v3392, %v3584
      %v3586 = vpop.f32.mrf.mxu0
      %v3587 = vadd.f32 %v3394, %v3586
      %v3588 = vpop.f32.mrf.mxu0
      %v3589 = vadd.f32 %v3396, %v3588
      %3590 = vmatprep.mubr.bf16.mxu0 0
      %3591 = vmatmul.mubr.bf16.gmra.mxu0 %v2132
      %v3592 = vpop.f32.mrf.mxu0
      %v3593 = vadd.f32 %v3400, %v3592
      %v3594 = vpop.f32.mrf.mxu0
      %v3595 = vadd.f32 %v3402, %v3594
      %v3596 = vpop.f32.mrf.mxu0
      %v3597 = vadd.f32 %v3404, %v3596
      %v3598 = vpop.f32.mrf.mxu0
      %v3599 = vadd.f32 %v3406, %v3598
      %3600 = vmatprep.mubr.bf16.mxu0 0
      %3601 = vmatmul.mubr.bf16.gmra.mxu0 %v2135
      %v3602 = vpop.f32.mrf.mxu0
      %v3603 = vadd.f32 %v3410, %v3602
      %v3604 = vpop.f32.mrf.mxu0
      %v3605 = vadd.f32 %v3412, %v3604
      %v3606 = vpop.f32.mrf.mxu0
      %v3607 = vadd.f32 %v3414, %v3606
      %v3608 = vpop.f32.mrf.mxu0
      %v3609 = vadd.f32 %v3416, %v3608
      %3610 = vmatprep.mubr.bf16.mxu0 0
      %3611 = vmatmul.mubr.bf16.gmra.mxu0 %v2138
      %v3612 = vpop.f32.mrf.mxu0
      %v3613 = vadd.f32 %v3420, %v3612
      %v3614 = vpop.f32.mrf.mxu0
      %v3615 = vadd.f32 %v3422, %v3614
      %v3616 = vpop.f32.mrf.mxu0
      %v3617 = vadd.f32 %v3424, %v3616
      %v3618 = vpop.f32.mrf.mxu0
      %v3619 = vadd.f32 %v3426, %v3618
      %3620 = vmatprep.mubr.bf16.mxu0 0
      %3621 = vmatmul.mubr.bf16.gmra.mxu0 %v2141
      %v3622 = vpop.f32.mrf.mxu0
      %v3623 = vadd.f32 %v3430, %v3622
      %v3624 = vpop.f32.mrf.mxu0
      %v3625 = vadd.f32 %v3432, %v3624
      %v3626 = vpop.f32.mrf.mxu0
      %v3627 = vadd.f32 %v3434, %v3626
      %v3628 = vpop.f32.mrf.mxu0
      %v3629 = vadd.f32 %v3436, %v3628
      %3630 = vmatprep.mubr.bf16.mxu0 0
      %3631 = vmatmul.mubr.bf16.gmra.mxu0 %v2144
      %v3632 = vpop.f32.mrf.mxu0
      %v3633 = vadd.f32 %v3440, %v3632
      %v3634 = vpop.f32.mrf.mxu0
      %v3635 = vadd.f32 %v3442, %v3634
      %v3636 = vpop.f32.mrf.mxu0
      %v3637 = vadd.f32 %v3444, %v3636
      %v3638 = vpop.f32.mrf.mxu0
      %v3639 = vadd.f32 %v3446, %v3638
      %3640 = vmatprep.mubr.bf16.mxu0 0
      %3641 = vmatmul.mubr.bf16.gmra.mxu0 %v2147
      %v3642 = vpop.f32.mrf.mxu0
      %v3643 = vadd.f32 %v3450, %v3642
      %v3644 = vpop.f32.mrf.mxu0
      %v3645 = vadd.f32 %v3452, %v3644
      %v3646 = vpop.f32.mrf.mxu0
      %v3647 = vadd.f32 %v3454, %v3646
      %v3648 = vpop.f32.mrf.mxu0
      %v3649 = vadd.f32 %v3456, %v3648
      %3650 = vmatprep.mubr.bf16.mxu0 0
      %3651 = vmatmul.mubr.bf16.gmra.mxu0 %v2150
      %v3652 = vpop.f32.mrf.mxu0
      %v3653 = vadd.f32 %v3460, %v3652
      %v3654 = vpop.f32.mrf.mxu0
      %v3655 = vadd.f32 %v3462, %v3654
      %v3656 = vpop.f32.mrf.mxu0
      %v3657 = vadd.f32 %v3464, %v3656
      %v3658 = vpop.f32.mrf.mxu0
      %v3659 = vadd.f32 %v3466, %v3658
      %3660 = vmatprep.mubr.bf16.mxu0 0
      %3661 = vmatmul.mubr.bf16.gmra.mxu0 %v2153
      %v3662 = vpop.f32.mrf.mxu0
      %v3663 = vadd.f32 %v3470, %v3662
      %v3664 = vpop.f32.mrf.mxu0
      %v3665 = vadd.f32 %v3472, %v3664
      %v3666 = vpop.f32.mrf.mxu0
      %v3667 = vadd.f32 %v3474, %v3666
      %v3668 = vpop.f32.mrf.mxu0
      %v3669 = vadd.f32 %v3476, %v3668
      %3670 = vmatprep.mubr.bf16.mxu0 0
      %3671 = vmatmul.mubr.bf16.gmra.mxu0 %v2156
      %v3672 = vpop.f32.mrf.mxu0
      %v3673 = vadd.f32 %v3480, %v3672
      %v3674 = vpop.f32.mrf.mxu0
      %v3675 = vadd.f32 %v3482, %v3674
      %v3676 = vpop.f32.mrf.mxu0
      %v3677 = vadd.f32 %v3484, %v3676
      %v3678 = vpop.f32.mrf.mxu0
      %v3679 = vadd.f32 %v3486, %v3678
      %3680 = vmatprep.mubr.bf16.mxu0 0
      %3681 = vmatmul.mubr.bf16.gmra.mxu0 %v2159
      %v3682 = vpop.f32.mrf.mxu0
      %v3683 = vadd.f32 %v3490, %v3682
      %v3684 = vpop.f32.mrf.mxu0
      %v3685 = vadd.f32 %v3492, %v3684
      %v3686 = vpop.f32.mrf.mxu0
      %v3687 = vadd.f32 %v3494, %v3686
      %v3688 = vpop.f32.mrf.mxu0
      %v3689 = vadd.f32 %v3496, %v3688
      %3690 = vmatprep.mubr.bf16.mxu0 0
      %3691 = vmatmul.mubr.bf16.gmra.mxu0 %v2162
      %v3692 = vpop.f32.mrf.mxu0
      %v3693 = vadd.f32 %v3500, %v3692
      %v3694 = vpop.f32.mrf.mxu0
      %v3695 = vadd.f32 %v3502, %v3694
      %v3696 = vpop.f32.mrf.mxu0
      %v3697 = vadd.f32 %v3504, %v3696
      %v3698 = vpop.f32.mrf.mxu0
      %v3699 = vadd.f32 %v3506, %v3698
      %3700 = vmatprep.mubr.bf16.mxu0 0
      %3701 = vmatmul.mubr.bf16.gmra.mxu0 %v2165
      %v3702 = vpop.f32.mrf.mxu0
      %v3703 = vadd.f32 %v3510, %v3702
      %v3704 = vpop.f32.mrf.mxu0
      %v3705 = vadd.f32 %v3512, %v3704
      %v3706 = vpop.f32.mrf.mxu0
      %v3707 = vadd.f32 %v3514, %v3706
      %v3708 = vpop.f32.mrf.mxu0
      %v3709 = vadd.f32 %v3516, %v3708
      %3710 = vdwg.mxu0
      %v3711 = vmax.f32 %v2781, 0.0
      %v3712 = vmax.f32 %v2783, 0.0
      %v3713 = vmax.f32 %v3553, 0.0
      %v3714 = vmax.f32 %v3555, 0.0
      %v3715 = vmax.f32 %v2785, 0.0
      %v3716 = vmax.f32 %v2787, 0.0
      %v3717 = vmax.f32 %v3557, 0.0
      %v3718 = vmax.f32 %v3559, 0.0
      %v3719 = vmax.f32 %v2791, 0.0
      %v3720 = vmax.f32 %v2793, 0.0
      %v3721 = vmax.f32 %v3563, 0.0
      %v3722 = vmax.f32 %v3565, 0.0
      %v3723 = vmax.f32 %v2795, 0.0
      %v3724 = vmax.f32 %v2797, 0.0
      %v3725 = vmax.f32 %v3567, 0.0
      %v3726 = vmax.f32 %v3569, 0.0
      %v3727 = vmax.f32 %v2801, 0.0
      %v3728 = vmax.f32 %v2803, 0.0
      %v3729 = vmax.f32 %v3573, 0.0
      %v3730 = vmax.f32 %v3575, 0.0
      %v3731 = vmax.f32 %v2805, 0.0
      %v3732 = vmax.f32 %v2807, 0.0
      %v3733 = vmax.f32 %v3577, 0.0
      %v3734 = vmax.f32 %v3579, 0.0
      %v3735 = vmax.f32 %v2811, 0.0
      %v3736 = vmax.f32 %v2813, 0.0
      %v3737 = vmax.f32 %v3583, 0.0
      %v3738 = vmax.f32 %v3585, 0.0
      %v3739 = vmax.f32 %v2815, 0.0
      %v3740 = vmax.f32 %v2817, 0.0
      %v3741 = vmax.f32 %v3587, 0.0
      %v3742 = vmax.f32 %v3589, 0.0
      %v3743 = vmax.f32 %v2821, 0.0
      %v3744 = vmax.f32 %v2823, 0.0
      %v3745 = vmax.f32 %v3593, 0.0
      %v3746 = vmax.f32 %v3595, 0.0
      %v3747 = vmax.f32 %v2825, 0.0
      %v3748 = vmax.f32 %v2827, 0.0
      %v3749 = vmax.f32 %v3597, 0.0
      %v3750 = vmax.f32 %v3599, 0.0
      %v3751 = vmax.f32 %v2831, 0.0
      %v3752 = vmax.f32 %v2833, 0.0
      %v3753 = vmax.f32 %v3603, 0.0
      %v3754 = vmax.f32 %v3605, 0.0
      %v3755 = vmax.f32 %v2835, 0.0
      %v3756 = vmax.f32 %v2837, 0.0
      %v3757 = vmax.f32 %v3607, 0.0
      %v3758 = vmax.f32 %v3609, 0.0
      %v3759 = vmax.f32 %v2841, 0.0
      %v3760 = vmax.f32 %v2843, 0.0
      %v3761 = vmax.f32 %v3613, 0.0
      %v3762 = vmax.f32 %v3615, 0.0
      %v3763 = vmax.f32 %v2845, 0.0
      %v3764 = vmax.f32 %v2847, 0.0
      %v3765 = vmax.f32 %v3617, 0.0
      %v3766 = vmax.f32 %v3619, 0.0
      %v3767 = vmax.f32 %v2851, 0.0
      %v3768 = vmax.f32 %v2853, 0.0
      %v3769 = vmax.f32 %v3623, 0.0
      %v3770 = vmax.f32 %v3625, 0.0
      %v3771 = vmax.f32 %v2855, 0.0
      %v3772 = vmax.f32 %v2857, 0.0
      %v3773 = vmax.f32 %v3627, 0.0
      %v3774 = vmax.f32 %v3629, 0.0
      %v3775 = vmax.f32 %v2861, 0.0
      %v3776 = vmax.f32 %v2863, 0.0
      %v3777 = vmax.f32 %v3633, 0.0
      %v3778 = vmax.f32 %v3635, 0.0
      %v3779 = vmax.f32 %v2865, 0.0
      %v3780 = vmax.f32 %v2867, 0.0
      %v3781 = vmax.f32 %v3637, 0.0
      %v3782 = vmax.f32 %v3639, 0.0
      %v3783 = vmax.f32 %v2871, 0.0
      %v3784 = vmax.f32 %v2873, 0.0
      %v3785 = vmax.f32 %v3643, 0.0
      %v3786 = vmax.f32 %v3645, 0.0
      %v3787 = vmax.f32 %v2875, 0.0
      %v3788 = vmax.f32 %v2877, 0.0
      %v3789 = vmax.f32 %v3647, 0.0
      %v3790 = vmax.f32 %v3649, 0.0
      %v3791 = vmax.f32 %v2881, 0.0
      %v3792 = vmax.f32 %v2883, 0.0
      %v3793 = vmax.f32 %v3653, 0.0
      %v3794 = vmax.f32 %v3655, 0.0
      %v3795 = vmax.f32 %v2885, 0.0
      %v3796 = vmax.f32 %v2887, 0.0
      %v3797 = vmax.f32 %v3657, 0.0
      %v3798 = vmax.f32 %v3659, 0.0
      %v3799 = vmax.f32 %v2891, 0.0
      %v3800 = vmax.f32 %v2893, 0.0
      %v3801 = vmax.f32 %v3663, 0.0
      %v3802 = vmax.f32 %v3665, 0.0
      %v3803 = vmax.f32 %v2895, 0.0
      %v3804 = vmax.f32 %v2897, 0.0
      %v3805 = vmax.f32 %v3667, 0.0
      %v3806 = vmax.f32 %v3669, 0.0
      %v3807 = vmax.f32 %v2901, 0.0
      %v3808 = vmax.f32 %v2903, 0.0
      %v3809 = vmax.f32 %v3673, 0.0
      %v3810 = vmax.f32 %v3675, 0.0
      %v3811 = vmax.f32 %v2905, 0.0
      %v3812 = vmax.f32 %v2907, 0.0
      %v3813 = vmax.f32 %v3677, 0.0
      %v3814 = vmax.f32 %v3679, 0.0
      %v3815 = vmax.f32 %v2911, 0.0
      %v3816 = vmax.f32 %v2913, 0.0
      %v3817 = vmax.f32 %v3683, 0.0
      %v3818 = vmax.f32 %v3685, 0.0
      %v3819 = vmax.f32 %v2915, 0.0
      %v3820 = vmax.f32 %v2917, 0.0
      %v3821 = vmax.f32 %v3687, 0.0
      %v3822 = vmax.f32 %v3689, 0.0
      %v3823 = vmax.f32 %v2921, 0.0
      %v3824 = vmax.f32 %v2923, 0.0
      %v3825 = vmax.f32 %v3693, 0.0
      %v3826 = vmax.f32 %v3695, 0.0
      %v3827 = vmax.f32 %v2925, 0.0
      %v3828 = vmax.f32 %v2927, 0.0
      %v3829 = vmax.f32 %v3697, 0.0
      %v3830 = vmax.f32 %v3699, 0.0
      %v3831 = vmax.f32 %v2931, 0.0
      %v3832 = vmax.f32 %v2933, 0.0
      %v3833 = vmax.f32 %v3703, 0.0
      %v3834 = vmax.f32 %v3705, 0.0
      %v3835 = vmax.f32 %v2935, 0.0
      %v3836 = vmax.f32 %v2937, 0.0
      %v3837 = vmax.f32 %v3707, 0.0
      %v3838 = vmax.f32 %v3709, 0.0
      %v3839 = vpack.c.bf16 %v3715, %v3711
      %v3840 = vpack.c.bf16 %v3716, %v3712
      %v3841 = vpack.c.bf16 %v3717, %v3713
      %v3842 = vpack.c.bf16 %v3718, %v3714
      %v3843 = vpack.c.bf16 %v3723, %v3719
      %v3844 = vpack.c.bf16 %v3724, %v3720
      %v3845 = vpack.c.bf16 %v3725, %v3721
      %v3846 = vpack.c.bf16 %v3726, %v3722
      %v3847 = vpack.c.bf16 %v3731, %v3727
      %v3848 = vpack.c.bf16 %v3732, %v3728
      %v3849 = vpack.c.bf16 %v3733, %v3729
      %v3850 = vpack.c.bf16 %v3734, %v3730
      %v3851 = vpack.c.bf16 %v3739, %v3735
      %v3852 = vpack.c.bf16 %v3740, %v3736
      %v3853 = vpack.c.bf16 %v3741, %v3737
      %v3854 = vpack.c.bf16 %v3742, %v3738
      %v3855 = vpack.c.bf16 %v3747, %v3743
      %v3856 = vpack.c.bf16 %v3748, %v3744
      %v3857 = vpack.c.bf16 %v3749, %v3745
      %v3858 = vpack.c.bf16 %v3750, %v3746
      %v3859 = vpack.c.bf16 %v3755, %v3751
      %v3860 = vpack.c.bf16 %v3756, %v3752
      %v3861 = vpack.c.bf16 %v3757, %v3753
      %v3862 = vpack.c.bf16 %v3758, %v3754
      %v3863 = vpack.c.bf16 %v3763, %v3759
      %v3864 = vpack.c.bf16 %v3764, %v3760
      %v3865 = vpack.c.bf16 %v3765, %v3761
      %v3866 = vpack.c.bf16 %v3766, %v3762
      %v3867 = vpack.c.bf16 %v3771, %v3767
      %v3868 = vpack.c.bf16 %v3772, %v3768
      %v3869 = vpack.c.bf16 %v3773, %v3769
      %v3870 = vpack.c.bf16 %v3774, %v3770
      %v3871 = vpack.c.bf16 %v3779, %v3775
      %v3872 = vpack.c.bf16 %v3780, %v3776
      %v3873 = vpack.c.bf16 %v3781, %v3777
      %v3874 = vpack.c.bf16 %v3782, %v3778
      %v3875 = vpack.c.bf16 %v3787, %v3783
      %v3876 = vpack.c.bf16 %v3788, %v3784
      %v3877 = vpack.c.bf16 %v3789, %v3785
      %v3878 = vpack.c.bf16 %v3790, %v3786
      %v3879 = vpack.c.bf16 %v3795, %v3791
      %v3880 = vpack.c.bf16 %v3796, %v3792
      %v3881 = vpack.c.bf16 %v3797, %v3793
      %v3882 = vpack.c.bf16 %v3798, %v3794
      %v3883 = vpack.c.bf16 %v3803, %v3799
      %v3884 = vpack.c.bf16 %v3804, %v3800
      %v3885 = vpack.c.bf16 %v3805, %v3801
      %v3886 = vpack.c.bf16 %v3806, %v3802
      %v3887 = vpack.c.bf16 %v3811, %v3807
      %v3888 = vpack.c.bf16 %v3812, %v3808
      %v3889 = vpack.c.bf16 %v3813, %v3809
      %v3890 = vpack.c.bf16 %v3814, %v3810
      %v3891 = vpack.c.bf16 %v3819, %v3815
      %v3892 = vpack.c.bf16 %v3820, %v3816
      %v3893 = vpack.c.bf16 %v3821, %v3817
      %v3894 = vpack.c.bf16 %v3822, %v3818
      %v3895 = vpack.c.bf16 %v3827, %v3823
      %v3896 = vpack.c.bf16 %v3828, %v3824
      %v3897 = vpack.c.bf16 %v3829, %v3825
      %v3898 = vpack.c.bf16 %v3830, %v3826
      %v3899 = vpack.c.bf16 %v3835, %v3831
      %v3900 = vpack.c.bf16 %v3836, %v3832
      %v3901 = vpack.c.bf16 %v3837, %v3833
      %v3902 = vpack.c.bf16 %v3838, %v3834
      %v3903 = vld [vmem:[%s3] sm:$0xf]
      %v3904 = vld [vmem:[%s3 + $0x4] sm:$0xf]
      %v3905 = vld [vmem:[%s3 + $0x8] sm:$0xf]
      %v3906 = vld [vmem:[%s3 + $0xc] sm:$0xf]
      %v3907 = vld [vmem:[%s3 + $0x10] sm:$0xf]
      %v3908 = vld [vmem:[%s3 + $0x14] sm:$0xf]
      %v3909 = vld [vmem:[%s3 + $0x18] sm:$0xf]
      %v3910 = vld [vmem:[%s3 + $0x1c] sm:$0xf]
      %v3911 = vld [vmem:[%s3 + $0x20] sm:$0xf]
      %v3912 = vld [vmem:[%s3 + $0x24] sm:$0xf]
      %v3913 = vld [vmem:[%s3 + $0x28] sm:$0xf]
      %v3914 = vld [vmem:[%s3 + $0x2c] sm:$0xf]
      %v3915 = vld [vmem:[%s3 + $0x30] sm:$0xf]
      %v3916 = vld [vmem:[%s3 + $0x34] sm:$0xf]
      %v3917 = vld [vmem:[%s3 + $0x38] sm:$0xf]
      %v3918 = vld [vmem:[%s3 + $0x3c] sm:$0xf]
      %v3919 = vld [vmem:[%s3 + $0x40] sm:$0xf]
      %v3920 = vld [vmem:[%s3 + $0x44] sm:$0xf]
      %v3921 = vld [vmem:[%s3 + $0x48] sm:$0xf]
      %v3922 = vld [vmem:[%s3 + $0x4c] sm:$0xf]
      %v3923 = vld [vmem:[%s3 + $0x50] sm:$0xf]
      %v3924 = vld [vmem:[%s3 + $0x54] sm:$0xf]
      %v3925 = vld [vmem:[%s3 + $0x58] sm:$0xf]
      %v3926 = vld [vmem:[%s3 + $0x5c] sm:$0xf]
      %v3927 = vld [vmem:[%s3 + $0x60] sm:$0xf]
      %v3928 = vld [vmem:[%s3 + $0x64] sm:$0xf]
      %v3929 = vld [vmem:[%s3 + $0x68] sm:$0xf]
      %v3930 = vld [vmem:[%s3 + $0x6c] sm:$0xf]
      %v3931 = vld [vmem:[%s3 + $0x70] sm:$0xf]
      %v3932 = vld [vmem:[%s3 + $0x74] sm:$0xf]
      %v3933 = vld [vmem:[%s3 + $0x78] sm:$0xf]
      %v3934 = vld [vmem:[%s3 + $0x7c] sm:$0xf]
      %v3935 = vld [vmem:[%s3 + $0x80] sm:$0xf]
      %v3936 = vld [vmem:[%s3 + $0x84] sm:$0xf]
      %v3937 = vld [vmem:[%s3 + $0x88] sm:$0xf]
      %v3938 = vld [vmem:[%s3 + $0x8c] sm:$0xf]
      %v3939 = vld [vmem:[%s3 + $0x90] sm:$0xf]
      %v3940 = vld [vmem:[%s3 + $0x94] sm:$0xf]
      %v3941 = vld [vmem:[%s3 + $0x98] sm:$0xf]
      %v3942 = vld [vmem:[%s3 + $0x9c] sm:$0xf]
      %v3943 = vld [vmem:[%s3 + $0xa0] sm:$0xf]
      %v3944 = vld [vmem:[%s3 + $0xa4] sm:$0xf]
      %v3945 = vld [vmem:[%s3 + $0xa8] sm:$0xf]
      %v3946 = vld [vmem:[%s3 + $0xac] sm:$0xf]
      %v3947 = vld [vmem:[%s3 + $0xb0] sm:$0xf]
      %v3948 = vld [vmem:[%s3 + $0xb4] sm:$0xf]
      %v3949 = vld [vmem:[%s3 + $0xb8] sm:$0xf]
      %v3950 = vld [vmem:[%s3 + $0xbc] sm:$0xf]
      %v3951 = vld [vmem:[%s3 + $0xc0] sm:$0xf]
      %v3952 = vld [vmem:[%s3 + $0xc4] sm:$0xf]
      %v3953 = vld [vmem:[%s3 + $0xc8] sm:$0xf]
      %v3954 = vld [vmem:[%s3 + $0xcc] sm:$0xf]
      %v3955 = vld [vmem:[%s3 + $0xd0] sm:$0xf]
      %v3956 = vld [vmem:[%s3 + $0xd4] sm:$0xf]
      %v3957 = vld [vmem:[%s3 + $0xd8] sm:$0xf]
      %v3958 = vld [vmem:[%s3 + $0xdc] sm:$0xf]
      %v3959 = vld [vmem:[%s3 + $0xe0] sm:$0xf]
      %v3960 = vld [vmem:[%s3 + $0xe4] sm:$0xf]
      %v3961 = vld [vmem:[%s3 + $0xe8] sm:$0xf]
      %v3962 = vld [vmem:[%s3 + $0xec] sm:$0xf]
      %v3963 = vld [vmem:[%s3 + $0xf0] sm:$0xf]
      %v3964 = vld [vmem:[%s3 + $0xf4] sm:$0xf]
      %v3965 = vld [vmem:[%s3 + $0xf8] sm:$0xf]
      %v3966 = vld [vmem:[%s3 + $0xfc] sm:$0xf]
      %v3967 = vld [vmem:[%s4] sm:$0x1]
      %v3969 = vlaneseq
      %v3970 = vshrl.u32 %v3969, 7
      %v3971 = vsub.s32 0, %v3970
      %v3972 = vrot.slane %v3967, %v3971
      %v4038 = vunpack.c.l.b16 %v3903
      %v4039 = vunpack.c.l.b16 %v3904
      %v4040 = vunpack.c.l.b16 %v3905
      %v4041 = vunpack.c.l.b16 %v3906
      %v4042 = vunpack.c.l.b16 %v3907
      %v4043 = vunpack.c.l.b16 %v3908
      %v4044 = vunpack.c.l.b16 %v3909
      %v4045 = vunpack.c.l.b16 %v3910
      %v4046 = vunpack.c.l.b16 %v3911
      %v4047 = vunpack.c.l.b16 %v3912
      %v4048 = vunpack.c.l.b16 %v3913
      %v4049 = vunpack.c.l.b16 %v3914
      %v4050 = vunpack.c.l.b16 %v3915
      %v4051 = vunpack.c.l.b16 %v3916
      %v4052 = vunpack.c.l.b16 %v3917
      %v4053 = vunpack.c.l.b16 %v3918
      %v4054 = vunpack.c.l.b16 %v3919
      %v4055 = vunpack.c.l.b16 %v3920
      %v4056 = vunpack.c.l.b16 %v3921
      %v4057 = vunpack.c.l.b16 %v3922
      %v4058 = vunpack.c.l.b16 %v3923
      %v4059 = vunpack.c.l.b16 %v3924
      %v4060 = vunpack.c.l.b16 %v3925
      %v4061 = vunpack.c.l.b16 %v3926
      %v4062 = vunpack.c.l.b16 %v3927
      %v4063 = vunpack.c.l.b16 %v3928
      %v4064 = vunpack.c.l.b16 %v3929
      %v4065 = vunpack.c.l.b16 %v3930
      %v4066 = vunpack.c.l.b16 %v3931
      %v4067 = vunpack.c.l.b16 %v3932
      %v4068 = vunpack.c.l.b16 %v3933
      %v4069 = vunpack.c.l.b16 %v3934
      %v4070 = vunpack.c.l.b16 %v3935
      %v4071 = vunpack.c.l.b16 %v3936
      %v4072 = vunpack.c.l.b16 %v3937
      %v4073 = vunpack.c.l.b16 %v3938
      %v4074 = vunpack.c.l.b16 %v3939
      %v4075 = vunpack.c.l.b16 %v3940
      %v4076 = vunpack.c.l.b16 %v3941
      %v4077 = vunpack.c.l.b16 %v3942
      %v4078 = vunpack.c.l.b16 %v3943
      %v4079 = vunpack.c.l.b16 %v3944
      %v4080 = vunpack.c.l.b16 %v3945
      %v4081 = vunpack.c.l.b16 %v3946
      %v4082 = vunpack.c.l.b16 %v3947
      %v4083 = vunpack.c.l.b16 %v3948
      %v4084 = vunpack.c.l.b16 %v3949
      %v4085 = vunpack.c.l.b16 %v3950
      %v4086 = vunpack.c.l.b16 %v3951
      %v4087 = vunpack.c.l.b16 %v3952
      %v4088 = vunpack.c.l.b16 %v3953
      %v4089 = vunpack.c.l.b16 %v3954
      %v4090 = vunpack.c.l.b16 %v3955
      %v4091 = vunpack.c.l.b16 %v3956
      %v4092 = vunpack.c.l.b16 %v3957
      %v4093 = vunpack.c.l.b16 %v3958
      %v4094 = vunpack.c.l.b16 %v3959
      %v4095 = vunpack.c.l.b16 %v3960
      %v4096 = vunpack.c.l.b16 %v3961
      %v4097 = vunpack.c.l.b16 %v3962
      %v4098 = vunpack.c.l.b16 %v3963
      %v4099 = vunpack.c.l.b16 %v3964
      %v4100 = vunpack.c.l.b16 %v3965
      %v4101 = vunpack.c.l.b16 %v3966
      %v4102 = vpack.c.b16 %v4039, %v4038
      %v4103 = vpack.c.b16 %v4041, %v4040
      %v4104 = vpack.c.b16 %v4043, %v4042
      %v4105 = vpack.c.b16 %v4045, %v4044
      %v4106 = vpack.c.b16 %v4047, %v4046
      %v4107 = vpack.c.b16 %v4049, %v4048
      %v4108 = vpack.c.b16 %v4051, %v4050
      %v4109 = vpack.c.b16 %v4053, %v4052
      %v4110 = vpack.c.b16 %v4055, %v4054
      %v4111 = vpack.c.b16 %v4057, %v4056
      %v4112 = vpack.c.b16 %v4059, %v4058
      %v4113 = vpack.c.b16 %v4061, %v4060
      %v4114 = vpack.c.b16 %v4063, %v4062
      %v4115 = vpack.c.b16 %v4065, %v4064
      %v4116 = vpack.c.b16 %v4067, %v4066
      %v4117 = vpack.c.b16 %v4069, %v4068
      %v4118 = vpack.c.b16 %v4071, %v4070
      %v4119 = vpack.c.b16 %v4073, %v4072
      %v4120 = vpack.c.b16 %v4075, %v4074
      %v4121 = vpack.c.b16 %v4077, %v4076
      %v4122 = vpack.c.b16 %v4079, %v4078
      %v4123 = vpack.c.b16 %v4081, %v4080
      %v4124 = vpack.c.b16 %v4083, %v4082
      %v4125 = vpack.c.b16 %v4085, %v4084
      %v4126 = vpack.c.b16 %v4087, %v4086
      %v4127 = vpack.c.b16 %v4089, %v4088
      %v4128 = vpack.c.b16 %v4091, %v4090
      %v4129 = vpack.c.b16 %v4093, %v4092
      %v4130 = vpack.c.b16 %v4095, %v4094
      %v4131 = vpack.c.b16 %v4097, %v4096
      %v4132 = vpack.c.b16 %v4099, %v4098
      %v4133 = vpack.c.b16 %v4101, %v4100
      %4166 = vmatprep.subr.bf16.mxu0 0
      %4167 = vmatpush1.bf16.msra.mxu0 %v4109
      %4168 = vmatprep.subr.bf16.mxu0 0
      %4169 = vmatpush1.bf16.msra.mxu0 %v4108
      %4170 = vmatprep.subr.bf16.mxu0 0
      %4171 = vmatpush1.bf16.msra.mxu0 %v4107
      %4172 = vmatprep.subr.bf16.mxu0 0
      %4173 = vmatpush1.bf16.msra.mxu0 %v4106
      %4174 = vmatprep.subr.bf16.mxu0 0
      %4175 = vmatpush1.bf16.msra.mxu0 %v4105
      %4176 = vmatprep.subr.bf16.mxu0 0
      %4177 = vmatpush1.bf16.msra.mxu0 %v4104
      %4178 = vmatprep.subr.bf16.mxu0 0
      %4179 = vmatpush1.bf16.msra.mxu0 %v4103
      %4180 = vmatprep.subr.bf16.mxu0 0
      %4181 = vmatpush1.bf16.msra.mxu0 %v4102
      %4182 = vmatprep.subr.bf16.mxu0 0
      %4183 = vmatpush2.bf16.msra.mxu0 %v4117
      %4184 = vmatprep.subr.bf16.mxu0 0
      %4185 = vmatpush2.bf16.msra.mxu0 %v4116
      %4186 = vmatprep.subr.bf16.mxu0 0
      %4187 = vmatpush2.bf16.msra.mxu0 %v4115
      %4188 = vmatprep.subr.bf16.mxu0 0
      %4189 = vmatpush2.bf16.msra.mxu0 %v4114
      %4190 = vmatprep.subr.bf16.mxu0 0
      %4191 = vmatpush2.bf16.msra.mxu0 %v4113
      %4192 = vmatprep.subr.bf16.mxu0 0
      %4193 = vmatpush2.bf16.msra.mxu0 %v4112
      %4194 = vmatprep.subr.bf16.mxu0 0
      %4195 = vmatpush2.bf16.msra.mxu0 %v4111
      %4196 = vmatprep.subr.bf16.mxu0 0
      %4197 = vmatpush2.bf16.msra.mxu0 %v4110
      %4198 = vmatprep.mubr.bf16.mxu0 %v3840
      %4199 = vmatmul.mubr.bf16.gmra.mxu0 %v3839
      %v4200 = vpop.f32.mrf.mxu0
      %v4201 = vadd.f32 %v3972, %v4200
      %v4202 = vpop.f32.mrf.mxu0
      %v4203 = vpop.f32.mrf.mxu0
      %v4204 = vadd.f32 %v3972, %v4203
      %v4205 = vpop.f32.mrf.mxu0
      %4206 = vmatprep.mubr.bf16.mxu0 %v3844
      %4207 = vmatmul.mubr.bf16.gmra.mxu0 %v3843
      %v4208 = vpop.f32.mrf.mxu0
      %v4209 = vadd.f32 %v3972, %v4208
      %v4210 = vpop.f32.mrf.mxu0
      %v4211 = vpop.f32.mrf.mxu0
      %v4212 = vadd.f32 %v3972, %v4211
      %v4213 = vpop.f32.mrf.mxu0
      %4214 = vmatprep.mubr.bf16.mxu0 %v3848
      %4215 = vmatmul.mubr.bf16.gmra.mxu0 %v3847
      %v4216 = vpop.f32.mrf.mxu0
      %v4217 = vadd.f32 %v3972, %v4216
      %v4218 = vpop.f32.mrf.mxu0
      %v4219 = vpop.f32.mrf.mxu0
      %v4220 = vadd.f32 %v3972, %v4219
      %v4221 = vpop.f32.mrf.mxu0
      %4222 = vmatprep.mubr.bf16.mxu0 %v3852
      %4223 = vmatmul.mubr.bf16.gmra.mxu0 %v3851
      %v4224 = vpop.f32.mrf.mxu0
      %v4225 = vadd.f32 %v3972, %v4224
      %v4226 = vpop.f32.mrf.mxu0
      %v4227 = vpop.f32.mrf.mxu0
      %v4228 = vadd.f32 %v3972, %v4227
      %v4229 = vpop.f32.mrf.mxu0
      %4230 = vmatprep.mubr.bf16.mxu0 %v3856
      %4231 = vmatmul.mubr.bf16.gmra.mxu0 %v3855
      %v4232 = vpop.f32.mrf.mxu0
      %v4233 = vadd.f32 %v3972, %v4232
      %v4234 = vpop.f32.mrf.mxu0
      %v4235 = vpop.f32.mrf.mxu0
      %v4236 = vadd.f32 %v3972, %v4235
      %v4237 = vpop.f32.mrf.mxu0
      %4238 = vmatprep.mubr.bf16.mxu0 %v3860
      %4239 = vmatmul.mubr.bf16.gmra.mxu0 %v3859
      %v4240 = vpop.f32.mrf.mxu0
      %v4241 = vadd.f32 %v3972, %v4240
      %v4242 = vpop.f32.mrf.mxu0
      %v4243 = vpop.f32.mrf.mxu0
      %v4244 = vadd.f32 %v3972, %v4243
      %v4245 = vpop.f32.mrf.mxu0
      %4246 = vmatprep.mubr.bf16.mxu0 %v3864
      %4247 = vmatmul.mubr.bf16.gmra.mxu0 %v3863
      %v4248 = vpop.f32.mrf.mxu0
      %v4249 = vadd.f32 %v3972, %v4248
      %v4250 = vpop.f32.mrf.mxu0
      %v4251 = vpop.f32.mrf.mxu0
      %v4252 = vadd.f32 %v3972, %v4251
      %v4253 = vpop.f32.mrf.mxu0
      %4254 = vmatprep.mubr.bf16.mxu0 %v3868
      %4255 = vmatmul.mubr.bf16.gmra.mxu0 %v3867
      %v4256 = vpop.f32.mrf.mxu0
      %v4257 = vadd.f32 %v3972, %v4256
      %v4258 = vpop.f32.mrf.mxu0
      %v4259 = vpop.f32.mrf.mxu0
      %v4260 = vadd.f32 %v3972, %v4259
      %v4261 = vpop.f32.mrf.mxu0
      %4262 = vmatprep.mubr.bf16.mxu0 %v3872
      %4263 = vmatmul.mubr.bf16.gmra.mxu0 %v3871
      %v4264 = vpop.f32.mrf.mxu0
      %v4265 = vadd.f32 %v3972, %v4264
      %v4266 = vpop.f32.mrf.mxu0
      %v4267 = vpop.f32.mrf.mxu0
      %v4268 = vadd.f32 %v3972, %v4267
      %v4269 = vpop.f32.mrf.mxu0
      %4270 = vmatprep.mubr.bf16.mxu0 %v3876
      %4271 = vmatmul.mubr.bf16.gmra.mxu0 %v3875
      %v4272 = vpop.f32.mrf.mxu0
      %v4273 = vadd.f32 %v3972, %v4272
      %v4274 = vpop.f32.mrf.mxu0
      %v4275 = vpop.f32.mrf.mxu0
      %v4276 = vadd.f32 %v3972, %v4275
      %v4277 = vpop.f32.mrf.mxu0
      %4278 = vmatprep.mubr.bf16.mxu0 %v3880
      %4279 = vmatmul.mubr.bf16.gmra.mxu0 %v3879
      %v4280 = vpop.f32.mrf.mxu0
      %v4281 = vadd.f32 %v3972, %v4280
      %v4282 = vpop.f32.mrf.mxu0
      %v4283 = vpop.f32.mrf.mxu0
      %v4284 = vadd.f32 %v3972, %v4283
      %v4285 = vpop.f32.mrf.mxu0
      %4286 = vmatprep.mubr.bf16.mxu0 %v3884
      %4287 = vmatmul.mubr.bf16.gmra.mxu0 %v3883
      %v4288 = vpop.f32.mrf.mxu0
      %v4289 = vadd.f32 %v3972, %v4288
      %v4290 = vpop.f32.mrf.mxu0
      %v4291 = vpop.f32.mrf.mxu0
      %v4292 = vadd.f32 %v3972, %v4291
      %v4293 = vpop.f32.mrf.mxu0
      %4294 = vmatprep.mubr.bf16.mxu0 %v3888
      %4295 = vmatmul.mubr.bf16.gmra.mxu0 %v3887
      %v4296 = vpop.f32.mrf.mxu0
      %v4297 = vadd.f32 %v3972, %v4296
      %v4298 = vpop.f32.mrf.mxu0
      %v4299 = vpop.f32.mrf.mxu0
      %v4300 = vadd.f32 %v3972, %v4299
      %v4301 = vpop.f32.mrf.mxu0
      %4302 = vmatprep.mubr.bf16.mxu0 %v3892
      %4303 = vmatmul.mubr.bf16.gmra.mxu0 %v3891
      %v4304 = vpop.f32.mrf.mxu0
      %v4305 = vadd.f32 %v3972, %v4304
      %v4306 = vpop.f32.mrf.mxu0
      %v4307 = vpop.f32.mrf.mxu0
      %v4308 = vadd.f32 %v3972, %v4307
      %v4309 = vpop.f32.mrf.mxu0
      %4310 = vmatprep.mubr.bf16.mxu0 %v3896
      %4311 = vmatmul.mubr.bf16.gmra.mxu0 %v3895
      %v4312 = vpop.f32.mrf.mxu0
      %v4313 = vadd.f32 %v3972, %v4312
      %v4314 = vpop.f32.mrf.mxu0
      %v4315 = vpop.f32.mrf.mxu0
      %v4316 = vadd.f32 %v3972, %v4315
      %v4317 = vpop.f32.mrf.mxu0
      %4318 = vmatprep.mubr.bf16.mxu0 %v3900
      %4319 = vmatmul.mubr.bf16.gmra.mxu0 %v3899
      %v4320 = vpop.f32.mrf.mxu0
      %v4321 = vadd.f32 %v3972, %v4320
      %v4322 = vpop.f32.mrf.mxu0
      %v4323 = vpop.f32.mrf.mxu0
      %v4324 = vadd.f32 %v3972, %v4323
      %v4325 = vpop.f32.mrf.mxu0
      %4326 = vdwg.mxu0
      %4327 = vmatprep.subr.bf16.mxu0 0
      %4328 = vmatpush1.bf16.msra.mxu0 %v4125
      %4329 = vmatprep.subr.bf16.mxu0 0
      %4330 = vmatpush1.bf16.msra.mxu0 %v4124
      %4331 = vmatprep.subr.bf16.mxu0 0
      %4332 = vmatpush1.bf16.msra.mxu0 %v4123
      %4333 = vmatprep.subr.bf16.mxu0 0
      %4334 = vmatpush1.bf16.msra.mxu0 %v4122
      %4335 = vmatprep.subr.bf16.mxu0 0
      %4336 = vmatpush1.bf16.msra.mxu0 %v4121
      %4337 = vmatprep.subr.bf16.mxu0 0
      %4338 = vmatpush1.bf16.msra.mxu0 %v4120
      %4339 = vmatprep.subr.bf16.mxu0 0
      %4340 = vmatpush1.bf16.msra.mxu0 %v4119
      %4341 = vmatprep.subr.bf16.mxu0 0
      %4342 = vmatpush1.bf16.msra.mxu0 %v4118
      %4343 = vmatprep.subr.bf16.mxu0 0
      %4344 = vmatpush2.bf16.msra.mxu0 %v4133
      %4345 = vmatprep.subr.bf16.mxu0 0
      %4346 = vmatpush2.bf16.msra.mxu0 %v4132
      %4347 = vmatprep.subr.bf16.mxu0 0
      %4348 = vmatpush2.bf16.msra.mxu0 %v4131
      %4349 = vmatprep.subr.bf16.mxu0 0
      %4350 = vmatpush2.bf16.msra.mxu0 %v4130
      %4351 = vmatprep.subr.bf16.mxu0 0
      %4352 = vmatpush2.bf16.msra.mxu0 %v4129
      %4353 = vmatprep.subr.bf16.mxu0 0
      %4354 = vmatpush2.bf16.msra.mxu0 %v4128
      %4355 = vmatprep.subr.bf16.mxu0 0
      %4356 = vmatpush2.bf16.msra.mxu0 %v4127
      %4357 = vmatprep.subr.bf16.mxu0 0
      %4358 = vmatpush2.bf16.msra.mxu0 %v4126
      %4359 = vmatprep.mubr.bf16.mxu0 %v3842
      %4360 = vmatmul.mubr.bf16.gmra.mxu0 %v3841
      %v4361 = vpop.f32.mrf.mxu0
      %v4362 = vadd.f32 %v4201, %v4361
      %v4363 = vpop.f32.mrf.mxu0
      %v4364 = vpop.f32.mrf.mxu0
      %v4365 = vadd.f32 %v4204, %v4364
      %v4366 = vpop.f32.mrf.mxu0
      %4367 = vmatprep.mubr.bf16.mxu0 %v3846
      %4368 = vmatmul.mubr.bf16.gmra.mxu0 %v3845
      %v4369 = vpop.f32.mrf.mxu0
      %v4370 = vadd.f32 %v4209, %v4369
      %v4371 = vpop.f32.mrf.mxu0
      %v4372 = vpop.f32.mrf.mxu0
      %v4373 = vadd.f32 %v4212, %v4372
      %v4374 = vpop.f32.mrf.mxu0
      %4375 = vmatprep.mubr.bf16.mxu0 %v3850
      %4376 = vmatmul.mubr.bf16.gmra.mxu0 %v3849
      %v4377 = vpop.f32.mrf.mxu0
      %v4378 = vadd.f32 %v4217, %v4377
      %v4379 = vpop.f32.mrf.mxu0
      %v4380 = vpop.f32.mrf.mxu0
      %v4381 = vadd.f32 %v4220, %v4380
      %v4382 = vpop.f32.mrf.mxu0
      %4383 = vmatprep.mubr.bf16.mxu0 %v3854
      %4384 = vmatmul.mubr.bf16.gmra.mxu0 %v3853
      %v4385 = vpop.f32.mrf.mxu0
      %v4386 = vadd.f32 %v4225, %v4385
      %v4387 = vpop.f32.mrf.mxu0
      %v4388 = vpop.f32.mrf.mxu0
      %v4389 = vadd.f32 %v4228, %v4388
      %v4390 = vpop.f32.mrf.mxu0
      %4391 = vmatprep.mubr.bf16.mxu0 %v3858
      %4392 = vmatmul.mubr.bf16.gmra.mxu0 %v3857
      %v4393 = vpop.f32.mrf.mxu0
      %v4394 = vadd.f32 %v4233, %v4393
      %v4395 = vpop.f32.mrf.mxu0
      %v4396 = vpop.f32.mrf.mxu0
      %v4397 = vadd.f32 %v4236, %v4396
      %v4398 = vpop.f32.mrf.mxu0
      %4399 = vmatprep.mubr.bf16.mxu0 %v3862
      %4400 = vmatmul.mubr.bf16.gmra.mxu0 %v3861
      %v4401 = vpop.f32.mrf.mxu0
      %v4402 = vadd.f32 %v4241, %v4401
      %v4403 = vpop.f32.mrf.mxu0
      %v4404 = vpop.f32.mrf.mxu0
      %v4405 = vadd.f32 %v4244, %v4404
      %v4406 = vpop.f32.mrf.mxu0
      %4407 = vmatprep.mubr.bf16.mxu0 %v3866
      %4408 = vmatmul.mubr.bf16.gmra.mxu0 %v3865
      %v4409 = vpop.f32.mrf.mxu0
      %v4410 = vadd.f32 %v4249, %v4409
      %v4411 = vpop.f32.mrf.mxu0
      %v4412 = vpop.f32.mrf.mxu0
      %v4413 = vadd.f32 %v4252, %v4412
      %v4414 = vpop.f32.mrf.mxu0
      %4415 = vmatprep.mubr.bf16.mxu0 %v3870
      %4416 = vmatmul.mubr.bf16.gmra.mxu0 %v3869
      %v4417 = vpop.f32.mrf.mxu0
      %v4418 = vadd.f32 %v4257, %v4417
      %v4419 = vpop.f32.mrf.mxu0
      %v4420 = vpop.f32.mrf.mxu0
      %v4421 = vadd.f32 %v4260, %v4420
      %v4422 = vpop.f32.mrf.mxu0
      %4423 = vmatprep.mubr.bf16.mxu0 %v3874
      %4424 = vmatmul.mubr.bf16.gmra.mxu0 %v3873
      %v4425 = vpop.f32.mrf.mxu0
      %v4426 = vadd.f32 %v4265, %v4425
      %v4427 = vpop.f32.mrf.mxu0
      %v4428 = vpop.f32.mrf.mxu0
      %v4429 = vadd.f32 %v4268, %v4428
      %v4430 = vpop.f32.mrf.mxu0
      %4431 = vmatprep.mubr.bf16.mxu0 %v3878
      %4432 = vmatmul.mubr.bf16.gmra.mxu0 %v3877
      %v4433 = vpop.f32.mrf.mxu0
      %v4434 = vadd.f32 %v4273, %v4433
      %v4435 = vpop.f32.mrf.mxu0
      %v4436 = vpop.f32.mrf.mxu0
      %v4437 = vadd.f32 %v4276, %v4436
      %v4438 = vpop.f32.mrf.mxu0
      %4439 = vmatprep.mubr.bf16.mxu0 %v3882
      %4440 = vmatmul.mubr.bf16.gmra.mxu0 %v3881
      %v4441 = vpop.f32.mrf.mxu0
      %v4442 = vadd.f32 %v4281, %v4441
      %v4443 = vpop.f32.mrf.mxu0
      %v4444 = vpop.f32.mrf.mxu0
      %v4445 = vadd.f32 %v4284, %v4444
      %v4446 = vpop.f32.mrf.mxu0
      %4447 = vmatprep.mubr.bf16.mxu0 %v3886
      %4448 = vmatmul.mubr.bf16.gmra.mxu0 %v3885
      %v4449 = vpop.f32.mrf.mxu0
      %v4450 = vadd.f32 %v4289, %v4449
      %v4451 = vpop.f32.mrf.mxu0
      %v4452 = vpop.f32.mrf.mxu0
      %v4453 = vadd.f32 %v4292, %v4452
      %v4454 = vpop.f32.mrf.mxu0
      %4455 = vmatprep.mubr.bf16.mxu0 %v3890
      %4456 = vmatmul.mubr.bf16.gmra.mxu0 %v3889
      %v4457 = vpop.f32.mrf.mxu0
      %v4458 = vadd.f32 %v4297, %v4457
      %v4459 = vpop.f32.mrf.mxu0
      %v4460 = vpop.f32.mrf.mxu0
      %v4461 = vadd.f32 %v4300, %v4460
      %v4462 = vpop.f32.mrf.mxu0
      %4463 = vmatprep.mubr.bf16.mxu0 %v3894
      %4464 = vmatmul.mubr.bf16.gmra.mxu0 %v3893
      %v4465 = vpop.f32.mrf.mxu0
      %v4466 = vadd.f32 %v4305, %v4465
      %v4467 = vpop.f32.mrf.mxu0
      %v4468 = vpop.f32.mrf.mxu0
      %v4469 = vadd.f32 %v4308, %v4468
      %v4470 = vpop.f32.mrf.mxu0
      %4471 = vmatprep.mubr.bf16.mxu0 %v3898
      %4472 = vmatmul.mubr.bf16.gmra.mxu0 %v3897
      %v4473 = vpop.f32.mrf.mxu0
      %v4474 = vadd.f32 %v4313, %v4473
      %v4475 = vpop.f32.mrf.mxu0
      %v4476 = vpop.f32.mrf.mxu0
      %v4477 = vadd.f32 %v4316, %v4476
      %v4478 = vpop.f32.mrf.mxu0
      %4479 = vmatprep.mubr.bf16.mxu0 %v3902
      %4480 = vmatmul.mubr.bf16.gmra.mxu0 %v3901
      %v4481 = vpop.f32.mrf.mxu0
      %v4482 = vadd.f32 %v4321, %v4481
      %v4483 = vpop.f32.mrf.mxu0
      %v4484 = vpop.f32.mrf.mxu0
      %v4485 = vadd.f32 %v4324, %v4484
      %v4486 = vpop.f32.mrf.mxu0
      %4487 = vdwg.mxu0
      %4488 = vmax.xlane.f32.xlu0 %v4362
      %v4489 = vpop.xlane.xlu0 %4488
      %4490 = vmax.xlane.f32.xlu0 %v4365
      %v4491 = vpop.xlane.xlu0 %4490
      %4492 = vmax.xlane.f32.xlu0 %v4370
      %v4493 = vpop.xlane.xlu0 %4492
      %4494 = vmax.xlane.f32.xlu0 %v4373
      %v4495 = vpop.xlane.xlu0 %4494
      %4496 = vmax.xlane.f32.xlu0 %v4378
      %v4497 = vpop.xlane.xlu0 %4496
      %4498 = vmax.xlane.f32.xlu0 %v4381
      %v4499 = vpop.xlane.xlu0 %4498
      %4500 = vmax.xlane.f32.xlu0 %v4386
      %v4501 = vpop.xlane.xlu0 %4500
      %4502 = vmax.xlane.f32.xlu0 %v4389
      %v4503 = vpop.xlane.xlu0 %4502
      %4504 = vmax.xlane.f32.xlu0 %v4394
      %v4505 = vpop.xlane.xlu0 %4504
      %4506 = vmax.xlane.f32.xlu0 %v4397
      %v4507 = vpop.xlane.xlu0 %4506
      %4508 = vmax.xlane.f32.xlu0 %v4402
      %v4509 = vpop.xlane.xlu0 %4508
      %4510 = vmax.xlane.f32.xlu0 %v4405
      %v4511 = vpop.xlane.xlu0 %4510
      %4512 = vmax.xlane.f32.xlu0 %v4410
      %v4513 = vpop.xlane.xlu0 %4512
      %4514 = vmax.xlane.f32.xlu0 %v4413
      %v4515 = vpop.xlane.xlu0 %4514
      %4516 = vmax.xlane.f32.xlu0 %v4418
      %v4517 = vpop.xlane.xlu0 %4516
      %4518 = vmax.xlane.f32.xlu0 %v4421
      %v4519 = vpop.xlane.xlu0 %4518
      %4520 = vmax.xlane.f32.xlu0 %v4426
      %v4521 = vpop.xlane.xlu0 %4520
      %4522 = vmax.xlane.f32.xlu0 %v4429
      %v4523 = vpop.xlane.xlu0 %4522
      %4524 = vmax.xlane.f32.xlu0 %v4434
      %v4525 = vpop.xlane.xlu0 %4524
      %4526 = vmax.xlane.f32.xlu0 %v4437
      %v4527 = vpop.xlane.xlu0 %4526
      %4528 = vmax.xlane.f32.xlu0 %v4442
      %v4529 = vpop.xlane.xlu0 %4528
      %4530 = vmax.xlane.f32.xlu0 %v4445
      %v4531 = vpop.xlane.xlu0 %4530
      %4532 = vmax.xlane.f32.xlu0 %v4450
      %v4533 = vpop.xlane.xlu0 %4532
      %4534 = vmax.xlane.f32.xlu0 %v4453
      %v4535 = vpop.xlane.xlu0 %4534
      %4536 = vmax.xlane.f32.xlu0 %v4458
      %v4537 = vpop.xlane.xlu0 %4536
      %4538 = vmax.xlane.f32.xlu0 %v4461
      %v4539 = vpop.xlane.xlu0 %4538
      %4540 = vmax.xlane.f32.xlu0 %v4466
      %v4541 = vpop.xlane.xlu0 %4540
      %4542 = vmax.xlane.f32.xlu0 %v4469
      %v4543 = vpop.xlane.xlu0 %4542
      %4544 = vmax.xlane.f32.xlu0 %v4474
      %v4545 = vpop.xlane.xlu0 %4544
      %4546 = vmax.xlane.f32.xlu0 %v4477
      %v4547 = vpop.xlane.xlu0 %4546
      %4548 = vmax.xlane.f32.xlu0 %v4482
      %v4549 = vpop.xlane.xlu0 %4548
      %4550 = vmax.xlane.f32.xlu0 %v4485
      %v4551 = vpop.xlane.xlu0 %4550
      %v4552 = vsub.f32 %v4362, %v4489
      %v4553 = vsub.f32 %v4365, %v4491
      %v4554 = vsub.f32 %v4370, %v4493
      %v4555 = vsub.f32 %v4373, %v4495
      %v4556 = vsub.f32 %v4378, %v4497
      %v4557 = vsub.f32 %v4381, %v4499
      %v4558 = vsub.f32 %v4386, %v4501
      %v4559 = vsub.f32 %v4389, %v4503
      %v4560 = vsub.f32 %v4394, %v4505
      %v4561 = vsub.f32 %v4397, %v4507
      %v4562 = vsub.f32 %v4402, %v4509
      %v4563 = vsub.f32 %v4405, %v4511
      %v4564 = vsub.f32 %v4410, %v4513
      %v4565 = vsub.f32 %v4413, %v4515
      %v4566 = vsub.f32 %v4418, %v4517
      %v4567 = vsub.f32 %v4421, %v4519
      %v4568 = vsub.f32 %v4426, %v4521
      %v4569 = vsub.f32 %v4429, %v4523
      %v4570 = vsub.f32 %v4434, %v4525
      %v4571 = vsub.f32 %v4437, %v4527
      %v4572 = vsub.f32 %v4442, %v4529
      %v4573 = vsub.f32 %v4445, %v4531
      %v4574 = vsub.f32 %v4450, %v4533
      %v4575 = vsub.f32 %v4453, %v4535
      %v4576 = vsub.f32 %v4458, %v4537
      %v4577 = vsub.f32 %v4461, %v4539
      %v4578 = vsub.f32 %v4466, %v4541
      %v4579 = vsub.f32 %v4469, %v4543
      %v4580 = vsub.f32 %v4474, %v4545
      %v4581 = vsub.f32 %v4477, %v4547
      %v4582 = vsub.f32 %v4482, %v4549
      %v4583 = vsub.f32 %v4485, %v4551
      %v4584 = vmul.f32 %v4552, 1.442695
      %v4585 = vpow.pop %v4584
      %v4586 = vmul.f32 %v4553, 1.442695
      %v4587 = vpow.pop %v4586
      %v4588 = vmul.f32 %v4554, 1.442695
      %v4589 = vpow.pop %v4588
      %v4590 = vmul.f32 %v4555, 1.442695
      %v4591 = vpow.pop %v4590
      %v4592 = vmul.f32 %v4556, 1.442695
      %v4593 = vpow.pop %v4592
      %v4594 = vmul.f32 %v4557, 1.442695
      %v4595 = vpow.pop %v4594
      %v4596 = vmul.f32 %v4558, 1.442695
      %v4597 = vpow.pop %v4596
      %v4598 = vmul.f32 %v4559, 1.442695
      %v4599 = vpow.pop %v4598
      %v4600 = vmul.f32 %v4560, 1.442695
      %v4601 = vpow.pop %v4600
      %v4602 = vmul.f32 %v4561, 1.442695
      %v4603 = vpow.pop %v4602
      %v4604 = vmul.f32 %v4562, 1.442695
      %v4605 = vpow.pop %v4604
      %v4606 = vmul.f32 %v4563, 1.442695
      %v4607 = vpow.pop %v4606
      %v4608 = vmul.f32 %v4564, 1.442695
      %v4609 = vpow.pop %v4608
      %v4610 = vmul.f32 %v4565, 1.442695
      %v4611 = vpow.pop %v4610
      %v4612 = vmul.f32 %v4566, 1.442695
      %v4613 = vpow.pop %v4612
      %v4614 = vmul.f32 %v4567, 1.442695
      %v4615 = vpow.pop %v4614
      %v4616 = vmul.f32 %v4568, 1.442695
      %v4617 = vpow.pop %v4616
      %v4618 = vmul.f32 %v4569, 1.442695
      %v4619 = vpow.pop %v4618
      %v4620 = vmul.f32 %v4570, 1.442695
      %v4621 = vpow.pop %v4620
      %v4622 = vmul.f32 %v4571, 1.442695
      %v4623 = vpow.pop %v4622
      %v4624 = vmul.f32 %v4572, 1.442695
      %v4625 = vpow.pop %v4624
      %v4626 = vmul.f32 %v4573, 1.442695
      %v4627 = vpow.pop %v4626
      %v4628 = vmul.f32 %v4574, 1.442695
      %v4629 = vpow.pop %v4628
      %v4630 = vmul.f32 %v4575, 1.442695
      %v4631 = vpow.pop %v4630
      %v4632 = vmul.f32 %v4576, 1.442695
      %v4633 = vpow.pop %v4632
      %v4634 = vmul.f32 %v4577, 1.442695
      %v4635 = vpow.pop %v4634
      %v4636 = vmul.f32 %v4578, 1.442695
      %v4637 = vpow.pop %v4636
      %v4638 = vmul.f32 %v4579, 1.442695
      %v4639 = vpow.pop %v4638
      %v4640 = vmul.f32 %v4580, 1.442695
      %v4641 = vpow.pop %v4640
      %v4642 = vmul.f32 %v4581, 1.442695
      %v4643 = vpow.pop %v4642
      %v4644 = vmul.f32 %v4582, 1.442695
      %v4645 = vpow.pop %v4644
      %v4646 = vmul.f32 %v4583, 1.442695
      %v4647 = vpow.pop %v4646
      %4648 = vadd.xlane.f32.xlu0 %v4585
      %v4649 = vpop.xlane.xlu0 %4648
      %4650 = vadd.xlane.f32.xlu0 %v4587
      %v4651 = vpop.xlane.xlu0 %4650
      %4652 = vadd.xlane.f32.xlu0 %v4589
      %v4653 = vpop.xlane.xlu0 %4652
      %4654 = vadd.xlane.f32.xlu0 %v4591
      %v4655 = vpop.xlane.xlu0 %4654
      %4656 = vadd.xlane.f32.xlu0 %v4593
      %v4657 = vpop.xlane.xlu0 %4656
      %4658 = vadd.xlane.f32.xlu0 %v4595
      %v4659 = vpop.xlane.xlu0 %4658
      %4660 = vadd.xlane.f32.xlu0 %v4597
      %v4661 = vpop.xlane.xlu0 %4660
      %4662 = vadd.xlane.f32.xlu0 %v4599
      %v4663 = vpop.xlane.xlu0 %4662
      %4664 = vadd.xlane.f32.xlu0 %v4601
      %v4665 = vpop.xlane.xlu0 %4664
      %4666 = vadd.xlane.f32.xlu0 %v4603
      %v4667 = vpop.xlane.xlu0 %4666
      %4668 = vadd.xlane.f32.xlu0 %v4605
      %v4669 = vpop.xlane.xlu0 %4668
      %4670 = vadd.xlane.f32.xlu0 %v4607
      %v4671 = vpop.xlane.xlu0 %4670
      %4672 = vadd.xlane.f32.xlu0 %v4609
      %v4673 = vpop.xlane.xlu0 %4672
      %4674 = vadd.xlane.f32.xlu0 %v4611
      %v4675 = vpop.xlane.xlu0 %4674
      %4676 = vadd.xlane.f32.xlu0 %v4613
      %v4677 = vpop.xlane.xlu0 %4676
      %4678 = vadd.xlane.f32.xlu0 %v4615
      %v4679 = vpop.xlane.xlu0 %4678
      %4680 = vadd.xlane.f32.xlu0 %v4617
      %v4681 = vpop.xlane.xlu0 %4680
      %4682 = vadd.xlane.f32.xlu0 %v4619
      %v4683 = vpop.xlane.xlu0 %4682
      %4684 = vadd.xlane.f32.xlu0 %v4621
      %v4685 = vpop.xlane.xlu0 %4684
      %4686 = vadd.xlane.f32.xlu0 %v4623
      %v4687 = vpop.xlane.xlu0 %4686
      %4688 = vadd.xlane.f32.xlu0 %v4625
      %v4689 = vpop.xlane.xlu0 %4688
      %4690 = vadd.xlane.f32.xlu0 %v4627
      %v4691 = vpop.xlane.xlu0 %4690
      %4692 = vadd.xlane.f32.xlu0 %v4629
      %v4693 = vpop.xlane.xlu0 %4692
      %4694 = vadd.xlane.f32.xlu0 %v4631
      %v4695 = vpop.xlane.xlu0 %4694
      %4696 = vadd.xlane.f32.xlu0 %v4633
      %v4697 = vpop.xlane.xlu0 %4696
      %4698 = vadd.xlane.f32.xlu0 %v4635
      %v4699 = vpop.xlane.xlu0 %4698
      %4700 = vadd.xlane.f32.xlu0 %v4637
      %v4701 = vpop.xlane.xlu0 %4700
      %4702 = vadd.xlane.f32.xlu0 %v4639
      %v4703 = vpop.xlane.xlu0 %4702
      %4704 = vadd.xlane.f32.xlu0 %v4641
      %v4705 = vpop.xlane.xlu0 %4704
      %4706 = vadd.xlane.f32.xlu0 %v4643
      %v4707 = vpop.xlane.xlu0 %4706
      %4708 = vadd.xlane.f32.xlu0 %v4645
      %v4709 = vpop.xlane.xlu0 %4708
      %4710 = vadd.xlane.f32.xlu0 %v4647
      %v4711 = vpop.xlane.xlu0 %4710
      %v4712 = vrcp.pop %v4649
      %v4713 = vrcp.pop %v4651
      %v4714 = vrcp.pop %v4653
      %v4715 = vrcp.pop %v4655
      %v4716 = vrcp.pop %v4657
      %v4717 = vrcp.pop %v4659
      %v4718 = vrcp.pop %v4661
      %v4719 = vrcp.pop %v4663
      %v4720 = vrcp.pop %v4665
      %v4721 = vrcp.pop %v4667
      %v4722 = vrcp.pop %v4669
      %v4723 = vrcp.pop %v4671
      %v4724 = vrcp.pop %v4673
      %v4725 = vrcp.pop %v4675
      %v4726 = vrcp.pop %v4677
      %v4727 = vrcp.pop %v4679
      %v4728 = vrcp.pop %v4681
      %v4729 = vrcp.pop %v4683
      %v4730 = vrcp.pop %v4685
      %v4731 = vrcp.pop %v4687
      %v4732 = vrcp.pop %v4689
      %v4733 = vrcp.pop %v4691
      %v4734 = vrcp.pop %v4693
      %v4735 = vrcp.pop %v4695
      %v4736 = vrcp.pop %v4697
      %v4737 = vrcp.pop %v4699
      %v4738 = vrcp.pop %v4701
      %v4739 = vrcp.pop %v4703
      %v4740 = vrcp.pop %v4705
      %v4741 = vrcp.pop %v4707
      %v4742 = vrcp.pop %v4709
      %v4743 = vrcp.pop %v4711
      %v4744 = vmul.f32 %v4585, %v4712
      %v4745 = vmul.f32 %v4587, %v4713
      %v4746 = vmul.f32 %v4589, %v4714
      %v4747 = vmul.f32 %v4591, %v4715
      %v4748 = vmul.f32 %v4593, %v4716
      %v4749 = vmul.f32 %v4595, %v4717
      %v4750 = vmul.f32 %v4597, %v4718
      %v4751 = vmul.f32 %v4599, %v4719
      %v4752 = vmul.f32 %v4601, %v4720
      %v4753 = vmul.f32 %v4603, %v4721
      %v4754 = vmul.f32 %v4605, %v4722
      %v4755 = vmul.f32 %v4607, %v4723
      %v4756 = vmul.f32 %v4609, %v4724
      %v4757 = vmul.f32 %v4611, %v4725
      %v4758 = vmul.f32 %v4613, %v4726
      %v4759 = vmul.f32 %v4615, %v4727
      %v4760 = vmul.f32 %v4617, %v4728
      %v4761 = vmul.f32 %v4619, %v4729
      %v4762 = vmul.f32 %v4621, %v4730
      %v4763 = vmul.f32 %v4623, %v4731
      %v4764 = vmul.f32 %v4625, %v4732
      %v4765 = vmul.f32 %v4627, %v4733
      %v4766 = vmul.f32 %v4629, %v4734
      %v4767 = vmul.f32 %v4631, %v4735
      %v4768 = vmul.f32 %v4633, %v4736
      %v4769 = vmul.f32 %v4635, %v4737
      %v4770 = vmul.f32 %v4637, %v4738
      %v4771 = vmul.f32 %v4639, %v4739
      %v4772 = vmul.f32 %v4641, %v4740
      %v4773 = vmul.f32 %v4643, %v4741
      %v4774 = vmul.f32 %v4645, %v4742
      %v4775 = vmul.f32 %v4647, %v4743
      %4776 = vst [vmem:[%s229] sm:$0xff] %v4744
      %4777 = vst [vmem:[%s229 + $0x8] sm:$0xff] %v4745
      %4778 = vst [vmem:[%s229 + $0x10] sm:$0xff] %v4746
      %4779 = vst [vmem:[%s229 + $0x18] sm:$0xff] %v4747
      %4780 = vst [vmem:[%s229 + $0x20] sm:$0xff] %v4748
      %4781 = vst [vmem:[%s229 + $0x28] sm:$0xff] %v4749
      %4782 = vst [vmem:[%s229 + $0x30] sm:$0xff] %v4750
      %4783 = vst [vmem:[%s229 + $0x38] sm:$0xff] %v4751
      %4784 = vst [vmem:[%s229 + $0x40] sm:$0xff] %v4752
      %4785 = vst [vmem:[%s229 + $0x48] sm:$0xff] %v4753
      %4786 = vst [vmem:[%s229 + $0x50] sm:$0xff] %v4754
      %4787 = vst [vmem:[%s229 + $0x58] sm:$0xff] %v4755
      %4788 = vst [vmem:[%s229 + $0x60] sm:$0xff] %v4756
      %4789 = vst [vmem:[%s229 + $0x68] sm:$0xff] %v4757
      %4790 = vst [vmem:[%s229 + $0x70] sm:$0xff] %v4758
      %4791 = vst [vmem:[%s229 + $0x78] sm:$0xff] %v4759
      %4792 = vst [vmem:[%s229 + $0x80] sm:$0xff] %v4760
      %4793 = vst [vmem:[%s229 + $0x88] sm:$0xff] %v4761
      %4794 = vst [vmem:[%s229 + $0x90] sm:$0xff] %v4762
      %4795 = vst [vmem:[%s229 + $0x98] sm:$0xff] %v4763
      %4796 = vst [vmem:[%s229 + $0xa0] sm:$0xff] %v4764
      %4797 = vst [vmem:[%s229 + $0xa8] sm:$0xff] %v4765
      %4798 = vst [vmem:[%s229 + $0xb0] sm:$0xff] %v4766
      %4799 = vst [vmem:[%s229 + $0xb8] sm:$0xff] %v4767
      %4800 = vst [vmem:[%s229 + $0xc0] sm:$0xff] %v4768
      %4801 = vst [vmem:[%s229 + $0xc8] sm:$0xff] %v4769
      %4802 = vst [vmem:[%s229 + $0xd0] sm:$0xff] %v4770
      %4803 = vst [vmem:[%s229 + $0xd8] sm:$0xff] %v4771
      %4804 = vst [vmem:[%s229 + $0xe0] sm:$0xff] %v4772
      %4805 = vst [vmem:[%s229 + $0xe8] sm:$0xff] %v4773
      %4806 = vst [vmem:[%s229 + $0xf0] sm:$0xff] %v4774
      %4807 = vst [vmem:[%s229 + $0xf8] sm:$0xff] %v4775
      %s4808 = smul.u32 32, %s16
      %p4809 = scmp.lt.s32.totalorder %s4808, 63
      %s4810 = scalar_select %p4809, %s4808, 63
      %s4811 = smul.addr %s4810, 8
      %s4812 = scalar_lea.vmem %s5, %s4811
      // Predicated region
      $region41: #{mlp_softmax.1} parent=39 // pred_check
        %p4813 = pneg %p144
      $region42: #{mlp_softmax.1} parent=39 // pred_check_branch
        %4815 = sbr.rel (%p4813) target = $region44
      $region43: #{mlp_softmax.1} parent=39 // pred_region
        %s4816 = smul.u32 32, %s16
      $region44: #{mlp_softmax.1} parent=39 // pred_fallthru
        _
    $region40: #{mlp_softmax.1} parent=5 // pred_fallthru
      _
    %p4817 = scmp.le.s32.totalorder 2, %s11
    // Predicated region
    $region45: #{mlp_softmax.1} parent=5 // pred_check
      %p4818 = pneg %p4817
    $region46: #{mlp_softmax.1} parent=5 // pred_check_branch
      %4820 = sbr.rel (%p4818) target = $region48
    $region47: #{mlp_softmax.1} parent=5 // pred_region
      %s4821 = ssub.s32 %s11, 2
      // Predicated region
      $region49: #{mlp_softmax.1} parent=47 // pred_check
        %p4822 = pneg %p150
      $region50: #{mlp_softmax.1} parent=47 // pred_check_branch
        %4824 = sbr.rel (%p4822) target = $region52
      $region51: #{mlp_softmax.1} parent=47 // pred_region
        %s4825 = smul.u32 32, %s17
        %p4826 = scmp.lt.s32.totalorder %s4825, 63
        %s4827 = scalar_select %p4826, %s4825, 63
        %s4828 = smul.addr %s4827, 8
        %s4829 = scalar_lea.vmem %s5, %s4828
      $region52: #{mlp_softmax.1} parent=47 // pred_fallthru
        _
    $region48: #{mlp_softmax.1} parent=5 // pred_fallthru
      _
  $region6: #{mlp_softmax.1} parent=0 // loop_footer
    %s15 = sadd.s32 1, %s11
  $region7: #{mlp_softmax.1} parent=0 // loop_footer_branch
    %10 = sbr.rel target = $region3
  $region8: #{mlp_softmax.1} parent=0 // loop_exit
    _

</llo_original>
